<compile_context>
chip_gen: v6e
topology: v6e:2x2x1
jax: 0.10.0
libtpu: 0.0.40
codegen_flags: <defaults>
</compile_context>

<pallas_src>
import numpy as np
import jax
import jax.numpy as jnp
from jax.experimental import pallas as pl
from jax.experimental.pallas import tpu as pltpu

TWO_PI = 2.0 * np.pi
_K = 8          # packed feature depth: [x, y, z, 1, ||.||^2] + 3 zero pad (sublane aligned)
_EPS_D2 = 1e-12  # guard for rsqrt when d2 underflows / cancels to <= 0


def _round_up(x, m):
    return (x + m - 1) // m * m


def _is_v7x():
    """Best-effort generation check (only used for megacore/VMEM heuristics)."""
    try:
        kind = jax.devices()[0].device_kind.lower()
        return ("v7" in kind) or ("7x" in kind)
    except Exception:
        return False


def potential_kernel(coord_ref, src_ref, bn_ref, out_ref):
    """Grid = (query tiles i, source tiles j); j is the reduction axis (last)."""
    # output block index (0, i) is constant over j -> block is resident; init once.
    @pl.when(pl.program_id(1) == 0)
    def _():
        out_ref[...] = jnp.zeros_like(out_ref)

    # pairwise squared distances on the MXU (norm expansion), lane-dense operands
    # contracted on the sublane axis:
    #   src_ref  : (8, TN) rows = [-2x, -2y, -2z, ||r||^2, 1, 0, 0, 0]
    #   coord_ref: (8, TM) rows = [x, y, z, 1, ||coord+c||^2, 0, 0, 0]
    #   d2[n, m] = ||r_n||^2 - 2 r_n.(coord_m + c) + ||coord_m + c||^2
    d2 = jax.lax.dot_general(
        src_ref[...], coord_ref[...],
        dimension_numbers=(((0,), (0,)), ((), ())),
        preferred_element_type=jnp.float32)                      # (TN, TM)

    # 1/distance: single EUP rsqrt; guard against d2 <= 0 from f32 cancellation.
    inv_d = jax.lax.rsqrt(jnp.maximum(d2, _EPS_D2))              # (TN, TM)

    # b_n/(2*pi)-weighted reduction over sources on the MXU, accumulated
    # straight into the resident output block (lane-dense (1, TM) store).
    out_ref[...] += jnp.dot(bn_ref[...], inv_d,
                            preferred_element_type=jnp.float32)  # (1, TM)


def potential_model(b_n, r_p, coord, l=1.0 / np.sqrt(2.0 * np.pi),
                    tm=2048, tn=512):
    """Pallas equivalent of PotentialModel(b_n, r_p)(coord)."""
    b_n = jnp.asarray(b_n, jnp.float32).reshape(-1)
    r_p = jnp.asarray(r_p, jnp.float32)
    coord = jnp.asarray(coord, jnp.float32)

    N = b_n.shape[0]
    M = coord.shape[0]

    # ---- tile selection ----------------------------------------------------
    v7x = _is_v7x()
    if v7x:
        # v7x has 64 MiB VMEM (vs 128 on v5e/v6e): cap the tile config.
        tm = min(tm, 2048)
        tn = min(tn, 512)
    tm = min(tm, _round_up(M, 256))
    tn = min(tn, _round_up(N, 256))
    Mp = _round_up(M, tm)
    if v7x:
        # keep an even number of blocks along the "parallel" M axis so both
        # TensorCores stay busy; on v5e/v6e halving only adds step overhead.
        while (Mp // tm) % 2 == 1 and tm > 256:
            tm //= 2
            Mp = _round_up(M, tm)
    Np = _round_up(N, tn)

    # ---- pack inputs (3 lane-dense, matmul-ready streams) ------------------
    c = jnp.array([0.0, 0.0, l], dtype=jnp.float32)
    coord_s = coord + c[None, :]                                  # (M, 3)
    coord_sp = jnp.pad(coord_s, ((0, Mp - M), (0, 0)))            # (Mp, 3)
    cnorm = jnp.sum(coord_sp * coord_sp, axis=1)                  # (Mp,)
    coord_pk = jnp.concatenate(
        [coord_sp.T,                                              # rows 0..2: x, y, z
         jnp.ones((1, Mp), jnp.float32),                          # row 3: multiplies ||r||^2
         cnorm[None, :],                                          # row 4: ||coord+c||^2
         jnp.zeros((_K - 5, Mp), jnp.float32)],                   # sublane pad
        axis=0)                                                   # (8, Mp)

    r_pp = jnp.pad(r_p, ((0, Np - N), (0, 0)))                    # (Np, 3)
    rnorm = jnp.sum(r_pp * r_pp, axis=1)                          # (Np,)
    src_pk = jnp.concatenate(
        [(-2.0 * r_pp).T,                                         # rows 0..2: -2x, -2y, -2z
         rnorm[None, :],                                          # row 3: ||r||^2
         jnp.ones((1, Np), jnp.float32),                          # row 4: multiplies ||coord+c||^2
         jnp.zeros((_K - 5, Np), jnp.float32)],                   # sublane pad
        axis=0)                                                   # (8, Np)

    # fold 1/(2*pi) into b_n; padded sources get weight 0 so they contribute 0.
    bn_pk = jnp.pad(b_n * (1.0 / TWO_PI), (0, Np - N))[None, :]   # (1, Np)

    grid = (Mp // tm, Np // tn)

    out = pl.pallas_call(
        potential_kernel,
        out_shape=jax.ShapeDtypeStruct((1, Mp), jnp.float32),
        grid_spec=pltpu.PrefetchScalarGridSpec(
            num_scalar_prefetch=0,
            grid=grid,
            in_specs=[
                pl.BlockSpec((_K, tm), lambda i, j: (0, i)),      # packed coords
                pl.BlockSpec((_K, tn), lambda i, j: (0, j)),      # packed sources (lane-dense)
                pl.BlockSpec((1, tn), lambda i, j: (0, j)),       # b_n / (2*pi), single row
            ],
            out_specs=pl.BlockSpec((1, tm), lambda i, j: (0, i)),
        ),
        compiler_params=pltpu.CompilerParams(
            dimension_semantics=("parallel", "arbitrary"),
            # fits v7x's 64 MiB VMEM with headroom; plenty on v5e/v6e too.
            vmem_limit_bytes=48 * 1024 * 1024),
    )(coord_pk, src_pk, bn_pk)

    return out[0, :M]


def potential_model_ref(b_n, r_p, coord, l=1.0 / np.sqrt(2.0 * np.pi)):
    """Pure-JAX reference mirroring the PyTorch forward exactly."""
    c = jnp.array([[0.0, 0.0, l]], dtype=jnp.float32)             # (1, 3)
    v1 = b_n[:, None]                                             # (N, 1)
    diff = -r_p[:, None, :] + coord[None, :, :] + c[None]         # (N, M, 3)
    v2 = TWO_PI * jnp.sqrt(jnp.sum(diff ** 2, axis=-1))           # (N, M)
    return jnp.sum(v1 / v2, axis=0)                               # (M,)


if __name__ == "__main__":
    key = jax.random.PRNGKey(0)
    k1, k2, k3 = jax.random.split(key, 3)

    N = 512    # number of boundary sources (b_n, r_p)
    M = 1024   # number of query coordinates

    b_n = jax.random.normal(k1, (N,), dtype=jnp.float32)
    r_p = jax.random.uniform(k2, (N, 3), dtype=jnp.float32,
                             minval=0.0, maxval=8.0)
    # sources sit on the z=0 plane (typical potential-field boundary setup)
    r_p = r_p.at[:, 2].set(0.0)
    coord = jax.random.uniform(k3, (M, 3), dtype=jnp.float32,
                               minval=0.0, maxval=8.0)

    out = potential_model(b_n, r_p, coord)
    jax.block_until_ready(out)

    ref = potential_model_ref(b_n, r_p, coord)
    # the MXU norm-expansion form of d^2 loses a few ulps (f32 cancellation)
    # for the closest source/query pairs, hence the slightly relaxed tolerance.
    np.testing.assert_allclose(np.asarray(out), np.asarray(ref),
                               rtol=1e-3, atol=5e-4)

    print("KERNEL_OK")
</pallas_src>

<mosaic_0001>
module attributes {stable_mosaic.version = 11 : i64} {
  func.func @potential_kernel(%arg0: i32, %arg1: i32, %arg2: memref<8x1024xf32, #tpu.memory_space<vmem>>, %arg3: memref<8x512xf32, #tpu.memory_space<vmem>>, %arg4: memref<1x512xf32, #tpu.memory_space<vmem>>, %arg5: memref<1x1024xf32, #tpu.memory_space<vmem>>) attributes {dimension_semantics = [#tpu.dimension_semantics<parallel>, #tpu.dimension_semantics<arbitrary>], iteration_bounds = array<i64: 1, 1>, scalar_prefetch = 0 : i64, scratch_operands = 0 : i64, tpu.core_type = #tpu.core_type<tc>, window_params = [{transform_indices = @transform_0, window_bounds = array<i64: 8, 1024>}, {transform_indices = @transform_1, window_bounds = array<i64: 8, 512>}, {transform_indices = @transform_2, window_bounds = array<i64: 1, 512>}, {transform_indices = @transform_3, window_bounds = array<i64: 1, 1024>}]} {
    %c0_i32 = arith.constant 0 : i32
    %0 = arith.cmpi eq, %arg1, %c0_i32 : i32
    %1 = arith.extui %0 : i1 to i32
    %c0_i32_0 = arith.constant 0 : i32
    %2 = arith.cmpi ne, %1, %c0_i32_0 : i32
    scf.if %2 {
      %cst_12 = arith.constant 0.000000e+00 : f32
      %14 = vector.broadcast %cst_12 : f32 to vector<1x1024xf32>
      %c0_13 = arith.constant 0 : index
      %c0_14 = arith.constant 0 : index
      %15 = vector.load %arg5[%c0_13, %c0_14] : memref<1x1024xf32, #tpu.memory_space<vmem>>, vector<1x1024xf32>
      tpu.vector_store %arg5[%c0_13, %c0_14], %14 {strides = array<i32>} : memref<1x1024xf32, #tpu.memory_space<vmem>>, vector<1x1024xf32>,
    } else {
    }
    %c0 = arith.constant 0 : index
    %c0_1 = arith.constant 0 : index
    %3 = vector.load %arg3[%c0, %c0_1] : memref<8x512xf32, #tpu.memory_space<vmem>>, vector<8x512xf32>
    %c0_2 = arith.constant 0 : index
    %c0_3 = arith.constant 0 : index
    %4 = vector.load %arg2[%c0_2, %c0_3] : memref<8x1024xf32, #tpu.memory_space<vmem>>, vector<8x1024xf32>
    %cst = arith.constant dense<0.000000e+00> : vector<512x1024xf32>
    %5 = tpu.matmul %3, %4, %cst {dimension_numbers = #tpu.dot_dimension_numbers<[0], [0], [1], [1], [0, 1, 1, 1], [], []>} : vector<8x512xf32>, vector<8x1024xf32>, vector<512x1024xf32> -> vector<512x1024xf32>
    %cst_4 = arith.constant 9.99999996E-13 : f32
    %6 = vector.broadcast %cst_4 : f32 to vector<512x1024xf32>
    %7 = arith.maximumf %5, %6 : vector<512x1024xf32>
    %8 = math.rsqrt %7 : vector<512x1024xf32>
    %c0_5 = arith.constant 0 : index
    %c0_6 = arith.constant 0 : index
    %9 = vector.load %arg5[%c0_5, %c0_6] : memref<1x1024xf32, #tpu.memory_space<vmem>>, vector<1x1024xf32>
    %c0_7 = arith.constant 0 : index
    %c0_8 = arith.constant 0 : index
    %10 = vector.load %arg4[%c0_7, %c0_8] : memref<1x512xf32, #tpu.memory_space<vmem>>, vector<1x512xf32>
    %cst_9 = arith.constant dense<0.000000e+00> : vector<1x1024xf32>
    %11 = tpu.matmul %10, %8, %cst_9 {dimension_numbers = #tpu.dot_dimension_numbers<[1], [0], [0], [1], [0, 0, 1, 1], [], []>} : vector<1x512xf32>, vector<512x1024xf32>, vector<1x1024xf32> -> vector<1x1024xf32>
    %12 = arith.addf %9, %11 : vector<1x1024xf32>
    %c0_10 = arith.constant 0 : index
    %c0_11 = arith.constant 0 : index
    %13 = vector.load %arg5[%c0_10, %c0_11] : memref<1x1024xf32, #tpu.memory_space<vmem>>, vector<1x1024xf32>
    tpu.vector_store %arg5[%c0_10, %c0_11], %12 {strides = array<i32>} : memref<1x1024xf32, #tpu.memory_space<vmem>>, vector<1x1024xf32>,
    return
  }
  func.func @transform_0(%arg0: i32, %arg1: i32) -> (i32, i32) {
    %c0_i32 = arith.constant 0 : i32
    %c0_i32_0 = arith.constant 0 : i32
    return %c0_i32, %arg0 : i32, i32
  }
  func.func @transform_1(%arg0: i32, %arg1: i32) -> (i32, i32) {
    %c0_i32 = arith.constant 0 : i32
    %c0_i32_0 = arith.constant 0 : i32
    return %c0_i32, %arg1 : i32, i32
  }
  func.func @transform_2(%arg0: i32, %arg1: i32) -> (i32, i32) {
    %c0_i32 = arith.constant 0 : i32
    %c0_i32_0 = arith.constant 0 : i32
    return %c0_i32, %arg1 : i32, i32
  }
  func.func @transform_3(%arg0: i32, %arg1: i32) -> (i32, i32) {
    %c0_i32 = arith.constant 0 : i32
    %c0_i32_0 = arith.constant 0 : i32
    return %c0_i32, %arg0 : i32, i32
  }
}

</mosaic_0001>

<llo_original>
// kernel: tpu_custom_call.1
$region0: #{tpu_custom_call.1}
  #allocation0 [shape = 'u32[]', space=smem, size = 0x4, offset = 0x4, fixed_abs, tag = 'smem constant byte address 0x4 - core index']
  #allocation1 [shape = 'u32[144,128]{1,0:T(1,128)}', space=vmem, size = 0x12000, scoped, tag = 'internal scratch']
  %s0 = inlined_call_operand.hbm [shape: f32[8,1024], index: 0, kind: input, shape index: {}]
  %s1 = inlined_call_operand.hbm [shape: f32[8,512], index: 1, kind: input, shape index: {}]
  %s2 = inlined_call_operand.hbm [shape: f32[1,512], index: 2, kind: input, shape index: {}]
  %s3 = inlined_call_operand.hbm [shape: f32[1,1024], index: 3, kind: output, shape index: {}]
  %s4 = sld [smem:[#allocation0]]
  $region38: #{tpu_custom_call.1} parent=0
    _
  %s6 = ssub.s32 1, %s4
  %s7 = scalar_select 0, %s6, %s4
  $region1: #{tpu_custom_call.1} parent=0
    #allocation2 [shape = 'u8[32768]{0}', space=vmem, size = 0x8000, scoped, tag = 'input window, operand 0, single buffered']
    #allocation3 [shape = 's32[1]{0}', space=sflag, size = 0x4, scoped, tag = 'scoped memory for tpu_custom_call.1']
    #allocation4 [shape = 's32[1]{0}', space=sflag, size = 0x4, scoped, tag = 'scoped memory for tpu_custom_call.1']
    #allocation5 [shape = 'u8[16384]{0}', space=vmem, size = 0x4000, scoped, tag = 'input window, operand 1, single buffered']
    #allocation6 [shape = 's32[1]{0}', space=sflag, size = 0x4, scoped, tag = 'scoped memory for tpu_custom_call.1']
    #allocation7 [shape = 'u8[2048]{0}', space=vmem, size = 0x800, scoped, tag = 'input window, operand 2, single buffered']
    #allocation8 [shape = 'u8[4096]{0}', space=vmem, size = 0x1000, scoped, tag = 'output window, operand 0, single buffered']
    %8 = vsyncpa [#allocation3], 0
    %9 = vsyncpa [#allocation6], 0
    %10 = vsyncpa [#allocation4], 0
    // Predicated region
    $region2: #{tpu_custom_call.1} parent=1 // pred_check
      _
    $region3: #{tpu_custom_call.1} parent=1 // pred_check_branch
      %12 = sbr.rel (0) target = $region5
    $region4: #{tpu_custom_call.1} parent=1 // pred_region
      %s14 = ssub.s32 1024, 1024
      %15 = vsyncadd [#allocation3], %s14
      %s17 = sshll.u32 [#allocation2], 4
      %s18 = int_to_ptr.vmem [resolvable:$true] %s17
      %20 = dma.hbm_to_vmem [thread:$0]  %s0, 1024, %s18, [#allocation3]
    $region5: #{tpu_custom_call.1} parent=1 // pred_fallthru
      _
    // Predicated region
    $region6: #{tpu_custom_call.1} parent=1 // pred_check
      _
    $region7: #{tpu_custom_call.1} parent=1 // pred_check_branch
      %22 = sbr.rel (0) target = $region9
    $region8: #{tpu_custom_call.1} parent=1 // pred_region
      %s24 = ssub.s32 512, 512
      %25 = vsyncadd [#allocation6], %s24
      %s27 = sshll.u32 [#allocation5], 4
      %s28 = int_to_ptr.vmem [resolvable:$true] %s27
      %30 = dma.hbm_to_vmem [thread:$0]  %s1, 512, %s28, [#allocation6]
    $region9: #{tpu_custom_call.1} parent=1 // pred_fallthru
      _
    // Predicated region
    $region10: #{tpu_custom_call.1} parent=1 // pred_check
      _
    $region11: #{tpu_custom_call.1} parent=1 // pred_check_branch
      %32 = sbr.rel (0) target = $region13
    $region12: #{tpu_custom_call.1} parent=1 // pred_region
      %s34 = ssub.s32 64, 64
      %35 = vsyncadd [#allocation6], %s34
      %s37 = sshll.u32 [#allocation7], 4
      %s38 = int_to_ptr.vmem [resolvable:$true] %s37
      %40 = dma.hbm_to_vmem [thread:$0]  %s2, 64, %s38, [#allocation6]
    $region13: #{tpu_custom_call.1} parent=1 // pred_fallthru
      _
    // Predicated region
    $region14: #{tpu_custom_call.1} parent=1 // pred_check
      _
    $region15: #{tpu_custom_call.1} parent=1 // pred_check_branch
      %42 = sbr.rel (0) target = $region17
    $region16: #{tpu_custom_call.1} parent=1 // pred_region
      %43 = dma.done [#allocation3], 1024
    $region17: #{tpu_custom_call.1} parent=1 // pred_fallthru
      _
    // Predicated region
    $region18: #{tpu_custom_call.1} parent=1 // pred_check
      _
    $region19: #{tpu_custom_call.1} parent=1 // pred_check_branch
      %45 = sbr.rel (0) target = $region21
    $region20: #{tpu_custom_call.1} parent=1 // pred_region
      %46 = dma.done [#allocation6], 512
    $region21: #{tpu_custom_call.1} parent=1 // pred_fallthru
      _
    // Predicated region
    $region22: #{tpu_custom_call.1} parent=1 // pred_check
      _
    $region23: #{tpu_custom_call.1} parent=1 // pred_check_branch
      %48 = sbr.rel (0) target = $region25
    $region24: #{tpu_custom_call.1} parent=1 // pred_region
      %49 = dma.done [#allocation6], 64
    $region25: #{tpu_custom_call.1} parent=1 // pred_fallthru
      _
    %p50 = scmp.eq.s32.totalorder 0, 0
    // Predicated region
    $region26: #{tpu_custom_call.1} parent=1 // pred_check
      %p51 = pneg %p50
    $region27: #{tpu_custom_call.1} parent=1 // pred_check_branch
      %53 = sbr.rel (%p51) target = $region29
    $region28: #{tpu_custom_call.1} parent=1 // pred_region
      %54 = vst [vmem:[#allocation8] sm:$0xff] 0.0
    $region29: #{tpu_custom_call.1} parent=1 // pred_fallthru
      _
    %v55 = vld [vmem:[#allocation5] sm:$0xff]
    %v56 = vld [vmem:[#allocation5 + $0x8] sm:$0xff]
    %v57 = vld [vmem:[#allocation5 + $0x10] sm:$0xff]
    %v58 = vld [vmem:[#allocation5 + $0x18] sm:$0xff]
    %v59 = vld [vmem:[#allocation2] sm:$0xff]
    %v60 = vld [vmem:[#allocation2 + $0x8] sm:$0xff]
    %v61 = vld [vmem:[#allocation2 + $0x10] sm:$0xff]
    %v62 = vld [vmem:[#allocation2 + $0x18] sm:$0xff]
    %v63 = vld [vmem:[#allocation2 + $0x20] sm:$0xff]
    %v64 = vld [vmem:[#allocation2 + $0x28] sm:$0xff]
    %v65 = vld [vmem:[#allocation2 + $0x30] sm:$0xff]
    %v66 = vld [vmem:[#allocation2 + $0x38] sm:$0xff]
    %67 = vxpose.xlu0.b32.start [1/16] %v55, 128
    %68 = vxpose.xlu0.b32.cont [2/16] 0.0, 128
    %69 = vxpose.xlu0.b32.cont [3/16] 0.0, 128
    %70 = vxpose.xlu0.b32.cont [4/16] 0.0, 128
    %71 = vxpose.xlu0.b32.cont [5/16] 0.0, 128
    %72 = vxpose.xlu0.b32.cont [6/16] 0.0, 128
    %73 = vxpose.xlu0.b32.cont [7/16] 0.0, 128
    %74 = vxpose.xlu0.b32.cont [8/16] 0.0, 128
    %75 = vxpose.xlu0.b32.cont [9/16] 0.0, 128
    %76 = vxpose.xlu0.b32.cont [10/16] 0.0, 128
    %77 = vxpose.xlu0.b32.cont [11/16] 0.0, 128
    %78 = vxpose.xlu0.b32.cont [12/16] 0.0, 128
    %79 = vxpose.xlu0.b32.cont [13/16] 0.0, 128
    %80 = vxpose.xlu0.b32.cont [14/16] 0.0, 128
    %81 = vxpose.xlu0.b32.cont [15/16] 0.0, 128
    %82 = vxpose.xlu0.b32.end [16/16] 0.0, 128
    %v83 = vpop.trf.xlu0
    %v84 = vpop.trf.xlu0
    %v85 = vpop.trf.xlu0
    %v86 = vpop.trf.xlu0
    %v87 = vpop.trf.xlu0
    %v88 = vpop.trf.xlu0
    %v89 = vpop.trf.xlu0
    %v90 = vpop.trf.xlu0
    %v91 = vpop.trf.xlu0
    %v92 = vpop.trf.xlu0
    %v93 = vpop.trf.xlu0
    %v94 = vpop.trf.xlu0
    %v95 = vpop.trf.xlu0
    %v96 = vpop.trf.xlu0
    %v97 = vpop.trf.xlu0
    %v98 = vpop.trf.xlu0
    %99 = vxpose.xlu0.b32.start [1/16] %v56, 128
    %100 = vxpose.xlu0.b32.cont [2/16] 0.0, 128
    %101 = vxpose.xlu0.b32.cont [3/16] 0.0, 128
    %102 = vxpose.xlu0.b32.cont [4/16] 0.0, 128
    %103 = vxpose.xlu0.b32.cont [5/16] 0.0, 128
    %104 = vxpose.xlu0.b32.cont [6/16] 0.0, 128
    %105 = vxpose.xlu0.b32.cont [7/16] 0.0, 128
    %106 = vxpose.xlu0.b32.cont [8/16] 0.0, 128
    %107 = vxpose.xlu0.b32.cont [9/16] 0.0, 128
    %108 = vxpose.xlu0.b32.cont [10/16] 0.0, 128
    %109 = vxpose.xlu0.b32.cont [11/16] 0.0, 128
    %110 = vxpose.xlu0.b32.cont [12/16] 0.0, 128
    %111 = vxpose.xlu0.b32.cont [13/16] 0.0, 128
    %112 = vxpose.xlu0.b32.cont [14/16] 0.0, 128
    %113 = vxpose.xlu0.b32.cont [15/16] 0.0, 128
    %114 = vxpose.xlu0.b32.end [16/16] 0.0, 128
    %v115 = vpop.trf.xlu0
    %v116 = vpop.trf.xlu0
    %v117 = vpop.trf.xlu0
    %v118 = vpop.trf.xlu0
    %v119 = vpop.trf.xlu0
    %v120 = vpop.trf.xlu0
    %v121 = vpop.trf.xlu0
    %v122 = vpop.trf.xlu0
    %v123 = vpop.trf.xlu0
    %v124 = vpop.trf.xlu0
    %v125 = vpop.trf.xlu0
    %v126 = vpop.trf.xlu0
    %v127 = vpop.trf.xlu0
    %v128 = vpop.trf.xlu0
    %v129 = vpop.trf.xlu0
    %v130 = vpop.trf.xlu0
    %131 = vxpose.xlu0.b32.start [1/16] %v57, 128
    %132 = vxpose.xlu0.b32.cont [2/16] 0.0, 128
    %133 = vxpose.xlu0.b32.cont [3/16] 0.0, 128
    %134 = vxpose.xlu0.b32.cont [4/16] 0.0, 128
    %135 = vxpose.xlu0.b32.cont [5/16] 0.0, 128
    %136 = vxpose.xlu0.b32.cont [6/16] 0.0, 128
    %137 = vxpose.xlu0.b32.cont [7/16] 0.0, 128
    %138 = vxpose.xlu0.b32.cont [8/16] 0.0, 128
    %139 = vxpose.xlu0.b32.cont [9/16] 0.0, 128
    %140 = vxpose.xlu0.b32.cont [10/16] 0.0, 128
    %141 = vxpose.xlu0.b32.cont [11/16] 0.0, 128
    %142 = vxpose.xlu0.b32.cont [12/16] 0.0, 128
    %143 = vxpose.xlu0.b32.cont [13/16] 0.0, 128
    %144 = vxpose.xlu0.b32.cont [14/16] 0.0, 128
    %145 = vxpose.xlu0.b32.cont [15/16] 0.0, 128
    %146 = vxpose.xlu0.b32.end [16/16] 0.0, 128
    %v147 = vpop.trf.xlu0
    %v148 = vpop.trf.xlu0
    %v149 = vpop.trf.xlu0
    %v150 = vpop.trf.xlu0
    %v151 = vpop.trf.xlu0
    %v152 = vpop.trf.xlu0
    %v153 = vpop.trf.xlu0
    %v154 = vpop.trf.xlu0
    %v155 = vpop.trf.xlu0
    %v156 = vpop.trf.xlu0
    %v157 = vpop.trf.xlu0
    %v158 = vpop.trf.xlu0
    %v159 = vpop.trf.xlu0
    %v160 = vpop.trf.xlu0
    %v161 = vpop.trf.xlu0
    %v162 = vpop.trf.xlu0
    %163 = vxpose.xlu0.b32.start [1/16] %v58, 128
    %164 = vxpose.xlu0.b32.cont [2/16] 0.0, 128
    %165 = vxpose.xlu0.b32.cont [3/16] 0.0, 128
    %166 = vxpose.xlu0.b32.cont [4/16] 0.0, 128
    %167 = vxpose.xlu0.b32.cont [5/16] 0.0, 128
    %168 = vxpose.xlu0.b32.cont [6/16] 0.0, 128
    %169 = vxpose.xlu0.b32.cont [7/16] 0.0, 128
    %170 = vxpose.xlu0.b32.cont [8/16] 0.0, 128
    %171 = vxpose.xlu0.b32.cont [9/16] 0.0, 128
    %172 = vxpose.xlu0.b32.cont [10/16] 0.0, 128
    %173 = vxpose.xlu0.b32.cont [11/16] 0.0, 128
    %174 = vxpose.xlu0.b32.cont [12/16] 0.0, 128
    %175 = vxpose.xlu0.b32.cont [13/16] 0.0, 128
    %176 = vxpose.xlu0.b32.cont [14/16] 0.0, 128
    %177 = vxpose.xlu0.b32.cont [15/16] 0.0, 128
    %178 = vxpose.xlu0.b32.end [16/16] 0.0, 128
    %v179 = vpop.trf.xlu0
    %v180 = vpop.trf.xlu0
    %v181 = vpop.trf.xlu0
    %v182 = vpop.trf.xlu0
    %v183 = vpop.trf.xlu0
    %v184 = vpop.trf.xlu0
    %v185 = vpop.trf.xlu0
    %v186 = vpop.trf.xlu0
    %v187 = vpop.trf.xlu0
    %v188 = vpop.trf.xlu0
    %v189 = vpop.trf.xlu0
    %v190 = vpop.trf.xlu0
    %v191 = vpop.trf.xlu0
    %v192 = vpop.trf.xlu0
    %v193 = vpop.trf.xlu0
    %v194 = vpop.trf.xlu0
    %vm195 = vcmask 64512
    %v197 = vsel %vm195, %v83, 0
    %v200 = vsel %vm195, %v84, 0
    %v203 = vsel %vm195, %v85, 0
    %v206 = vsel %vm195, %v86, 0
    %v209 = vsel %vm195, %v87, 0
    %v212 = vsel %vm195, %v88, 0
    %v215 = vsel %vm195, %v89, 0
    %v218 = vsel %vm195, %v90, 0
    %v221 = vsel %vm195, %v91, 0
    %v224 = vsel %vm195, %v92, 0
    %v227 = vsel %vm195, %v93, 0
    %v230 = vsel %vm195, %v94, 0
    %v233 = vsel %vm195, %v95, 0
    %v236 = vsel %vm195, %v96, 0
    %v239 = vsel %vm195, %v97, 0
    %v242 = vsel %vm195, %v98, 0
    %v245 = vsel %vm195, %v115, 0
    %v248 = vsel %vm195, %v116, 0
    %v251 = vsel %vm195, %v117, 0
    %v254 = vsel %vm195, %v118, 0
    %v257 = vsel %vm195, %v119, 0
    %v260 = vsel %vm195, %v120, 0
    %v263 = vsel %vm195, %v121, 0
    %v266 = vsel %vm195, %v122, 0
    %v269 = vsel %vm195, %v123, 0
    %v272 = vsel %vm195, %v124, 0
    %v275 = vsel %vm195, %v125, 0
    %v278 = vsel %vm195, %v126, 0
    %v281 = vsel %vm195, %v127, 0
    %v284 = vsel %vm195, %v128, 0
    %v287 = vsel %vm195, %v129, 0
    %v290 = vsel %vm195, %v130, 0
    %v293 = vsel %vm195, %v147, 0
    %v296 = vsel %vm195, %v148, 0
    %v299 = vsel %vm195, %v149, 0
    %v302 = vsel %vm195, %v150, 0
    %v305 = vsel %vm195, %v151, 0
    %v308 = vsel %vm195, %v152, 0
    %v311 = vsel %vm195, %v153, 0
    %v314 = vsel %vm195, %v154, 0
    %v317 = vsel %vm195, %v155, 0
    %v320 = vsel %vm195, %v156, 0
    %v323 = vsel %vm195, %v157, 0
    %v326 = vsel %vm195, %v158, 0
    %v329 = vsel %vm195, %v159, 0
    %v332 = vsel %vm195, %v160, 0
    %v335 = vsel %vm195, %v161, 0
    %v338 = vsel %vm195, %v162, 0
    %v341 = vsel %vm195, %v179, 0
    %v344 = vsel %vm195, %v180, 0
    %v347 = vsel %vm195, %v181, 0
    %v350 = vsel %vm195, %v182, 0
    %v353 = vsel %vm195, %v183, 0
    %v356 = vsel %vm195, %v184, 0
    %v359 = vsel %vm195, %v185, 0
    %v362 = vsel %vm195, %v186, 0
    %v365 = vsel %vm195, %v187, 0
    %v368 = vsel %vm195, %v188, 0
    %v371 = vsel %vm195, %v189, 0
    %v374 = vsel %vm195, %v190, 0
    %v377 = vsel %vm195, %v191, 0
    %v380 = vsel %vm195, %v192, 0
    %v383 = vsel %vm195, %v193, 0
    %v386 = vsel %vm195, %v194, 0
    %388 = vmatprep.subr.mxu0 0.0
    %389 = vmatpush1.msra.mxu0 0.0
    %390 = vmatprep.subr.mxu0 0.0
    %391 = vmatpush1.msra.mxu0 0.0
    %392 = vmatprep.subr.mxu0 0.0
    %393 = vmatpush1.msra.mxu0 0.0
    %394 = vmatprep.subr.mxu0 0.0
    %395 = vmatpush1.msra.mxu0 0.0
    %396 = vmatprep.subr.mxu0 0.0
    %397 = vmatpush1.msra.mxu0 0.0
    %398 = vmatprep.subr.mxu0 0.0
    %399 = vmatpush1.msra.mxu0 0.0
    %400 = vmatprep.subr.mxu0 0.0
    %401 = vmatpush1.msra.mxu0 0.0
    %402 = vmatprep.subr.mxu0 0.0
    %403 = vmatpush1.msra.mxu0 0.0
    %404 = vmatprep.subr.mxu0 0.0
    %405 = vmatpush1.msra.mxu0 0.0
    %406 = vmatprep.subr.mxu0 0.0
    %407 = vmatpush1.msra.mxu0 0.0
    %408 = vmatprep.subr.mxu0 0.0
    %409 = vmatpush1.msra.mxu0 0.0
    %410 = vmatprep.subr.mxu0 0.0
    %411 = vmatpush1.msra.mxu0 0.0
    %412 = vmatprep.subr.mxu0 0.0
    %413 = vmatpush1.msra.mxu0 0.0
    %414 = vmatprep.subr.mxu0 0.0
    %415 = vmatpush1.msra.mxu0 0.0
    %416 = vmatprep.subr.mxu0 0.0
    %417 = vmatpush1.msra.mxu0 0.0
    %418 = vmatprep.subr.mxu0 %v60
    %419 = vmatpush1.msra.mxu0 %v59
    %420 = vmatprep.subr.mxu0 0.0
    %421 = vmatpush2.msra.mxu0 0.0
    %422 = vmatprep.subr.mxu0 0.0
    %423 = vmatpush2.msra.mxu0 0.0
    %424 = vmatprep.subr.mxu0 0.0
    %425 = vmatpush2.msra.mxu0 0.0
    %426 = vmatprep.subr.mxu0 0.0
    %427 = vmatpush2.msra.mxu0 0.0
    %428 = vmatprep.subr.mxu0 0.0
    %429 = vmatpush2.msra.mxu0 0.0
    %430 = vmatprep.subr.mxu0 0.0
    %431 = vmatpush2.msra.mxu0 0.0
    %432 = vmatprep.subr.mxu0 0.0
    %433 = vmatpush2.msra.mxu0 0.0
    %434 = vmatprep.subr.mxu0 0.0
    %435 = vmatpush2.msra.mxu0 0.0
    %436 = vmatprep.subr.mxu0 0.0
    %437 = vmatpush2.msra.mxu0 0.0
    %438 = vmatprep.subr.mxu0 0.0
    %439 = vmatpush2.msra.mxu0 0.0
    %440 = vmatprep.subr.mxu0 0.0
    %441 = vmatpush2.msra.mxu0 0.0
    %442 = vmatprep.subr.mxu0 0.0
    %443 = vmatpush2.msra.mxu0 0.0
    %444 = vmatprep.subr.mxu0 0.0
    %445 = vmatpush2.msra.mxu0 0.0
    %446 = vmatprep.subr.mxu0 0.0
    %447 = vmatpush2.msra.mxu0 0.0
    %448 = vmatprep.subr.mxu0 0.0
    %449 = vmatpush2.msra.mxu0 0.0
    %450 = vmatprep.subr.mxu0 0.0
    %451 = vmatpush2.msra.mxu0 0.0
    %452 = vmatprep.mubr.f32.mxu0 0.0
    %453 = vmatmul.mubr.f32.gmra.mxu0 %v197
    %v454 = vpop.f32.mrf.mxu0
    %v455 = vadd.f32 0.0, %v454
    %v456 = vpop.f32.mrf.mxu0
    %v457 = vadd.f32 0.0, %v456
    %458 = vmatprep.mubr.f32.mxu0 0.0
    %459 = vmatmul.mubr.f32.gmra.mxu0 %v200
    %v460 = vpop.f32.mrf.mxu0
    %v461 = vadd.f32 0.0, %v460
    %v462 = vpop.f32.mrf.mxu0
    %v463 = vadd.f32 0.0, %v462
    %464 = vmatprep.mubr.f32.mxu0 0.0
    %465 = vmatmul.mubr.f32.gmra.mxu0 %v203
    %v466 = vpop.f32.mrf.mxu0
    %v467 = vadd.f32 0.0, %v466
    %v468 = vpop.f32.mrf.mxu0
    %v469 = vadd.f32 0.0, %v468
    %470 = vmatprep.mubr.f32.mxu0 0.0
    %471 = vmatmul.mubr.f32.gmra.mxu0 %v206
    %v472 = vpop.f32.mrf.mxu0
    %v473 = vadd.f32 0.0, %v472
    %v474 = vpop.f32.mrf.mxu0
    %v475 = vadd.f32 0.0, %v474
    %476 = vmatprep.mubr.f32.mxu0 0.0
    %477 = vmatmul.mubr.f32.gmra.mxu0 %v209
    %v478 = vpop.f32.mrf.mxu0
    %v479 = vadd.f32 0.0, %v478
    %v480 = vpop.f32.mrf.mxu0
    %v481 = vadd.f32 0.0, %v480
    %482 = vmatprep.mubr.f32.mxu0 0.0
    %483 = vmatmul.mubr.f32.gmra.mxu0 %v212
    %v484 = vpop.f32.mrf.mxu0
    %v485 = vadd.f32 0.0, %v484
    %v486 = vpop.f32.mrf.mxu0
    %v487 = vadd.f32 0.0, %v486
    %488 = vmatprep.mubr.f32.mxu0 0.0
    %489 = vmatmul.mubr.f32.gmra.mxu0 %v215
    %v490 = vpop.f32.mrf.mxu0
    %v491 = vadd.f32 0.0, %v490
    %v492 = vpop.f32.mrf.mxu0
    %v493 = vadd.f32 0.0, %v492
    %494 = vmatprep.mubr.f32.mxu0 0.0
    %495 = vmatmul.mubr.f32.gmra.mxu0 %v218
    %v496 = vpop.f32.mrf.mxu0
    %v497 = vadd.f32 0.0, %v496
    %v498 = vpop.f32.mrf.mxu0
    %v499 = vadd.f32 0.0, %v498
    %500 = vmatprep.mubr.f32.mxu0 0.0
    %501 = vmatmul.mubr.f32.gmra.mxu0 %v221
    %v502 = vpop.f32.mrf.mxu0
    %v503 = vadd.f32 0.0, %v502
    %v504 = vpop.f32.mrf.mxu0
    %v505 = vadd.f32 0.0, %v504
    %506 = vmatprep.mubr.f32.mxu0 0.0
    %507 = vmatmul.mubr.f32.gmra.mxu0 %v224
    %v508 = vpop.f32.mrf.mxu0
    %v509 = vadd.f32 0.0, %v508
    %v510 = vpop.f32.mrf.mxu0
    %v511 = vadd.f32 0.0, %v510
    %512 = vmatprep.mubr.f32.mxu0 0.0
    %513 = vmatmul.mubr.f32.gmra.mxu0 %v227
    %v514 = vpop.f32.mrf.mxu0
    %v515 = vadd.f32 0.0, %v514
    %v516 = vpop.f32.mrf.mxu0
    %v517 = vadd.f32 0.0, %v516
    %518 = vmatprep.mubr.f32.mxu0 0.0
    %519 = vmatmul.mubr.f32.gmra.mxu0 %v230
    %v520 = vpop.f32.mrf.mxu0
    %v521 = vadd.f32 0.0, %v520
    %v522 = vpop.f32.mrf.mxu0
    %v523 = vadd.f32 0.0, %v522
    %524 = vmatprep.mubr.f32.mxu0 0.0
    %525 = vmatmul.mubr.f32.gmra.mxu0 %v233
    %v526 = vpop.f32.mrf.mxu0
    %v527 = vadd.f32 0.0, %v526
    %v528 = vpop.f32.mrf.mxu0
    %v529 = vadd.f32 0.0, %v528
    %530 = vmatprep.mubr.f32.mxu0 0.0
    %531 = vmatmul.mubr.f32.gmra.mxu0 %v236
    %v532 = vpop.f32.mrf.mxu0
    %v533 = vadd.f32 0.0, %v532
    %v534 = vpop.f32.mrf.mxu0
    %v535 = vadd.f32 0.0, %v534
    %536 = vmatprep.mubr.f32.mxu0 0.0
    %537 = vmatmul.mubr.f32.gmra.mxu0 %v239
    %v538 = vpop.f32.mrf.mxu0
    %v539 = vadd.f32 0.0, %v538
    %v540 = vpop.f32.mrf.mxu0
    %v541 = vadd.f32 0.0, %v540
    %542 = vmatprep.mubr.f32.mxu0 0.0
    %543 = vmatmul.mubr.f32.gmra.mxu0 %v242
    %v544 = vpop.f32.mrf.mxu0
    %v545 = vadd.f32 0.0, %v544
    %v546 = vpop.f32.mrf.mxu0
    %v547 = vadd.f32 0.0, %v546
    %548 = vmatprep.mubr.f32.mxu0 0.0
    %549 = vmatmul.mubr.f32.gmra.mxu0 %v245
    %v550 = vpop.f32.mrf.mxu0
    %v551 = vadd.f32 0.0, %v550
    %v552 = vpop.f32.mrf.mxu0
    %v553 = vadd.f32 0.0, %v552
    %554 = vmatprep.mubr.f32.mxu0 0.0
    %555 = vmatmul.mubr.f32.gmra.mxu0 %v248
    %v556 = vpop.f32.mrf.mxu0
    %v557 = vadd.f32 0.0, %v556
    %v558 = vpop.f32.mrf.mxu0
    %v559 = vadd.f32 0.0, %v558
    %560 = vmatprep.mubr.f32.mxu0 0.0
    %561 = vmatmul.mubr.f32.gmra.mxu0 %v251
    %v562 = vpop.f32.mrf.mxu0
    %v563 = vadd.f32 0.0, %v562
    %v564 = vpop.f32.mrf.mxu0
    %v565 = vadd.f32 0.0, %v564
    %566 = vmatprep.mubr.f32.mxu0 0.0
    %567 = vmatmul.mubr.f32.gmra.mxu0 %v254
    %v568 = vpop.f32.mrf.mxu0
    %v569 = vadd.f32 0.0, %v568
    %v570 = vpop.f32.mrf.mxu0
    %v571 = vadd.f32 0.0, %v570
    %572 = vmatprep.mubr.f32.mxu0 0.0
    %573 = vmatmul.mubr.f32.gmra.mxu0 %v257
    %v574 = vpop.f32.mrf.mxu0
    %v575 = vadd.f32 0.0, %v574
    %v576 = vpop.f32.mrf.mxu0
    %v577 = vadd.f32 0.0, %v576
    %578 = vmatprep.mubr.f32.mxu0 0.0
    %579 = vmatmul.mubr.f32.gmra.mxu0 %v260
    %v580 = vpop.f32.mrf.mxu0
    %v581 = vadd.f32 0.0, %v580
    %v582 = vpop.f32.mrf.mxu0
    %v583 = vadd.f32 0.0, %v582
    %584 = vmatprep.mubr.f32.mxu0 0.0
    %585 = vmatmul.mubr.f32.gmra.mxu0 %v263
    %v586 = vpop.f32.mrf.mxu0
    %v587 = vadd.f32 0.0, %v586
    %v588 = vpop.f32.mrf.mxu0
    %v589 = vadd.f32 0.0, %v588
    %590 = vmatprep.mubr.f32.mxu0 0.0
    %591 = vmatmul.mubr.f32.gmra.mxu0 %v266
    %v592 = vpop.f32.mrf.mxu0
    %v593 = vadd.f32 0.0, %v592
    %v594 = vpop.f32.mrf.mxu0
    %v595 = vadd.f32 0.0, %v594
    %596 = vmatprep.mubr.f32.mxu0 0.0
    %597 = vmatmul.mubr.f32.gmra.mxu0 %v269
    %v598 = vpop.f32.mrf.mxu0
    %v599 = vadd.f32 0.0, %v598
    %v600 = vpop.f32.mrf.mxu0
    %v601 = vadd.f32 0.0, %v600
    %602 = vmatprep.mubr.f32.mxu0 0.0
    %603 = vmatmul.mubr.f32.gmra.mxu0 %v272
    %v604 = vpop.f32.mrf.mxu0
    %v605 = vadd.f32 0.0, %v604
    %v606 = vpop.f32.mrf.mxu0
    %v607 = vadd.f32 0.0, %v606
    %608 = vmatprep.mubr.f32.mxu0 0.0
    %609 = vmatmul.mubr.f32.gmra.mxu0 %v275
    %v610 = vpop.f32.mrf.mxu0
    %v611 = vadd.f32 0.0, %v610
    %v612 = vpop.f32.mrf.mxu0
    %v613 = vadd.f32 0.0, %v612
    %614 = vmatprep.mubr.f32.mxu0 0.0
    %615 = vmatmul.mubr.f32.gmra.mxu0 %v278
    %v616 = vpop.f32.mrf.mxu0
    %v617 = vadd.f32 0.0, %v616
    %v618 = vpop.f32.mrf.mxu0
    %v619 = vadd.f32 0.0, %v618
    %620 = vmatprep.mubr.f32.mxu0 0.0
    %621 = vmatmul.mubr.f32.gmra.mxu0 %v281
    %v622 = vpop.f32.mrf.mxu0
    %v623 = vadd.f32 0.0, %v622
    %v624 = vpop.f32.mrf.mxu0
    %v625 = vadd.f32 0.0, %v624
    %626 = vmatprep.mubr.f32.mxu0 0.0
    %627 = vmatmul.mubr.f32.gmra.mxu0 %v284
    %v628 = vpop.f32.mrf.mxu0
    %v629 = vadd.f32 0.0, %v628
    %v630 = vpop.f32.mrf.mxu0
    %v631 = vadd.f32 0.0, %v630
    %632 = vmatprep.mubr.f32.mxu0 0.0
    %633 = vmatmul.mubr.f32.gmra.mxu0 %v287
    %v634 = vpop.f32.mrf.mxu0
    %v635 = vadd.f32 0.0, %v634
    %v636 = vpop.f32.mrf.mxu0
    %v637 = vadd.f32 0.0, %v636
    %638 = vmatprep.mubr.f32.mxu0 0.0
    %639 = vmatmul.mubr.f32.gmra.mxu0 %v290
    %v640 = vpop.f32.mrf.mxu0
    %v641 = vadd.f32 0.0, %v640
    %v642 = vpop.f32.mrf.mxu0
    %v643 = vadd.f32 0.0, %v642
    %644 = vmatprep.mubr.f32.mxu0 0.0
    %645 = vmatmul.mubr.f32.gmra.mxu0 %v293
    %v646 = vpop.f32.mrf.mxu0
    %v647 = vadd.f32 0.0, %v646
    %v648 = vpop.f32.mrf.mxu0
    %v649 = vadd.f32 0.0, %v648
    %650 = vmatprep.mubr.f32.mxu0 0.0
    %651 = vmatmul.mubr.f32.gmra.mxu0 %v296
    %v652 = vpop.f32.mrf.mxu0
    %v653 = vadd.f32 0.0, %v652
    %v654 = vpop.f32.mrf.mxu0
    %v655 = vadd.f32 0.0, %v654
    %656 = vmatprep.mubr.f32.mxu0 0.0
    %657 = vmatmul.mubr.f32.gmra.mxu0 %v299
    %v658 = vpop.f32.mrf.mxu0
    %v659 = vadd.f32 0.0, %v658
    %v660 = vpop.f32.mrf.mxu0
    %v661 = vadd.f32 0.0, %v660
    %662 = vmatprep.mubr.f32.mxu0 0.0
    %663 = vmatmul.mubr.f32.gmra.mxu0 %v302
    %v664 = vpop.f32.mrf.mxu0
    %v665 = vadd.f32 0.0, %v664
    %v666 = vpop.f32.mrf.mxu0
    %v667 = vadd.f32 0.0, %v666
    %668 = vmatprep.mubr.f32.mxu0 0.0
    %669 = vmatmul.mubr.f32.gmra.mxu0 %v305
    %v670 = vpop.f32.mrf.mxu0
    %v671 = vadd.f32 0.0, %v670
    %v672 = vpop.f32.mrf.mxu0
    %v673 = vadd.f32 0.0, %v672
    %674 = vmatprep.mubr.f32.mxu0 0.0
    %675 = vmatmul.mubr.f32.gmra.mxu0 %v308
    %v676 = vpop.f32.mrf.mxu0
    %v677 = vadd.f32 0.0, %v676
    %v678 = vpop.f32.mrf.mxu0
    %v679 = vadd.f32 0.0, %v678
    %680 = vmatprep.mubr.f32.mxu0 0.0
    %681 = vmatmul.mubr.f32.gmra.mxu0 %v311
    %v682 = vpop.f32.mrf.mxu0
    %v683 = vadd.f32 0.0, %v682
    %v684 = vpop.f32.mrf.mxu0
    %v685 = vadd.f32 0.0, %v684
    %686 = vmatprep.mubr.f32.mxu0 0.0
    %687 = vmatmul.mubr.f32.gmra.mxu0 %v314
    %v688 = vpop.f32.mrf.mxu0
    %v689 = vadd.f32 0.0, %v688
    %v690 = vpop.f32.mrf.mxu0
    %v691 = vadd.f32 0.0, %v690
    %692 = vmatprep.mubr.f32.mxu0 0.0
    %693 = vmatmul.mubr.f32.gmra.mxu0 %v317
    %v694 = vpop.f32.mrf.mxu0
    %v695 = vadd.f32 0.0, %v694
    %v696 = vpop.f32.mrf.mxu0
    %v697 = vadd.f32 0.0, %v696
    %698 = vmatprep.mubr.f32.mxu0 0.0
    %699 = vmatmul.mubr.f32.gmra.mxu0 %v320
    %v700 = vpop.f32.mrf.mxu0
    %v701 = vadd.f32 0.0, %v700
    %v702 = vpop.f32.mrf.mxu0
    %v703 = vadd.f32 0.0, %v702
    %704 = vmatprep.mubr.f32.mxu0 0.0
    %705 = vmatmul.mubr.f32.gmra.mxu0 %v323
    %v706 = vpop.f32.mrf.mxu0
    %v707 = vadd.f32 0.0, %v706
    %v708 = vpop.f32.mrf.mxu0
    %v709 = vadd.f32 0.0, %v708
    %710 = vmatprep.mubr.f32.mxu0 0.0
    %711 = vmatmul.mubr.f32.gmra.mxu0 %v326
    %v712 = vpop.f32.mrf.mxu0
    %v713 = vadd.f32 0.0, %v712
    %v714 = vpop.f32.mrf.mxu0
    %v715 = vadd.f32 0.0, %v714
    %716 = vmatprep.mubr.f32.mxu0 0.0
    %717 = vmatmul.mubr.f32.gmra.mxu0 %v329
    %v718 = vpop.f32.mrf.mxu0
    %v719 = vadd.f32 0.0, %v718
    %v720 = vpop.f32.mrf.mxu0
    %v721 = vadd.f32 0.0, %v720
    %722 = vmatprep.mubr.f32.mxu0 0.0
    %723 = vmatmul.mubr.f32.gmra.mxu0 %v332
    %v724 = vpop.f32.mrf.mxu0
    %v725 = vadd.f32 0.0, %v724
    %v726 = vpop.f32.mrf.mxu0
    %v727 = vadd.f32 0.0, %v726
    %728 = vmatprep.mubr.f32.mxu0 0.0
    %729 = vmatmul.mubr.f32.gmra.mxu0 %v335
    %v730 = vpop.f32.mrf.mxu0
    %v731 = vadd.f32 0.0, %v730
    %v732 = vpop.f32.mrf.mxu0
    %v733 = vadd.f32 0.0, %v732
    %734 = vmatprep.mubr.f32.mxu0 0.0
    %735 = vmatmul.mubr.f32.gmra.mxu0 %v338
    %v736 = vpop.f32.mrf.mxu0
    %v737 = vadd.f32 0.0, %v736
    %v738 = vpop.f32.mrf.mxu0
    %v739 = vadd.f32 0.0, %v738
    %740 = vmatprep.mubr.f32.mxu0 0.0
    %741 = vmatmul.mubr.f32.gmra.mxu0 %v341
    %v742 = vpop.f32.mrf.mxu0
    %v743 = vadd.f32 0.0, %v742
    %v744 = vpop.f32.mrf.mxu0
    %v745 = vadd.f32 0.0, %v744
    %746 = vmatprep.mubr.f32.mxu0 0.0
    %747 = vmatmul.mubr.f32.gmra.mxu0 %v344
    %v748 = vpop.f32.mrf.mxu0
    %v749 = vadd.f32 0.0, %v748
    %v750 = vpop.f32.mrf.mxu0
    %v751 = vadd.f32 0.0, %v750
    %752 = vmatprep.mubr.f32.mxu0 0.0
    %753 = vmatmul.mubr.f32.gmra.mxu0 %v347
    %v754 = vpop.f32.mrf.mxu0
    %v755 = vadd.f32 0.0, %v754
    %v756 = vpop.f32.mrf.mxu0
    %v757 = vadd.f32 0.0, %v756
    %758 = vmatprep.mubr.f32.mxu0 0.0
    %759 = vmatmul.mubr.f32.gmra.mxu0 %v350
    %v760 = vpop.f32.mrf.mxu0
    %v761 = vadd.f32 0.0, %v760
    %v762 = vpop.f32.mrf.mxu0
    %v763 = vadd.f32 0.0, %v762
    %764 = vmatprep.mubr.f32.mxu0 0.0
    %765 = vmatmul.mubr.f32.gmra.mxu0 %v353
    %v766 = vpop.f32.mrf.mxu0
    %v767 = vadd.f32 0.0, %v766
    %v768 = vpop.f32.mrf.mxu0
    %v769 = vadd.f32 0.0, %v768
    %770 = vmatprep.mubr.f32.mxu0 0.0
    %771 = vmatmul.mubr.f32.gmra.mxu0 %v356
    %v772 = vpop.f32.mrf.mxu0
    %v773 = vadd.f32 0.0, %v772
    %v774 = vpop.f32.mrf.mxu0
    %v775 = vadd.f32 0.0, %v774
    %776 = vmatprep.mubr.f32.mxu0 0.0
    %777 = vmatmul.mubr.f32.gmra.mxu0 %v359
    %v778 = vpop.f32.mrf.mxu0
    %v779 = vadd.f32 0.0, %v778
    %v780 = vpop.f32.mrf.mxu0
    %v781 = vadd.f32 0.0, %v780
    %782 = vmatprep.mubr.f32.mxu0 0.0
    %783 = vmatmul.mubr.f32.gmra.mxu0 %v362
    %v784 = vpop.f32.mrf.mxu0
    %v785 = vadd.f32 0.0, %v784
    %v786 = vpop.f32.mrf.mxu0
    %v787 = vadd.f32 0.0, %v786
    %788 = vmatprep.mubr.f32.mxu0 0.0
    %789 = vmatmul.mubr.f32.gmra.mxu0 %v365
    %v790 = vpop.f32.mrf.mxu0
    %v791 = vadd.f32 0.0, %v790
    %v792 = vpop.f32.mrf.mxu0
    %v793 = vadd.f32 0.0, %v792
    %794 = vmatprep.mubr.f32.mxu0 0.0
    %795 = vmatmul.mubr.f32.gmra.mxu0 %v368
    %v796 = vpop.f32.mrf.mxu0
    %v797 = vadd.f32 0.0, %v796
    %v798 = vpop.f32.mrf.mxu0
    %v799 = vadd.f32 0.0, %v798
    %800 = vmatprep.mubr.f32.mxu0 0.0
    %801 = vmatmul.mubr.f32.gmra.mxu0 %v371
    %v802 = vpop.f32.mrf.mxu0
    %v803 = vadd.f32 0.0, %v802
    %v804 = vpop.f32.mrf.mxu0
    %v805 = vadd.f32 0.0, %v804
    %806 = vmatprep.mubr.f32.mxu0 0.0
    %807 = vmatmul.mubr.f32.gmra.mxu0 %v374
    %v808 = vpop.f32.mrf.mxu0
    %v809 = vadd.f32 0.0, %v808
    %v810 = vpop.f32.mrf.mxu0
    %v811 = vadd.f32 0.0, %v810
    %812 = vmatprep.mubr.f32.mxu0 0.0
    %813 = vmatmul.mubr.f32.gmra.mxu0 %v377
    %v814 = vpop.f32.mrf.mxu0
    %v815 = vadd.f32 0.0, %v814
    %v816 = vpop.f32.mrf.mxu0
    %v817 = vadd.f32 0.0, %v816
    %818 = vmatprep.mubr.f32.mxu0 0.0
    %819 = vmatmul.mubr.f32.gmra.mxu0 %v380
    %v820 = vpop.f32.mrf.mxu0
    %v821 = vadd.f32 0.0, %v820
    %v822 = vpop.f32.mrf.mxu0
    %v823 = vadd.f32 0.0, %v822
    %824 = vmatprep.mubr.f32.mxu0 0.0
    %825 = vmatmul.mubr.f32.gmra.mxu0 %v383
    %v826 = vpop.f32.mrf.mxu0
    %v827 = vadd.f32 0.0, %v826
    %v828 = vpop.f32.mrf.mxu0
    %v829 = vadd.f32 0.0, %v828
    %830 = vmatprep.mubr.f32.mxu0 0.0
    %831 = vmatmul.mubr.f32.gmra.mxu0 %v386
    %v832 = vpop.f32.mrf.mxu0
    %v833 = vadd.f32 0.0, %v832
    %v834 = vpop.f32.mrf.mxu0
    %v835 = vadd.f32 0.0, %v834
    %836 = vdwg.mxu0
    %837 = vmatprep.subr.mxu0 0.0
    %838 = vmatpush1.msra.mxu0 0.0
    %839 = vmatprep.subr.mxu0 0.0
    %840 = vmatpush1.msra.mxu0 0.0
    %841 = vmatprep.subr.mxu0 0.0
    %842 = vmatpush1.msra.mxu0 0.0
    %843 = vmatprep.subr.mxu0 0.0
    %844 = vmatpush1.msra.mxu0 0.0
    %845 = vmatprep.subr.mxu0 0.0
    %846 = vmatpush1.msra.mxu0 0.0
    %847 = vmatprep.subr.mxu0 0.0
    %848 = vmatpush1.msra.mxu0 0.0
    %849 = vmatprep.subr.mxu0 0.0
    %850 = vmatpush1.msra.mxu0 0.0
    %851 = vmatprep.subr.mxu0 0.0
    %852 = vmatpush1.msra.mxu0 0.0
    %853 = vmatprep.subr.mxu0 0.0
    %854 = vmatpush1.msra.mxu0 0.0
    %855 = vmatprep.subr.mxu0 0.0
    %856 = vmatpush1.msra.mxu0 0.0
    %857 = vmatprep.subr.mxu0 0.0
    %858 = vmatpush1.msra.mxu0 0.0
    %859 = vmatprep.subr.mxu0 0.0
    %860 = vmatpush1.msra.mxu0 0.0
    %861 = vmatprep.subr.mxu0 0.0
    %862 = vmatpush1.msra.mxu0 0.0
    %863 = vmatprep.subr.mxu0 0.0
    %864 = vmatpush1.msra.mxu0 0.0
    %865 = vmatprep.subr.mxu0 0.0
    %866 = vmatpush1.msra.mxu0 0.0
    %867 = vmatprep.subr.mxu0 %v62
    %868 = vmatpush1.msra.mxu0 %v61
    %869 = vmatprep.subr.mxu0 0.0
    %870 = vmatpush2.msra.mxu0 0.0
    %871 = vmatprep.subr.mxu0 0.0
    %872 = vmatpush2.msra.mxu0 0.0
    %873 = vmatprep.subr.mxu0 0.0
    %874 = vmatpush2.msra.mxu0 0.0
    %875 = vmatprep.subr.mxu0 0.0
    %876 = vmatpush2.msra.mxu0 0.0
    %877 = vmatprep.subr.mxu0 0.0
    %878 = vmatpush2.msra.mxu0 0.0
    %879 = vmatprep.subr.mxu0 0.0
    %880 = vmatpush2.msra.mxu0 0.0
    %881 = vmatprep.subr.mxu0 0.0
    %882 = vmatpush2.msra.mxu0 0.0
    %883 = vmatprep.subr.mxu0 0.0
    %884 = vmatpush2.msra.mxu0 0.0
    %885 = vmatprep.subr.mxu0 0.0
    %886 = vmatpush2.msra.mxu0 0.0
    %887 = vmatprep.subr.mxu0 0.0
    %888 = vmatpush2.msra.mxu0 0.0
    %889 = vmatprep.subr.mxu0 0.0
    %890 = vmatpush2.msra.mxu0 0.0
    %891 = vmatprep.subr.mxu0 0.0
    %892 = vmatpush2.msra.mxu0 0.0
    %893 = vmatprep.subr.mxu0 0.0
    %894 = vmatpush2.msra.mxu0 0.0
    %895 = vmatprep.subr.mxu0 0.0
    %896 = vmatpush2.msra.mxu0 0.0
    %897 = vmatprep.subr.mxu0 0.0
    %898 = vmatpush2.msra.mxu0 0.0
    %899 = vmatprep.subr.mxu0 0.0
    %900 = vmatpush2.msra.mxu0 0.0
    %901 = vmatprep.mubr.f32.mxu0 0.0
    %902 = vmatmul.mubr.f32.gmra.mxu0 %v197
    %v903 = vpop.f32.mrf.mxu0
    %v904 = vadd.f32 0.0, %v903
    %v905 = vpop.f32.mrf.mxu0
    %v906 = vadd.f32 0.0, %v905
    %907 = vmatprep.mubr.f32.mxu0 0.0
    %908 = vmatmul.mubr.f32.gmra.mxu0 %v200
    %v909 = vpop.f32.mrf.mxu0
    %v910 = vadd.f32 0.0, %v909
    %v911 = vpop.f32.mrf.mxu0
    %v912 = vadd.f32 0.0, %v911
    %913 = vmatprep.mubr.f32.mxu0 0.0
    %914 = vmatmul.mubr.f32.gmra.mxu0 %v203
    %v915 = vpop.f32.mrf.mxu0
    %v916 = vadd.f32 0.0, %v915
    %v917 = vpop.f32.mrf.mxu0
    %v918 = vadd.f32 0.0, %v917
    %919 = vmatprep.mubr.f32.mxu0 0.0
    %920 = vmatmul.mubr.f32.gmra.mxu0 %v206
    %v921 = vpop.f32.mrf.mxu0
    %v922 = vadd.f32 0.0, %v921
    %v923 = vpop.f32.mrf.mxu0
    %v924 = vadd.f32 0.0, %v923
    %925 = vmatprep.mubr.f32.mxu0 0.0
    %926 = vmatmul.mubr.f32.gmra.mxu0 %v209
    %v927 = vpop.f32.mrf.mxu0
    %v928 = vadd.f32 0.0, %v927
    %v929 = vpop.f32.mrf.mxu0
    %v930 = vadd.f32 0.0, %v929
    %931 = vmatprep.mubr.f32.mxu0 0.0
    %932 = vmatmul.mubr.f32.gmra.mxu0 %v212
    %v933 = vpop.f32.mrf.mxu0
    %v934 = vadd.f32 0.0, %v933
    %v935 = vpop.f32.mrf.mxu0
    %v936 = vadd.f32 0.0, %v935
    %937 = vmatprep.mubr.f32.mxu0 0.0
    %938 = vmatmul.mubr.f32.gmra.mxu0 %v215
    %v939 = vpop.f32.mrf.mxu0
    %v940 = vadd.f32 0.0, %v939
    %v941 = vpop.f32.mrf.mxu0
    %v942 = vadd.f32 0.0, %v941
    %943 = vmatprep.mubr.f32.mxu0 0.0
    %944 = vmatmul.mubr.f32.gmra.mxu0 %v218
    %v945 = vpop.f32.mrf.mxu0
    %v946 = vadd.f32 0.0, %v945
    %v947 = vpop.f32.mrf.mxu0
    %v948 = vadd.f32 0.0, %v947
    %949 = vmatprep.mubr.f32.mxu0 0.0
    %950 = vmatmul.mubr.f32.gmra.mxu0 %v221
    %v951 = vpop.f32.mrf.mxu0
    %v952 = vadd.f32 0.0, %v951
    %v953 = vpop.f32.mrf.mxu0
    %v954 = vadd.f32 0.0, %v953
    %955 = vmatprep.mubr.f32.mxu0 0.0
    %956 = vmatmul.mubr.f32.gmra.mxu0 %v224
    %v957 = vpop.f32.mrf.mxu0
    %v958 = vadd.f32 0.0, %v957
    %v959 = vpop.f32.mrf.mxu0
    %v960 = vadd.f32 0.0, %v959
    %961 = vmatprep.mubr.f32.mxu0 0.0
    %962 = vmatmul.mubr.f32.gmra.mxu0 %v227
    %v963 = vpop.f32.mrf.mxu0
    %v964 = vadd.f32 0.0, %v963
    %v965 = vpop.f32.mrf.mxu0
    %v966 = vadd.f32 0.0, %v965
    %967 = vmatprep.mubr.f32.mxu0 0.0
    %968 = vmatmul.mubr.f32.gmra.mxu0 %v230
    %v969 = vpop.f32.mrf.mxu0
    %v970 = vadd.f32 0.0, %v969
    %v971 = vpop.f32.mrf.mxu0
    %v972 = vadd.f32 0.0, %v971
    %973 = vmatprep.mubr.f32.mxu0 0.0
    %974 = vmatmul.mubr.f32.gmra.mxu0 %v233
    %v975 = vpop.f32.mrf.mxu0
    %v976 = vadd.f32 0.0, %v975
    %v977 = vpop.f32.mrf.mxu0
    %v978 = vadd.f32 0.0, %v977
    %979 = vmatprep.mubr.f32.mxu0 0.0
    %980 = vmatmul.mubr.f32.gmra.mxu0 %v236
    %v981 = vpop.f32.mrf.mxu0
    %v982 = vadd.f32 0.0, %v981
    %v983 = vpop.f32.mrf.mxu0
    %v984 = vadd.f32 0.0, %v983
    %985 = vmatprep.mubr.f32.mxu0 0.0
    %986 = vmatmul.mubr.f32.gmra.mxu0 %v239
    %v987 = vpop.f32.mrf.mxu0
    %v988 = vadd.f32 0.0, %v987
    %v989 = vpop.f32.mrf.mxu0
    %v990 = vadd.f32 0.0, %v989
    %991 = vmatprep.mubr.f32.mxu0 0.0
    %992 = vmatmul.mubr.f32.gmra.mxu0 %v242
    %v993 = vpop.f32.mrf.mxu0
    %v994 = vadd.f32 0.0, %v993
    %v995 = vpop.f32.mrf.mxu0
    %v996 = vadd.f32 0.0, %v995
    %997 = vmatprep.mubr.f32.mxu0 0.0
    %998 = vmatmul.mubr.f32.gmra.mxu0 %v245
    %v999 = vpop.f32.mrf.mxu0
    %v1000 = vadd.f32 0.0, %v999
    %v1001 = vpop.f32.mrf.mxu0
    %v1002 = vadd.f32 0.0, %v1001
    %1003 = vmatprep.mubr.f32.mxu0 0.0
    %1004 = vmatmul.mubr.f32.gmra.mxu0 %v248
    %v1005 = vpop.f32.mrf.mxu0
    %v1006 = vadd.f32 0.0, %v1005
    %v1007 = vpop.f32.mrf.mxu0
    %v1008 = vadd.f32 0.0, %v1007
    %1009 = vmatprep.mubr.f32.mxu0 0.0
    %1010 = vmatmul.mubr.f32.gmra.mxu0 %v251
    %v1011 = vpop.f32.mrf.mxu0
    %v1012 = vadd.f32 0.0, %v1011
    %v1013 = vpop.f32.mrf.mxu0
    %v1014 = vadd.f32 0.0, %v1013
    %1015 = vmatprep.mubr.f32.mxu0 0.0
    %1016 = vmatmul.mubr.f32.gmra.mxu0 %v254
    %v1017 = vpop.f32.mrf.mxu0
    %v1018 = vadd.f32 0.0, %v1017
    %v1019 = vpop.f32.mrf.mxu0
    %v1020 = vadd.f32 0.0, %v1019
    %1021 = vmatprep.mubr.f32.mxu0 0.0
    %1022 = vmatmul.mubr.f32.gmra.mxu0 %v257
    %v1023 = vpop.f32.mrf.mxu0
    %v1024 = vadd.f32 0.0, %v1023
    %v1025 = vpop.f32.mrf.mxu0
    %v1026 = vadd.f32 0.0, %v1025
    %1027 = vmatprep.mubr.f32.mxu0 0.0
    %1028 = vmatmul.mubr.f32.gmra.mxu0 %v260
    %v1029 = vpop.f32.mrf.mxu0
    %v1030 = vadd.f32 0.0, %v1029
    %v1031 = vpop.f32.mrf.mxu0
    %v1032 = vadd.f32 0.0, %v1031
    %1033 = vmatprep.mubr.f32.mxu0 0.0
    %1034 = vmatmul.mubr.f32.gmra.mxu0 %v263
    %v1035 = vpop.f32.mrf.mxu0
    %v1036 = vadd.f32 0.0, %v1035
    %v1037 = vpop.f32.mrf.mxu0
    %v1038 = vadd.f32 0.0, %v1037
    %1039 = vmatprep.mubr.f32.mxu0 0.0
    %1040 = vmatmul.mubr.f32.gmra.mxu0 %v266
    %v1041 = vpop.f32.mrf.mxu0
    %v1042 = vadd.f32 0.0, %v1041
    %v1043 = vpop.f32.mrf.mxu0
    %v1044 = vadd.f32 0.0, %v1043
    %1045 = vmatprep.mubr.f32.mxu0 0.0
    %1046 = vmatmul.mubr.f32.gmra.mxu0 %v269
    %v1047 = vpop.f32.mrf.mxu0
    %v1048 = vadd.f32 0.0, %v1047
    %v1049 = vpop.f32.mrf.mxu0
    %v1050 = vadd.f32 0.0, %v1049
    %1051 = vmatprep.mubr.f32.mxu0 0.0
    %1052 = vmatmul.mubr.f32.gmra.mxu0 %v272
    %v1053 = vpop.f32.mrf.mxu0
    %v1054 = vadd.f32 0.0, %v1053
    %v1055 = vpop.f32.mrf.mxu0
    %v1056 = vadd.f32 0.0, %v1055
    %1057 = vmatprep.mubr.f32.mxu0 0.0
    %1058 = vmatmul.mubr.f32.gmra.mxu0 %v275
    %v1059 = vpop.f32.mrf.mxu0
    %v1060 = vadd.f32 0.0, %v1059
    %v1061 = vpop.f32.mrf.mxu0
    %v1062 = vadd.f32 0.0, %v1061
    %1063 = vmatprep.mubr.f32.mxu0 0.0
    %1064 = vmatmul.mubr.f32.gmra.mxu0 %v278
    %v1065 = vpop.f32.mrf.mxu0
    %v1066 = vadd.f32 0.0, %v1065
    %v1067 = vpop.f32.mrf.mxu0
    %v1068 = vadd.f32 0.0, %v1067
    %1069 = vmatprep.mubr.f32.mxu0 0.0
    %1070 = vmatmul.mubr.f32.gmra.mxu0 %v281
    %v1071 = vpop.f32.mrf.mxu0
    %v1072 = vadd.f32 0.0, %v1071
    %v1073 = vpop.f32.mrf.mxu0
    %v1074 = vadd.f32 0.0, %v1073
    %1075 = vmatprep.mubr.f32.mxu0 0.0
    %1076 = vmatmul.mubr.f32.gmra.mxu0 %v284
    %v1077 = vpop.f32.mrf.mxu0
    %v1078 = vadd.f32 0.0, %v1077
    %v1079 = vpop.f32.mrf.mxu0
    %v1080 = vadd.f32 0.0, %v1079
    %1081 = vmatprep.mubr.f32.mxu0 0.0
    %1082 = vmatmul.mubr.f32.gmra.mxu0 %v287
    %v1083 = vpop.f32.mrf.mxu0
    %v1084 = vadd.f32 0.0, %v1083
    %v1085 = vpop.f32.mrf.mxu0
    %v1086 = vadd.f32 0.0, %v1085
    %1087 = vmatprep.mubr.f32.mxu0 0.0
    %1088 = vmatmul.mubr.f32.gmra.mxu0 %v290
    %v1089 = vpop.f32.mrf.mxu0
    %v1090 = vadd.f32 0.0, %v1089
    %v1091 = vpop.f32.mrf.mxu0
    %v1092 = vadd.f32 0.0, %v1091
    %1093 = vmatprep.mubr.f32.mxu0 0.0
    %1094 = vmatmul.mubr.f32.gmra.mxu0 %v293
    %v1095 = vpop.f32.mrf.mxu0
    %v1096 = vadd.f32 0.0, %v1095
    %v1097 = vpop.f32.mrf.mxu0
    %v1098 = vadd.f32 0.0, %v1097
    %1099 = vmatprep.mubr.f32.mxu0 0.0
    %1100 = vmatmul.mubr.f32.gmra.mxu0 %v296
    %v1101 = vpop.f32.mrf.mxu0
    %v1102 = vadd.f32 0.0, %v1101
    %v1103 = vpop.f32.mrf.mxu0
    %v1104 = vadd.f32 0.0, %v1103
    %1105 = vmatprep.mubr.f32.mxu0 0.0
    %1106 = vmatmul.mubr.f32.gmra.mxu0 %v299
    %v1107 = vpop.f32.mrf.mxu0
    %v1108 = vadd.f32 0.0, %v1107
    %v1109 = vpop.f32.mrf.mxu0
    %v1110 = vadd.f32 0.0, %v1109
    %1111 = vmatprep.mubr.f32.mxu0 0.0
    %1112 = vmatmul.mubr.f32.gmra.mxu0 %v302
    %v1113 = vpop.f32.mrf.mxu0
    %v1114 = vadd.f32 0.0, %v1113
    %v1115 = vpop.f32.mrf.mxu0
    %v1116 = vadd.f32 0.0, %v1115
    %1117 = vmatprep.mubr.f32.mxu0 0.0
    %1118 = vmatmul.mubr.f32.gmra.mxu0 %v305
    %v1119 = vpop.f32.mrf.mxu0
    %v1120 = vadd.f32 0.0, %v1119
    %v1121 = vpop.f32.mrf.mxu0
    %v1122 = vadd.f32 0.0, %v1121
    %1123 = vmatprep.mubr.f32.mxu0 0.0
    %1124 = vmatmul.mubr.f32.gmra.mxu0 %v308
    %v1125 = vpop.f32.mrf.mxu0
    %v1126 = vadd.f32 0.0, %v1125
    %v1127 = vpop.f32.mrf.mxu0
    %v1128 = vadd.f32 0.0, %v1127
    %1129 = vmatprep.mubr.f32.mxu0 0.0
    %1130 = vmatmul.mubr.f32.gmra.mxu0 %v311
    %v1131 = vpop.f32.mrf.mxu0
    %v1132 = vadd.f32 0.0, %v1131
    %v1133 = vpop.f32.mrf.mxu0
    %v1134 = vadd.f32 0.0, %v1133
    %1135 = vmatprep.mubr.f32.mxu0 0.0
    %1136 = vmatmul.mubr.f32.gmra.mxu0 %v314
    %v1137 = vpop.f32.mrf.mxu0
    %v1138 = vadd.f32 0.0, %v1137
    %v1139 = vpop.f32.mrf.mxu0
    %v1140 = vadd.f32 0.0, %v1139
    %1141 = vmatprep.mubr.f32.mxu0 0.0
    %1142 = vmatmul.mubr.f32.gmra.mxu0 %v317
    %v1143 = vpop.f32.mrf.mxu0
    %v1144 = vadd.f32 0.0, %v1143
    %v1145 = vpop.f32.mrf.mxu0
    %v1146 = vadd.f32 0.0, %v1145
    %1147 = vmatprep.mubr.f32.mxu0 0.0
    %1148 = vmatmul.mubr.f32.gmra.mxu0 %v320
    %v1149 = vpop.f32.mrf.mxu0
    %v1150 = vadd.f32 0.0, %v1149
    %v1151 = vpop.f32.mrf.mxu0
    %v1152 = vadd.f32 0.0, %v1151
    %1153 = vmatprep.mubr.f32.mxu0 0.0
    %1154 = vmatmul.mubr.f32.gmra.mxu0 %v323
    %v1155 = vpop.f32.mrf.mxu0
    %v1156 = vadd.f32 0.0, %v1155
    %v1157 = vpop.f32.mrf.mxu0
    %v1158 = vadd.f32 0.0, %v1157
    %1159 = vmatprep.mubr.f32.mxu0 0.0
    %1160 = vmatmul.mubr.f32.gmra.mxu0 %v326
    %v1161 = vpop.f32.mrf.mxu0
    %v1162 = vadd.f32 0.0, %v1161
    %v1163 = vpop.f32.mrf.mxu0
    %v1164 = vadd.f32 0.0, %v1163
    %1165 = vmatprep.mubr.f32.mxu0 0.0
    %1166 = vmatmul.mubr.f32.gmra.mxu0 %v329
    %v1167 = vpop.f32.mrf.mxu0
    %v1168 = vadd.f32 0.0, %v1167
    %v1169 = vpop.f32.mrf.mxu0
    %v1170 = vadd.f32 0.0, %v1169
    %1171 = vmatprep.mubr.f32.mxu0 0.0
    %1172 = vmatmul.mubr.f32.gmra.mxu0 %v332
    %v1173 = vpop.f32.mrf.mxu0
    %v1174 = vadd.f32 0.0, %v1173
    %v1175 = vpop.f32.mrf.mxu0
    %v1176 = vadd.f32 0.0, %v1175
    %1177 = vmatprep.mubr.f32.mxu0 0.0
    %1178 = vmatmul.mubr.f32.gmra.mxu0 %v335
    %v1179 = vpop.f32.mrf.mxu0
    %v1180 = vadd.f32 0.0, %v1179
    %v1181 = vpop.f32.mrf.mxu0
    %v1182 = vadd.f32 0.0, %v1181
    %1183 = vmatprep.mubr.f32.mxu0 0.0
    %1184 = vmatmul.mubr.f32.gmra.mxu0 %v338
    %v1185 = vpop.f32.mrf.mxu0
    %v1186 = vadd.f32 0.0, %v1185
    %v1187 = vpop.f32.mrf.mxu0
    %v1188 = vadd.f32 0.0, %v1187
    %1189 = vmatprep.mubr.f32.mxu0 0.0
    %1190 = vmatmul.mubr.f32.gmra.mxu0 %v341
    %v1191 = vpop.f32.mrf.mxu0
    %v1192 = vadd.f32 0.0, %v1191
    %v1193 = vpop.f32.mrf.mxu0
    %v1194 = vadd.f32 0.0, %v1193
    %1195 = vmatprep.mubr.f32.mxu0 0.0
    %1196 = vmatmul.mubr.f32.gmra.mxu0 %v344
    %v1197 = vpop.f32.mrf.mxu0
    %v1198 = vadd.f32 0.0, %v1197
    %v1199 = vpop.f32.mrf.mxu0
    %v1200 = vadd.f32 0.0, %v1199
    %1201 = vmatprep.mubr.f32.mxu0 0.0
    %1202 = vmatmul.mubr.f32.gmra.mxu0 %v347
    %v1203 = vpop.f32.mrf.mxu0
    %v1204 = vadd.f32 0.0, %v1203
    %v1205 = vpop.f32.mrf.mxu0
    %v1206 = vadd.f32 0.0, %v1205
    %1207 = vmatprep.mubr.f32.mxu0 0.0
    %1208 = vmatmul.mubr.f32.gmra.mxu0 %v350
    %v1209 = vpop.f32.mrf.mxu0
    %v1210 = vadd.f32 0.0, %v1209
    %v1211 = vpop.f32.mrf.mxu0
    %v1212 = vadd.f32 0.0, %v1211
    %1213 = vmatprep.mubr.f32.mxu0 0.0
    %1214 = vmatmul.mubr.f32.gmra.mxu0 %v353
    %v1215 = vpop.f32.mrf.mxu0
    %v1216 = vadd.f32 0.0, %v1215
    %v1217 = vpop.f32.mrf.mxu0
    %v1218 = vadd.f32 0.0, %v1217
    %1219 = vmatprep.mubr.f32.mxu0 0.0
    %1220 = vmatmul.mubr.f32.gmra.mxu0 %v356
    %v1221 = vpop.f32.mrf.mxu0
    %v1222 = vadd.f32 0.0, %v1221
    %v1223 = vpop.f32.mrf.mxu0
    %v1224 = vadd.f32 0.0, %v1223
    %1225 = vmatprep.mubr.f32.mxu0 0.0
    %1226 = vmatmul.mubr.f32.gmra.mxu0 %v359
    %v1227 = vpop.f32.mrf.mxu0
    %v1228 = vadd.f32 0.0, %v1227
    %v1229 = vpop.f32.mrf.mxu0
    %v1230 = vadd.f32 0.0, %v1229
    %1231 = vmatprep.mubr.f32.mxu0 0.0
    %1232 = vmatmul.mubr.f32.gmra.mxu0 %v362
    %v1233 = vpop.f32.mrf.mxu0
    %v1234 = vadd.f32 0.0, %v1233
    %v1235 = vpop.f32.mrf.mxu0
    %v1236 = vadd.f32 0.0, %v1235
    %1237 = vmatprep.mubr.f32.mxu0 0.0
    %1238 = vmatmul.mubr.f32.gmra.mxu0 %v365
    %v1239 = vpop.f32.mrf.mxu0
    %v1240 = vadd.f32 0.0, %v1239
    %v1241 = vpop.f32.mrf.mxu0
    %v1242 = vadd.f32 0.0, %v1241
    %1243 = vmatprep.mubr.f32.mxu0 0.0
    %1244 = vmatmul.mubr.f32.gmra.mxu0 %v368
    %v1245 = vpop.f32.mrf.mxu0
    %v1246 = vadd.f32 0.0, %v1245
    %v1247 = vpop.f32.mrf.mxu0
    %v1248 = vadd.f32 0.0, %v1247
    %1249 = vmatprep.mubr.f32.mxu0 0.0
    %1250 = vmatmul.mubr.f32.gmra.mxu0 %v371
    %v1251 = vpop.f32.mrf.mxu0
    %v1252 = vadd.f32 0.0, %v1251
    %v1253 = vpop.f32.mrf.mxu0
    %v1254 = vadd.f32 0.0, %v1253
    %1255 = vmatprep.mubr.f32.mxu0 0.0
    %1256 = vmatmul.mubr.f32.gmra.mxu0 %v374
    %v1257 = vpop.f32.mrf.mxu0
    %v1258 = vadd.f32 0.0, %v1257
    %v1259 = vpop.f32.mrf.mxu0
    %v1260 = vadd.f32 0.0, %v1259
    %1261 = vmatprep.mubr.f32.mxu0 0.0
    %1262 = vmatmul.mubr.f32.gmra.mxu0 %v377
    %v1263 = vpop.f32.mrf.mxu0
    %v1264 = vadd.f32 0.0, %v1263
    %v1265 = vpop.f32.mrf.mxu0
    %v1266 = vadd.f32 0.0, %v1265
    %1267 = vmatprep.mubr.f32.mxu0 0.0
    %1268 = vmatmul.mubr.f32.gmra.mxu0 %v380
    %v1269 = vpop.f32.mrf.mxu0
    %v1270 = vadd.f32 0.0, %v1269
    %v1271 = vpop.f32.mrf.mxu0
    %v1272 = vadd.f32 0.0, %v1271
    %1273 = vmatprep.mubr.f32.mxu0 0.0
    %1274 = vmatmul.mubr.f32.gmra.mxu0 %v383
    %v1275 = vpop.f32.mrf.mxu0
    %v1276 = vadd.f32 0.0, %v1275
    %v1277 = vpop.f32.mrf.mxu0
    %v1278 = vadd.f32 0.0, %v1277
    %1279 = vmatprep.mubr.f32.mxu0 0.0
    %1280 = vmatmul.mubr.f32.gmra.mxu0 %v386
    %v1281 = vpop.f32.mrf.mxu0
    %v1282 = vadd.f32 0.0, %v1281
    %v1283 = vpop.f32.mrf.mxu0
    %v1284 = vadd.f32 0.0, %v1283
    %1285 = vdwg.mxu0
    %1286 = vmatprep.subr.mxu0 0.0
    %1287 = vmatpush1.msra.mxu0 0.0
    %1288 = vmatprep.subr.mxu0 0.0
    %1289 = vmatpush1.msra.mxu0 0.0
    %1290 = vmatprep.subr.mxu0 0.0
    %1291 = vmatpush1.msra.mxu0 0.0
    %1292 = vmatprep.subr.mxu0 0.0
    %1293 = vmatpush1.msra.mxu0 0.0
    %1294 = vmatprep.subr.mxu0 0.0
    %1295 = vmatpush1.msra.mxu0 0.0
    %1296 = vmatprep.subr.mxu0 0.0
    %1297 = vmatpush1.msra.mxu0 0.0
    %1298 = vmatprep.subr.mxu0 0.0
    %1299 = vmatpush1.msra.mxu0 0.0
    %1300 = vmatprep.subr.mxu0 0.0
    %1301 = vmatpush1.msra.mxu0 0.0
    %1302 = vmatprep.subr.mxu0 0.0
    %1303 = vmatpush1.msra.mxu0 0.0
    %1304 = vmatprep.subr.mxu0 0.0
    %1305 = vmatpush1.msra.mxu0 0.0
    %1306 = vmatprep.subr.mxu0 0.0
    %1307 = vmatpush1.msra.mxu0 0.0
    %1308 = vmatprep.subr.mxu0 0.0
    %1309 = vmatpush1.msra.mxu0 0.0
    %1310 = vmatprep.subr.mxu0 0.0
    %1311 = vmatpush1.msra.mxu0 0.0
    %1312 = vmatprep.subr.mxu0 0.0
    %1313 = vmatpush1.msra.mxu0 0.0
    %1314 = vmatprep.subr.mxu0 0.0
    %1315 = vmatpush1.msra.mxu0 0.0
    %1316 = vmatprep.subr.mxu0 %v64
    %1317 = vmatpush1.msra.mxu0 %v63
    %1318 = vmatprep.subr.mxu0 0.0
    %1319 = vmatpush2.msra.mxu0 0.0
    %1320 = vmatprep.subr.mxu0 0.0
    %1321 = vmatpush2.msra.mxu0 0.0
    %1322 = vmatprep.subr.mxu0 0.0
    %1323 = vmatpush2.msra.mxu0 0.0
    %1324 = vmatprep.subr.mxu0 0.0
    %1325 = vmatpush2.msra.mxu0 0.0
    %1326 = vmatprep.subr.mxu0 0.0
    %1327 = vmatpush2.msra.mxu0 0.0
    %1328 = vmatprep.subr.mxu0 0.0
    %1329 = vmatpush2.msra.mxu0 0.0
    %1330 = vmatprep.subr.mxu0 0.0
    %1331 = vmatpush2.msra.mxu0 0.0
    %1332 = vmatprep.subr.mxu0 0.0
    %1333 = vmatpush2.msra.mxu0 0.0
    %1334 = vmatprep.subr.mxu0 0.0
    %1335 = vmatpush2.msra.mxu0 0.0
    %1336 = vmatprep.subr.mxu0 0.0
    %1337 = vmatpush2.msra.mxu0 0.0
    %1338 = vmatprep.subr.mxu0 0.0
    %1339 = vmatpush2.msra.mxu0 0.0
    %1340 = vmatprep.subr.mxu0 0.0
    %1341 = vmatpush2.msra.mxu0 0.0
    %1342 = vmatprep.subr.mxu0 0.0
    %1343 = vmatpush2.msra.mxu0 0.0
    %1344 = vmatprep.subr.mxu0 0.0
    %1345 = vmatpush2.msra.mxu0 0.0
    %1346 = vmatprep.subr.mxu0 0.0
    %1347 = vmatpush2.msra.mxu0 0.0
    %1348 = vmatprep.subr.mxu0 0.0
    %1349 = vmatpush2.msra.mxu0 0.0
    %1350 = vmatprep.mubr.f32.mxu0 0.0
    %1351 = vmatmul.mubr.f32.gmra.mxu0 %v197
    %v1352 = vpop.f32.mrf.mxu0
    %v1353 = vadd.f32 0.0, %v1352
    %v1354 = vpop.f32.mrf.mxu0
    %v1355 = vadd.f32 0.0, %v1354
    %1356 = vmatprep.mubr.f32.mxu0 0.0
    %1357 = vmatmul.mubr.f32.gmra.mxu0 %v200
    %v1358 = vpop.f32.mrf.mxu0
    %v1359 = vadd.f32 0.0, %v1358
    %v1360 = vpop.f32.mrf.mxu0
    %v1361 = vadd.f32 0.0, %v1360
    %1362 = vmatprep.mubr.f32.mxu0 0.0
    %1363 = vmatmul.mubr.f32.gmra.mxu0 %v203
    %v1364 = vpop.f32.mrf.mxu0
    %v1365 = vadd.f32 0.0, %v1364
    %v1366 = vpop.f32.mrf.mxu0
    %v1367 = vadd.f32 0.0, %v1366
    %1368 = vmatprep.mubr.f32.mxu0 0.0
    %1369 = vmatmul.mubr.f32.gmra.mxu0 %v206
    %v1370 = vpop.f32.mrf.mxu0
    %v1371 = vadd.f32 0.0, %v1370
    %v1372 = vpop.f32.mrf.mxu0
    %v1373 = vadd.f32 0.0, %v1372
    %1374 = vmatprep.mubr.f32.mxu0 0.0
    %1375 = vmatmul.mubr.f32.gmra.mxu0 %v209
    %v1376 = vpop.f32.mrf.mxu0
    %v1377 = vadd.f32 0.0, %v1376
    %v1378 = vpop.f32.mrf.mxu0
    %v1379 = vadd.f32 0.0, %v1378
    %1380 = vmatprep.mubr.f32.mxu0 0.0
    %1381 = vmatmul.mubr.f32.gmra.mxu0 %v212
    %v1382 = vpop.f32.mrf.mxu0
    %v1383 = vadd.f32 0.0, %v1382
    %v1384 = vpop.f32.mrf.mxu0
    %v1385 = vadd.f32 0.0, %v1384
    %1386 = vmatprep.mubr.f32.mxu0 0.0
    %1387 = vmatmul.mubr.f32.gmra.mxu0 %v215
    %v1388 = vpop.f32.mrf.mxu0
    %v1389 = vadd.f32 0.0, %v1388
    %v1390 = vpop.f32.mrf.mxu0
    %v1391 = vadd.f32 0.0, %v1390
    %1392 = vmatprep.mubr.f32.mxu0 0.0
    %1393 = vmatmul.mubr.f32.gmra.mxu0 %v218
    %v1394 = vpop.f32.mrf.mxu0
    %v1395 = vadd.f32 0.0, %v1394
    %v1396 = vpop.f32.mrf.mxu0
    %v1397 = vadd.f32 0.0, %v1396
    %1398 = vmatprep.mubr.f32.mxu0 0.0
    %1399 = vmatmul.mubr.f32.gmra.mxu0 %v221
    %v1400 = vpop.f32.mrf.mxu0
    %v1401 = vadd.f32 0.0, %v1400
    %v1402 = vpop.f32.mrf.mxu0
    %v1403 = vadd.f32 0.0, %v1402
    %1404 = vmatprep.mubr.f32.mxu0 0.0
    %1405 = vmatmul.mubr.f32.gmra.mxu0 %v224
    %v1406 = vpop.f32.mrf.mxu0
    %v1407 = vadd.f32 0.0, %v1406
    %v1408 = vpop.f32.mrf.mxu0
    %v1409 = vadd.f32 0.0, %v1408
    %1410 = vmatprep.mubr.f32.mxu0 0.0
    %1411 = vmatmul.mubr.f32.gmra.mxu0 %v227
    %v1412 = vpop.f32.mrf.mxu0
    %v1413 = vadd.f32 0.0, %v1412
    %v1414 = vpop.f32.mrf.mxu0
    %v1415 = vadd.f32 0.0, %v1414
    %1416 = vmatprep.mubr.f32.mxu0 0.0
    %1417 = vmatmul.mubr.f32.gmra.mxu0 %v230
    %v1418 = vpop.f32.mrf.mxu0
    %v1419 = vadd.f32 0.0, %v1418
    %v1420 = vpop.f32.mrf.mxu0
    %v1421 = vadd.f32 0.0, %v1420
    %1422 = vmatprep.mubr.f32.mxu0 0.0
    %1423 = vmatmul.mubr.f32.gmra.mxu0 %v233
    %v1424 = vpop.f32.mrf.mxu0
    %v1425 = vadd.f32 0.0, %v1424
    %v1426 = vpop.f32.mrf.mxu0
    %v1427 = vadd.f32 0.0, %v1426
    %1428 = vmatprep.mubr.f32.mxu0 0.0
    %1429 = vmatmul.mubr.f32.gmra.mxu0 %v236
    %v1430 = vpop.f32.mrf.mxu0
    %v1431 = vadd.f32 0.0, %v1430
    %v1432 = vpop.f32.mrf.mxu0
    %v1433 = vadd.f32 0.0, %v1432
    %1434 = vmatprep.mubr.f32.mxu0 0.0
    %1435 = vmatmul.mubr.f32.gmra.mxu0 %v239
    %v1436 = vpop.f32.mrf.mxu0
    %v1437 = vadd.f32 0.0, %v1436
    %v1438 = vpop.f32.mrf.mxu0
    %v1439 = vadd.f32 0.0, %v1438
    %1440 = vmatprep.mubr.f32.mxu0 0.0
    %1441 = vmatmul.mubr.f32.gmra.mxu0 %v242
    %v1442 = vpop.f32.mrf.mxu0
    %v1443 = vadd.f32 0.0, %v1442
    %v1444 = vpop.f32.mrf.mxu0
    %v1445 = vadd.f32 0.0, %v1444
    %1446 = vmatprep.mubr.f32.mxu0 0.0
    %1447 = vmatmul.mubr.f32.gmra.mxu0 %v245
    %v1448 = vpop.f32.mrf.mxu0
    %v1449 = vadd.f32 0.0, %v1448
    %v1450 = vpop.f32.mrf.mxu0
    %v1451 = vadd.f32 0.0, %v1450
    %1452 = vmatprep.mubr.f32.mxu0 0.0
    %1453 = vmatmul.mubr.f32.gmra.mxu0 %v248
    %v1454 = vpop.f32.mrf.mxu0
    %v1455 = vadd.f32 0.0, %v1454
    %v1456 = vpop.f32.mrf.mxu0
    %v1457 = vadd.f32 0.0, %v1456
    %1458 = vmatprep.mubr.f32.mxu0 0.0
    %1459 = vmatmul.mubr.f32.gmra.mxu0 %v251
    %v1460 = vpop.f32.mrf.mxu0
    %v1461 = vadd.f32 0.0, %v1460
    %v1462 = vpop.f32.mrf.mxu0
    %v1463 = vadd.f32 0.0, %v1462
    %1464 = vmatprep.mubr.f32.mxu0 0.0
    %1465 = vmatmul.mubr.f32.gmra.mxu0 %v254
    %v1466 = vpop.f32.mrf.mxu0
    %v1467 = vadd.f32 0.0, %v1466
    %v1468 = vpop.f32.mrf.mxu0
    %v1469 = vadd.f32 0.0, %v1468
    %1470 = vmatprep.mubr.f32.mxu0 0.0
    %1471 = vmatmul.mubr.f32.gmra.mxu0 %v257
    %v1472 = vpop.f32.mrf.mxu0
    %v1473 = vadd.f32 0.0, %v1472
    %v1474 = vpop.f32.mrf.mxu0
    %v1475 = vadd.f32 0.0, %v1474
    %1476 = vmatprep.mubr.f32.mxu0 0.0
    %1477 = vmatmul.mubr.f32.gmra.mxu0 %v260
    %v1478 = vpop.f32.mrf.mxu0
    %v1479 = vadd.f32 0.0, %v1478
    %v1480 = vpop.f32.mrf.mxu0
    %v1481 = vadd.f32 0.0, %v1480
    %1482 = vmatprep.mubr.f32.mxu0 0.0
    %1483 = vmatmul.mubr.f32.gmra.mxu0 %v263
    %v1484 = vpop.f32.mrf.mxu0
    %v1485 = vadd.f32 0.0, %v1484
    %v1486 = vpop.f32.mrf.mxu0
    %v1487 = vadd.f32 0.0, %v1486
    %1488 = vmatprep.mubr.f32.mxu0 0.0
    %1489 = vmatmul.mubr.f32.gmra.mxu0 %v266
    %v1490 = vpop.f32.mrf.mxu0
    %v1491 = vadd.f32 0.0, %v1490
    %v1492 = vpop.f32.mrf.mxu0
    %v1493 = vadd.f32 0.0, %v1492
    %1494 = vmatprep.mubr.f32.mxu0 0.0
    %1495 = vmatmul.mubr.f32.gmra.mxu0 %v269
    %v1496 = vpop.f32.mrf.mxu0
    %v1497 = vadd.f32 0.0, %v1496
    %v1498 = vpop.f32.mrf.mxu0
    %v1499 = vadd.f32 0.0, %v1498
    %1500 = vmatprep.mubr.f32.mxu0 0.0
    %1501 = vmatmul.mubr.f32.gmra.mxu0 %v272
    %v1502 = vpop.f32.mrf.mxu0
    %v1503 = vadd.f32 0.0, %v1502
    %v1504 = vpop.f32.mrf.mxu0
    %v1505 = vadd.f32 0.0, %v1504
    %1506 = vmatprep.mubr.f32.mxu0 0.0
    %1507 = vmatmul.mubr.f32.gmra.mxu0 %v275
    %v1508 = vpop.f32.mrf.mxu0
    %v1509 = vadd.f32 0.0, %v1508
    %v1510 = vpop.f32.mrf.mxu0
    %v1511 = vadd.f32 0.0, %v1510
    %1512 = vmatprep.mubr.f32.mxu0 0.0
    %1513 = vmatmul.mubr.f32.gmra.mxu0 %v278
    %v1514 = vpop.f32.mrf.mxu0
    %v1515 = vadd.f32 0.0, %v1514
    %v1516 = vpop.f32.mrf.mxu0
    %v1517 = vadd.f32 0.0, %v1516
    %1518 = vmatprep.mubr.f32.mxu0 0.0
    %1519 = vmatmul.mubr.f32.gmra.mxu0 %v281
    %v1520 = vpop.f32.mrf.mxu0
    %v1521 = vadd.f32 0.0, %v1520
    %v1522 = vpop.f32.mrf.mxu0
    %v1523 = vadd.f32 0.0, %v1522
    %1524 = vmatprep.mubr.f32.mxu0 0.0
    %1525 = vmatmul.mubr.f32.gmra.mxu0 %v284
    %v1526 = vpop.f32.mrf.mxu0
    %v1527 = vadd.f32 0.0, %v1526
    %v1528 = vpop.f32.mrf.mxu0
    %v1529 = vadd.f32 0.0, %v1528
    %1530 = vmatprep.mubr.f32.mxu0 0.0
    %1531 = vmatmul.mubr.f32.gmra.mxu0 %v287
    %v1532 = vpop.f32.mrf.mxu0
    %v1533 = vadd.f32 0.0, %v1532
    %v1534 = vpop.f32.mrf.mxu0
    %v1535 = vadd.f32 0.0, %v1534
    %1536 = vmatprep.mubr.f32.mxu0 0.0
    %1537 = vmatmul.mubr.f32.gmra.mxu0 %v290
    %v1538 = vpop.f32.mrf.mxu0
    %v1539 = vadd.f32 0.0, %v1538
    %v1540 = vpop.f32.mrf.mxu0
    %v1541 = vadd.f32 0.0, %v1540
    %1542 = vmatprep.mubr.f32.mxu0 0.0
    %1543 = vmatmul.mubr.f32.gmra.mxu0 %v293
    %v1544 = vpop.f32.mrf.mxu0
    %v1545 = vadd.f32 0.0, %v1544
    %v1546 = vpop.f32.mrf.mxu0
    %v1547 = vadd.f32 0.0, %v1546
    %1548 = vmatprep.mubr.f32.mxu0 0.0
    %1549 = vmatmul.mubr.f32.gmra.mxu0 %v296
    %v1550 = vpop.f32.mrf.mxu0
    %v1551 = vadd.f32 0.0, %v1550
    %v1552 = vpop.f32.mrf.mxu0
    %v1553 = vadd.f32 0.0, %v1552
    %1554 = vmatprep.mubr.f32.mxu0 0.0
    %1555 = vmatmul.mubr.f32.gmra.mxu0 %v299
    %v1556 = vpop.f32.mrf.mxu0
    %v1557 = vadd.f32 0.0, %v1556
    %v1558 = vpop.f32.mrf.mxu0
    %v1559 = vadd.f32 0.0, %v1558
    %1560 = vmatprep.mubr.f32.mxu0 0.0
    %1561 = vmatmul.mubr.f32.gmra.mxu0 %v302
    %v1562 = vpop.f32.mrf.mxu0
    %v1563 = vadd.f32 0.0, %v1562
    %v1564 = vpop.f32.mrf.mxu0
    %v1565 = vadd.f32 0.0, %v1564
    %1566 = vmatprep.mubr.f32.mxu0 0.0
    %1567 = vmatmul.mubr.f32.gmra.mxu0 %v305
    %v1568 = vpop.f32.mrf.mxu0
    %v1569 = vadd.f32 0.0, %v1568
    %v1570 = vpop.f32.mrf.mxu0
    %v1571 = vadd.f32 0.0, %v1570
    %1572 = vmatprep.mubr.f32.mxu0 0.0
    %1573 = vmatmul.mubr.f32.gmra.mxu0 %v308
    %v1574 = vpop.f32.mrf.mxu0
    %v1575 = vadd.f32 0.0, %v1574
    %v1576 = vpop.f32.mrf.mxu0
    %v1577 = vadd.f32 0.0, %v1576
    %1578 = vmatprep.mubr.f32.mxu0 0.0
    %1579 = vmatmul.mubr.f32.gmra.mxu0 %v311
    %v1580 = vpop.f32.mrf.mxu0
    %v1581 = vadd.f32 0.0, %v1580
    %v1582 = vpop.f32.mrf.mxu0
    %v1583 = vadd.f32 0.0, %v1582
    %1584 = vmatprep.mubr.f32.mxu0 0.0
    %1585 = vmatmul.mubr.f32.gmra.mxu0 %v314
    %v1586 = vpop.f32.mrf.mxu0
    %v1587 = vadd.f32 0.0, %v1586
    %v1588 = vpop.f32.mrf.mxu0
    %v1589 = vadd.f32 0.0, %v1588
    %1590 = vmatprep.mubr.f32.mxu0 0.0
    %1591 = vmatmul.mubr.f32.gmra.mxu0 %v317
    %v1592 = vpop.f32.mrf.mxu0
    %v1593 = vadd.f32 0.0, %v1592
    %v1594 = vpop.f32.mrf.mxu0
    %v1595 = vadd.f32 0.0, %v1594
    %1596 = vmatprep.mubr.f32.mxu0 0.0
    %1597 = vmatmul.mubr.f32.gmra.mxu0 %v320
    %v1598 = vpop.f32.mrf.mxu0
    %v1599 = vadd.f32 0.0, %v1598
    %v1600 = vpop.f32.mrf.mxu0
    %v1601 = vadd.f32 0.0, %v1600
    %1602 = vmatprep.mubr.f32.mxu0 0.0
    %1603 = vmatmul.mubr.f32.gmra.mxu0 %v323
    %v1604 = vpop.f32.mrf.mxu0
    %v1605 = vadd.f32 0.0, %v1604
    %v1606 = vpop.f32.mrf.mxu0
    %v1607 = vadd.f32 0.0, %v1606
    %1608 = vmatprep.mubr.f32.mxu0 0.0
    %1609 = vmatmul.mubr.f32.gmra.mxu0 %v326
    %v1610 = vpop.f32.mrf.mxu0
    %v1611 = vadd.f32 0.0, %v1610
    %v1612 = vpop.f32.mrf.mxu0
    %v1613 = vadd.f32 0.0, %v1612
    %1614 = vmatprep.mubr.f32.mxu0 0.0
    %1615 = vmatmul.mubr.f32.gmra.mxu0 %v329
    %v1616 = vpop.f32.mrf.mxu0
    %v1617 = vadd.f32 0.0, %v1616
    %v1618 = vpop.f32.mrf.mxu0
    %v1619 = vadd.f32 0.0, %v1618
    %1620 = vmatprep.mubr.f32.mxu0 0.0
    %1621 = vmatmul.mubr.f32.gmra.mxu0 %v332
    %v1622 = vpop.f32.mrf.mxu0
    %v1623 = vadd.f32 0.0, %v1622
    %v1624 = vpop.f32.mrf.mxu0
    %v1625 = vadd.f32 0.0, %v1624
    %1626 = vmatprep.mubr.f32.mxu0 0.0
    %1627 = vmatmul.mubr.f32.gmra.mxu0 %v335
    %v1628 = vpop.f32.mrf.mxu0
    %v1629 = vadd.f32 0.0, %v1628
    %v1630 = vpop.f32.mrf.mxu0
    %v1631 = vadd.f32 0.0, %v1630
    %1632 = vmatprep.mubr.f32.mxu0 0.0
    %1633 = vmatmul.mubr.f32.gmra.mxu0 %v338
    %v1634 = vpop.f32.mrf.mxu0
    %v1635 = vadd.f32 0.0, %v1634
    %v1636 = vpop.f32.mrf.mxu0
    %v1637 = vadd.f32 0.0, %v1636
    %1638 = vmatprep.mubr.f32.mxu0 0.0
    %1639 = vmatmul.mubr.f32.gmra.mxu0 %v341
    %v1640 = vpop.f32.mrf.mxu0
    %v1641 = vadd.f32 0.0, %v1640
    %v1642 = vpop.f32.mrf.mxu0
    %v1643 = vadd.f32 0.0, %v1642
    %1644 = vmatprep.mubr.f32.mxu0 0.0
    %1645 = vmatmul.mubr.f32.gmra.mxu0 %v344
    %v1646 = vpop.f32.mrf.mxu0
    %v1647 = vadd.f32 0.0, %v1646
    %v1648 = vpop.f32.mrf.mxu0
    %v1649 = vadd.f32 0.0, %v1648
    %1650 = vmatprep.mubr.f32.mxu0 0.0
    %1651 = vmatmul.mubr.f32.gmra.mxu0 %v347
    %v1652 = vpop.f32.mrf.mxu0
    %v1653 = vadd.f32 0.0, %v1652
    %v1654 = vpop.f32.mrf.mxu0
    %v1655 = vadd.f32 0.0, %v1654
    %1656 = vmatprep.mubr.f32.mxu0 0.0
    %1657 = vmatmul.mubr.f32.gmra.mxu0 %v350
    %v1658 = vpop.f32.mrf.mxu0
    %v1659 = vadd.f32 0.0, %v1658
    %v1660 = vpop.f32.mrf.mxu0
    %v1661 = vadd.f32 0.0, %v1660
    %1662 = vmatprep.mubr.f32.mxu0 0.0
    %1663 = vmatmul.mubr.f32.gmra.mxu0 %v353
    %v1664 = vpop.f32.mrf.mxu0
    %v1665 = vadd.f32 0.0, %v1664
    %v1666 = vpop.f32.mrf.mxu0
    %v1667 = vadd.f32 0.0, %v1666
    %1668 = vmatprep.mubr.f32.mxu0 0.0
    %1669 = vmatmul.mubr.f32.gmra.mxu0 %v356
    %v1670 = vpop.f32.mrf.mxu0
    %v1671 = vadd.f32 0.0, %v1670
    %v1672 = vpop.f32.mrf.mxu0
    %v1673 = vadd.f32 0.0, %v1672
    %1674 = vmatprep.mubr.f32.mxu0 0.0
    %1675 = vmatmul.mubr.f32.gmra.mxu0 %v359
    %v1676 = vpop.f32.mrf.mxu0
    %v1677 = vadd.f32 0.0, %v1676
    %v1678 = vpop.f32.mrf.mxu0
    %v1679 = vadd.f32 0.0, %v1678
    %1680 = vmatprep.mubr.f32.mxu0 0.0
    %1681 = vmatmul.mubr.f32.gmra.mxu0 %v362
    %v1682 = vpop.f32.mrf.mxu0
    %v1683 = vadd.f32 0.0, %v1682
    %v1684 = vpop.f32.mrf.mxu0
    %v1685 = vadd.f32 0.0, %v1684
    %1686 = vmatprep.mubr.f32.mxu0 0.0
    %1687 = vmatmul.mubr.f32.gmra.mxu0 %v365
    %v1688 = vpop.f32.mrf.mxu0
    %v1689 = vadd.f32 0.0, %v1688
    %v1690 = vpop.f32.mrf.mxu0
    %v1691 = vadd.f32 0.0, %v1690
    %1692 = vmatprep.mubr.f32.mxu0 0.0
    %1693 = vmatmul.mubr.f32.gmra.mxu0 %v368
    %v1694 = vpop.f32.mrf.mxu0
    %v1695 = vadd.f32 0.0, %v1694
    %v1696 = vpop.f32.mrf.mxu0
    %v1697 = vadd.f32 0.0, %v1696
    %1698 = vmatprep.mubr.f32.mxu0 0.0
    %1699 = vmatmul.mubr.f32.gmra.mxu0 %v371
    %v1700 = vpop.f32.mrf.mxu0
    %v1701 = vadd.f32 0.0, %v1700
    %v1702 = vpop.f32.mrf.mxu0
    %v1703 = vadd.f32 0.0, %v1702
    %1704 = vmatprep.mubr.f32.mxu0 0.0
    %1705 = vmatmul.mubr.f32.gmra.mxu0 %v374
    %v1706 = vpop.f32.mrf.mxu0
    %v1707 = vadd.f32 0.0, %v1706
    %v1708 = vpop.f32.mrf.mxu0
    %v1709 = vadd.f32 0.0, %v1708
    %1710 = vmatprep.mubr.f32.mxu0 0.0
    %1711 = vmatmul.mubr.f32.gmra.mxu0 %v377
    %v1712 = vpop.f32.mrf.mxu0
    %v1713 = vadd.f32 0.0, %v1712
    %v1714 = vpop.f32.mrf.mxu0
    %v1715 = vadd.f32 0.0, %v1714
    %1716 = vmatprep.mubr.f32.mxu0 0.0
    %1717 = vmatmul.mubr.f32.gmra.mxu0 %v380
    %v1718 = vpop.f32.mrf.mxu0
    %v1719 = vadd.f32 0.0, %v1718
    %v1720 = vpop.f32.mrf.mxu0
    %v1721 = vadd.f32 0.0, %v1720
    %1722 = vmatprep.mubr.f32.mxu0 0.0
    %1723 = vmatmul.mubr.f32.gmra.mxu0 %v383
    %v1724 = vpop.f32.mrf.mxu0
    %v1725 = vadd.f32 0.0, %v1724
    %v1726 = vpop.f32.mrf.mxu0
    %v1727 = vadd.f32 0.0, %v1726
    %1728 = vmatprep.mubr.f32.mxu0 0.0
    %1729 = vmatmul.mubr.f32.gmra.mxu0 %v386
    %v1730 = vpop.f32.mrf.mxu0
    %v1731 = vadd.f32 0.0, %v1730
    %v1732 = vpop.f32.mrf.mxu0
    %v1733 = vadd.f32 0.0, %v1732
    %1734 = vdwg.mxu0
    %1735 = vmatprep.subr.mxu0 0.0
    %1736 = vmatpush1.msra.mxu0 0.0
    %1737 = vmatprep.subr.mxu0 0.0
    %1738 = vmatpush1.msra.mxu0 0.0
    %1739 = vmatprep.subr.mxu0 0.0
    %1740 = vmatpush1.msra.mxu0 0.0
    %1741 = vmatprep.subr.mxu0 0.0
    %1742 = vmatpush1.msra.mxu0 0.0
    %1743 = vmatprep.subr.mxu0 0.0
    %1744 = vmatpush1.msra.mxu0 0.0
    %1745 = vmatprep.subr.mxu0 0.0
    %1746 = vmatpush1.msra.mxu0 0.0
    %1747 = vmatprep.subr.mxu0 0.0
    %1748 = vmatpush1.msra.mxu0 0.0
    %1749 = vmatprep.subr.mxu0 0.0
    %1750 = vmatpush1.msra.mxu0 0.0
    %1751 = vmatprep.subr.mxu0 0.0
    %1752 = vmatpush1.msra.mxu0 0.0
    %1753 = vmatprep.subr.mxu0 0.0
    %1754 = vmatpush1.msra.mxu0 0.0
    %1755 = vmatprep.subr.mxu0 0.0
    %1756 = vmatpush1.msra.mxu0 0.0
    %1757 = vmatprep.subr.mxu0 0.0
    %1758 = vmatpush1.msra.mxu0 0.0
    %1759 = vmatprep.subr.mxu0 0.0
    %1760 = vmatpush1.msra.mxu0 0.0
    %1761 = vmatprep.subr.mxu0 0.0
    %1762 = vmatpush1.msra.mxu0 0.0
    %1763 = vmatprep.subr.mxu0 0.0
    %1764 = vmatpush1.msra.mxu0 0.0
    %1765 = vmatprep.subr.mxu0 %v66
    %1766 = vmatpush1.msra.mxu0 %v65
    %1767 = vmatprep.subr.mxu0 0.0
    %1768 = vmatpush2.msra.mxu0 0.0
    %1769 = vmatprep.subr.mxu0 0.0
    %1770 = vmatpush2.msra.mxu0 0.0
    %1771 = vmatprep.subr.mxu0 0.0
    %1772 = vmatpush2.msra.mxu0 0.0
    %1773 = vmatprep.subr.mxu0 0.0
    %1774 = vmatpush2.msra.mxu0 0.0
    %1775 = vmatprep.subr.mxu0 0.0
    %1776 = vmatpush2.msra.mxu0 0.0
    %1777 = vmatprep.subr.mxu0 0.0
    %1778 = vmatpush2.msra.mxu0 0.0
    %1779 = vmatprep.subr.mxu0 0.0
    %1780 = vmatpush2.msra.mxu0 0.0
    %1781 = vmatprep.subr.mxu0 0.0
    %1782 = vmatpush2.msra.mxu0 0.0
    %1783 = vmatprep.subr.mxu0 0.0
    %1784 = vmatpush2.msra.mxu0 0.0
    %1785 = vmatprep.subr.mxu0 0.0
    %1786 = vmatpush2.msra.mxu0 0.0
    %1787 = vmatprep.subr.mxu0 0.0
    %1788 = vmatpush2.msra.mxu0 0.0
    %1789 = vmatprep.subr.mxu0 0.0
    %1790 = vmatpush2.msra.mxu0 0.0
    %1791 = vmatprep.subr.mxu0 0.0
    %1792 = vmatpush2.msra.mxu0 0.0
    %1793 = vmatprep.subr.mxu0 0.0
    %1794 = vmatpush2.msra.mxu0 0.0
    %1795 = vmatprep.subr.mxu0 0.0
    %1796 = vmatpush2.msra.mxu0 0.0
    %1797 = vmatprep.subr.mxu0 0.0
    %1798 = vmatpush2.msra.mxu0 0.0
    %1799 = vmatprep.mubr.f32.mxu0 0.0
    %1800 = vmatmul.mubr.f32.gmra.mxu0 %v197
    %v1801 = vpop.f32.mrf.mxu0
    %v1802 = vadd.f32 0.0, %v1801
    %v1803 = vpop.f32.mrf.mxu0
    %v1804 = vadd.f32 0.0, %v1803
    %1805 = vmatprep.mubr.f32.mxu0 0.0
    %1806 = vmatmul.mubr.f32.gmra.mxu0 %v200
    %v1807 = vpop.f32.mrf.mxu0
    %v1808 = vadd.f32 0.0, %v1807
    %v1809 = vpop.f32.mrf.mxu0
    %v1810 = vadd.f32 0.0, %v1809
    %1811 = vmatprep.mubr.f32.mxu0 0.0
    %1812 = vmatmul.mubr.f32.gmra.mxu0 %v203
    %v1813 = vpop.f32.mrf.mxu0
    %v1814 = vadd.f32 0.0, %v1813
    %v1815 = vpop.f32.mrf.mxu0
    %v1816 = vadd.f32 0.0, %v1815
    %1817 = vmatprep.mubr.f32.mxu0 0.0
    %1818 = vmatmul.mubr.f32.gmra.mxu0 %v206
    %v1819 = vpop.f32.mrf.mxu0
    %v1820 = vadd.f32 0.0, %v1819
    %v1821 = vpop.f32.mrf.mxu0
    %v1822 = vadd.f32 0.0, %v1821
    %1823 = vmatprep.mubr.f32.mxu0 0.0
    %1824 = vmatmul.mubr.f32.gmra.mxu0 %v209
    %v1825 = vpop.f32.mrf.mxu0
    %v1826 = vadd.f32 0.0, %v1825
    %v1827 = vpop.f32.mrf.mxu0
    %v1828 = vadd.f32 0.0, %v1827
    %1829 = vmatprep.mubr.f32.mxu0 0.0
    %1830 = vmatmul.mubr.f32.gmra.mxu0 %v212
    %v1831 = vpop.f32.mrf.mxu0
    %v1832 = vadd.f32 0.0, %v1831
    %v1833 = vpop.f32.mrf.mxu0
    %v1834 = vadd.f32 0.0, %v1833
    %1835 = vmatprep.mubr.f32.mxu0 0.0
    %1836 = vmatmul.mubr.f32.gmra.mxu0 %v215
    %v1837 = vpop.f32.mrf.mxu0
    %v1838 = vadd.f32 0.0, %v1837
    %v1839 = vpop.f32.mrf.mxu0
    %v1840 = vadd.f32 0.0, %v1839
    %1841 = vmatprep.mubr.f32.mxu0 0.0
    %1842 = vmatmul.mubr.f32.gmra.mxu0 %v218
    %v1843 = vpop.f32.mrf.mxu0
    %v1844 = vadd.f32 0.0, %v1843
    %v1845 = vpop.f32.mrf.mxu0
    %v1846 = vadd.f32 0.0, %v1845
    %1847 = vmatprep.mubr.f32.mxu0 0.0
    %1848 = vmatmul.mubr.f32.gmra.mxu0 %v221
    %v1849 = vpop.f32.mrf.mxu0
    %v1850 = vadd.f32 0.0, %v1849
    %v1851 = vpop.f32.mrf.mxu0
    %v1852 = vadd.f32 0.0, %v1851
    %1853 = vmatprep.mubr.f32.mxu0 0.0
    %1854 = vmatmul.mubr.f32.gmra.mxu0 %v224
    %v1855 = vpop.f32.mrf.mxu0
    %v1856 = vadd.f32 0.0, %v1855
    %v1857 = vpop.f32.mrf.mxu0
    %v1858 = vadd.f32 0.0, %v1857
    %1859 = vmatprep.mubr.f32.mxu0 0.0
    %1860 = vmatmul.mubr.f32.gmra.mxu0 %v227
    %v1861 = vpop.f32.mrf.mxu0
    %v1862 = vadd.f32 0.0, %v1861
    %v1863 = vpop.f32.mrf.mxu0
    %v1864 = vadd.f32 0.0, %v1863
    %1865 = vmatprep.mubr.f32.mxu0 0.0
    %1866 = vmatmul.mubr.f32.gmra.mxu0 %v230
    %v1867 = vpop.f32.mrf.mxu0
    %v1868 = vadd.f32 0.0, %v1867
    %v1869 = vpop.f32.mrf.mxu0
    %v1870 = vadd.f32 0.0, %v1869
    %1871 = vmatprep.mubr.f32.mxu0 0.0
    %1872 = vmatmul.mubr.f32.gmra.mxu0 %v233
    %v1873 = vpop.f32.mrf.mxu0
    %v1874 = vadd.f32 0.0, %v1873
    %v1875 = vpop.f32.mrf.mxu0
    %v1876 = vadd.f32 0.0, %v1875
    %1877 = vmatprep.mubr.f32.mxu0 0.0
    %1878 = vmatmul.mubr.f32.gmra.mxu0 %v236
    %v1879 = vpop.f32.mrf.mxu0
    %v1880 = vadd.f32 0.0, %v1879
    %v1881 = vpop.f32.mrf.mxu0
    %v1882 = vadd.f32 0.0, %v1881
    %1883 = vmatprep.mubr.f32.mxu0 0.0
    %1884 = vmatmul.mubr.f32.gmra.mxu0 %v239
    %v1885 = vpop.f32.mrf.mxu0
    %v1886 = vadd.f32 0.0, %v1885
    %v1887 = vpop.f32.mrf.mxu0
    %v1888 = vadd.f32 0.0, %v1887
    %1889 = vmatprep.mubr.f32.mxu0 0.0
    %1890 = vmatmul.mubr.f32.gmra.mxu0 %v242
    %v1891 = vpop.f32.mrf.mxu0
    %v1892 = vadd.f32 0.0, %v1891
    %v1893 = vpop.f32.mrf.mxu0
    %v1894 = vadd.f32 0.0, %v1893
    %1895 = vmatprep.mubr.f32.mxu0 0.0
    %1896 = vmatmul.mubr.f32.gmra.mxu0 %v245
    %v1897 = vpop.f32.mrf.mxu0
    %v1898 = vadd.f32 0.0, %v1897
    %v1899 = vpop.f32.mrf.mxu0
    %v1900 = vadd.f32 0.0, %v1899
    %1901 = vmatprep.mubr.f32.mxu0 0.0
    %1902 = vmatmul.mubr.f32.gmra.mxu0 %v248
    %v1903 = vpop.f32.mrf.mxu0
    %v1904 = vadd.f32 0.0, %v1903
    %v1905 = vpop.f32.mrf.mxu0
    %v1906 = vadd.f32 0.0, %v1905
    %1907 = vmatprep.mubr.f32.mxu0 0.0
    %1908 = vmatmul.mubr.f32.gmra.mxu0 %v251
    %v1909 = vpop.f32.mrf.mxu0
    %v1910 = vadd.f32 0.0, %v1909
    %v1911 = vpop.f32.mrf.mxu0
    %v1912 = vadd.f32 0.0, %v1911
    %1913 = vmatprep.mubr.f32.mxu0 0.0
    %1914 = vmatmul.mubr.f32.gmra.mxu0 %v254
    %v1915 = vpop.f32.mrf.mxu0
    %v1916 = vadd.f32 0.0, %v1915
    %v1917 = vpop.f32.mrf.mxu0
    %v1918 = vadd.f32 0.0, %v1917
    %1919 = vmatprep.mubr.f32.mxu0 0.0
    %1920 = vmatmul.mubr.f32.gmra.mxu0 %v257
    %v1921 = vpop.f32.mrf.mxu0
    %v1922 = vadd.f32 0.0, %v1921
    %v1923 = vpop.f32.mrf.mxu0
    %v1924 = vadd.f32 0.0, %v1923
    %1925 = vmatprep.mubr.f32.mxu0 0.0
    %1926 = vmatmul.mubr.f32.gmra.mxu0 %v260
    %v1927 = vpop.f32.mrf.mxu0
    %v1928 = vadd.f32 0.0, %v1927
    %v1929 = vpop.f32.mrf.mxu0
    %v1930 = vadd.f32 0.0, %v1929
    %1931 = vmatprep.mubr.f32.mxu0 0.0
    %1932 = vmatmul.mubr.f32.gmra.mxu0 %v263
    %v1933 = vpop.f32.mrf.mxu0
    %v1934 = vadd.f32 0.0, %v1933
    %v1935 = vpop.f32.mrf.mxu0
    %v1936 = vadd.f32 0.0, %v1935
    %1937 = vmatprep.mubr.f32.mxu0 0.0
    %1938 = vmatmul.mubr.f32.gmra.mxu0 %v266
    %v1939 = vpop.f32.mrf.mxu0
    %v1940 = vadd.f32 0.0, %v1939
    %v1941 = vpop.f32.mrf.mxu0
    %v1942 = vadd.f32 0.0, %v1941
    %1943 = vmatprep.mubr.f32.mxu0 0.0
    %1944 = vmatmul.mubr.f32.gmra.mxu0 %v269
    %v1945 = vpop.f32.mrf.mxu0
    %v1946 = vadd.f32 0.0, %v1945
    %v1947 = vpop.f32.mrf.mxu0
    %v1948 = vadd.f32 0.0, %v1947
    %1949 = vmatprep.mubr.f32.mxu0 0.0
    %1950 = vmatmul.mubr.f32.gmra.mxu0 %v272
    %v1951 = vpop.f32.mrf.mxu0
    %v1952 = vadd.f32 0.0, %v1951
    %v1953 = vpop.f32.mrf.mxu0
    %v1954 = vadd.f32 0.0, %v1953
    %1955 = vmatprep.mubr.f32.mxu0 0.0
    %1956 = vmatmul.mubr.f32.gmra.mxu0 %v275
    %v1957 = vpop.f32.mrf.mxu0
    %v1958 = vadd.f32 0.0, %v1957
    %v1959 = vpop.f32.mrf.mxu0
    %v1960 = vadd.f32 0.0, %v1959
    %1961 = vmatprep.mubr.f32.mxu0 0.0
    %1962 = vmatmul.mubr.f32.gmra.mxu0 %v278
    %v1963 = vpop.f32.mrf.mxu0
    %v1964 = vadd.f32 0.0, %v1963
    %v1965 = vpop.f32.mrf.mxu0
    %v1966 = vadd.f32 0.0, %v1965
    %1967 = vmatprep.mubr.f32.mxu0 0.0
    %1968 = vmatmul.mubr.f32.gmra.mxu0 %v281
    %v1969 = vpop.f32.mrf.mxu0
    %v1970 = vadd.f32 0.0, %v1969
    %v1971 = vpop.f32.mrf.mxu0
    %v1972 = vadd.f32 0.0, %v1971
    %1973 = vmatprep.mubr.f32.mxu0 0.0
    %1974 = vmatmul.mubr.f32.gmra.mxu0 %v284
    %v1975 = vpop.f32.mrf.mxu0
    %v1976 = vadd.f32 0.0, %v1975
    %v1977 = vpop.f32.mrf.mxu0
    %v1978 = vadd.f32 0.0, %v1977
    %1979 = vmatprep.mubr.f32.mxu0 0.0
    %1980 = vmatmul.mubr.f32.gmra.mxu0 %v287
    %v1981 = vpop.f32.mrf.mxu0
    %v1982 = vadd.f32 0.0, %v1981
    %v1983 = vpop.f32.mrf.mxu0
    %v1984 = vadd.f32 0.0, %v1983
    %1985 = vmatprep.mubr.f32.mxu0 0.0
    %1986 = vmatmul.mubr.f32.gmra.mxu0 %v290
    %v1987 = vpop.f32.mrf.mxu0
    %v1988 = vadd.f32 0.0, %v1987
    %v1989 = vpop.f32.mrf.mxu0
    %v1990 = vadd.f32 0.0, %v1989
    %1991 = vmatprep.mubr.f32.mxu0 0.0
    %1992 = vmatmul.mubr.f32.gmra.mxu0 %v293
    %v1993 = vpop.f32.mrf.mxu0
    %v1994 = vadd.f32 0.0, %v1993
    %v1995 = vpop.f32.mrf.mxu0
    %v1996 = vadd.f32 0.0, %v1995
    %1997 = vmatprep.mubr.f32.mxu0 0.0
    %1998 = vmatmul.mubr.f32.gmra.mxu0 %v296
    %v1999 = vpop.f32.mrf.mxu0
    %v2000 = vadd.f32 0.0, %v1999
    %v2001 = vpop.f32.mrf.mxu0
    %v2002 = vadd.f32 0.0, %v2001
    %2003 = vmatprep.mubr.f32.mxu0 0.0
    %2004 = vmatmul.mubr.f32.gmra.mxu0 %v299
    %v2005 = vpop.f32.mrf.mxu0
    %v2006 = vadd.f32 0.0, %v2005
    %v2007 = vpop.f32.mrf.mxu0
    %v2008 = vadd.f32 0.0, %v2007
    %2009 = vmatprep.mubr.f32.mxu0 0.0
    %2010 = vmatmul.mubr.f32.gmra.mxu0 %v302
    %v2011 = vpop.f32.mrf.mxu0
    %v2012 = vadd.f32 0.0, %v2011
    %v2013 = vpop.f32.mrf.mxu0
    %v2014 = vadd.f32 0.0, %v2013
    %2015 = vmatprep.mubr.f32.mxu0 0.0
    %2016 = vmatmul.mubr.f32.gmra.mxu0 %v305
    %v2017 = vpop.f32.mrf.mxu0
    %v2018 = vadd.f32 0.0, %v2017
    %v2019 = vpop.f32.mrf.mxu0
    %v2020 = vadd.f32 0.0, %v2019
    %2021 = vmatprep.mubr.f32.mxu0 0.0
    %2022 = vmatmul.mubr.f32.gmra.mxu0 %v308
    %v2023 = vpop.f32.mrf.mxu0
    %v2024 = vadd.f32 0.0, %v2023
    %v2025 = vpop.f32.mrf.mxu0
    %v2026 = vadd.f32 0.0, %v2025
    %2027 = vmatprep.mubr.f32.mxu0 0.0
    %2028 = vmatmul.mubr.f32.gmra.mxu0 %v311
    %v2029 = vpop.f32.mrf.mxu0
    %v2030 = vadd.f32 0.0, %v2029
    %v2031 = vpop.f32.mrf.mxu0
    %v2032 = vadd.f32 0.0, %v2031
    %2033 = vmatprep.mubr.f32.mxu0 0.0
    %2034 = vmatmul.mubr.f32.gmra.mxu0 %v314
    %v2035 = vpop.f32.mrf.mxu0
    %v2036 = vadd.f32 0.0, %v2035
    %v2037 = vpop.f32.mrf.mxu0
    %v2038 = vadd.f32 0.0, %v2037
    %2039 = vmatprep.mubr.f32.mxu0 0.0
    %2040 = vmatmul.mubr.f32.gmra.mxu0 %v317
    %v2041 = vpop.f32.mrf.mxu0
    %v2042 = vadd.f32 0.0, %v2041
    %v2043 = vpop.f32.mrf.mxu0
    %v2044 = vadd.f32 0.0, %v2043
    %2045 = vmatprep.mubr.f32.mxu0 0.0
    %2046 = vmatmul.mubr.f32.gmra.mxu0 %v320
    %v2047 = vpop.f32.mrf.mxu0
    %v2048 = vadd.f32 0.0, %v2047
    %v2049 = vpop.f32.mrf.mxu0
    %v2050 = vadd.f32 0.0, %v2049
    %2051 = vmatprep.mubr.f32.mxu0 0.0
    %2052 = vmatmul.mubr.f32.gmra.mxu0 %v323
    %v2053 = vpop.f32.mrf.mxu0
    %v2054 = vadd.f32 0.0, %v2053
    %v2055 = vpop.f32.mrf.mxu0
    %v2056 = vadd.f32 0.0, %v2055
    %2057 = vmatprep.mubr.f32.mxu0 0.0
    %2058 = vmatmul.mubr.f32.gmra.mxu0 %v326
    %v2059 = vpop.f32.mrf.mxu0
    %v2060 = vadd.f32 0.0, %v2059
    %v2061 = vpop.f32.mrf.mxu0
    %v2062 = vadd.f32 0.0, %v2061
    %2063 = vmatprep.mubr.f32.mxu0 0.0
    %2064 = vmatmul.mubr.f32.gmra.mxu0 %v329
    %v2065 = vpop.f32.mrf.mxu0
    %v2066 = vadd.f32 0.0, %v2065
    %v2067 = vpop.f32.mrf.mxu0
    %v2068 = vadd.f32 0.0, %v2067
    %2069 = vmatprep.mubr.f32.mxu0 0.0
    %2070 = vmatmul.mubr.f32.gmra.mxu0 %v332
    %v2071 = vpop.f32.mrf.mxu0
    %v2072 = vadd.f32 0.0, %v2071
    %v2073 = vpop.f32.mrf.mxu0
    %v2074 = vadd.f32 0.0, %v2073
    %2075 = vmatprep.mubr.f32.mxu0 0.0
    %2076 = vmatmul.mubr.f32.gmra.mxu0 %v335
    %v2077 = vpop.f32.mrf.mxu0
    %v2078 = vadd.f32 0.0, %v2077
    %v2079 = vpop.f32.mrf.mxu0
    %v2080 = vadd.f32 0.0, %v2079
    %2081 = vmatprep.mubr.f32.mxu0 0.0
    %2082 = vmatmul.mubr.f32.gmra.mxu0 %v338
    %v2083 = vpop.f32.mrf.mxu0
    %v2084 = vadd.f32 0.0, %v2083
    %v2085 = vpop.f32.mrf.mxu0
    %v2086 = vadd.f32 0.0, %v2085
    %2087 = vmatprep.mubr.f32.mxu0 0.0
    %2088 = vmatmul.mubr.f32.gmra.mxu0 %v341
    %v2089 = vpop.f32.mrf.mxu0
    %v2090 = vadd.f32 0.0, %v2089
    %v2091 = vpop.f32.mrf.mxu0
    %v2092 = vadd.f32 0.0, %v2091
    %2093 = vmatprep.mubr.f32.mxu0 0.0
    %2094 = vmatmul.mubr.f32.gmra.mxu0 %v344
    %v2095 = vpop.f32.mrf.mxu0
    %v2096 = vadd.f32 0.0, %v2095
    %v2097 = vpop.f32.mrf.mxu0
    %v2098 = vadd.f32 0.0, %v2097
    %2099 = vmatprep.mubr.f32.mxu0 0.0
    %2100 = vmatmul.mubr.f32.gmra.mxu0 %v347
    %v2101 = vpop.f32.mrf.mxu0
    %v2102 = vadd.f32 0.0, %v2101
    %v2103 = vpop.f32.mrf.mxu0
    %v2104 = vadd.f32 0.0, %v2103
    %2105 = vmatprep.mubr.f32.mxu0 0.0
    %2106 = vmatmul.mubr.f32.gmra.mxu0 %v350
    %v2107 = vpop.f32.mrf.mxu0
    %v2108 = vadd.f32 0.0, %v2107
    %v2109 = vpop.f32.mrf.mxu0
    %v2110 = vadd.f32 0.0, %v2109
    %2111 = vmatprep.mubr.f32.mxu0 0.0
    %2112 = vmatmul.mubr.f32.gmra.mxu0 %v353
    %v2113 = vpop.f32.mrf.mxu0
    %v2114 = vadd.f32 0.0, %v2113
    %v2115 = vpop.f32.mrf.mxu0
    %v2116 = vadd.f32 0.0, %v2115
    %2117 = vmatprep.mubr.f32.mxu0 0.0
    %2118 = vmatmul.mubr.f32.gmra.mxu0 %v356
    %v2119 = vpop.f32.mrf.mxu0
    %v2120 = vadd.f32 0.0, %v2119
    %v2121 = vpop.f32.mrf.mxu0
    %v2122 = vadd.f32 0.0, %v2121
    %2123 = vmatprep.mubr.f32.mxu0 0.0
    %2124 = vmatmul.mubr.f32.gmra.mxu0 %v359
    %v2125 = vpop.f32.mrf.mxu0
    %v2126 = vadd.f32 0.0, %v2125
    %v2127 = vpop.f32.mrf.mxu0
    %v2128 = vadd.f32 0.0, %v2127
    %2129 = vmatprep.mubr.f32.mxu0 0.0
    %2130 = vmatmul.mubr.f32.gmra.mxu0 %v362
    %v2131 = vpop.f32.mrf.mxu0
    %v2132 = vadd.f32 0.0, %v2131
    %v2133 = vpop.f32.mrf.mxu0
    %v2134 = vadd.f32 0.0, %v2133
    %2135 = vmatprep.mubr.f32.mxu0 0.0
    %2136 = vmatmul.mubr.f32.gmra.mxu0 %v365
    %v2137 = vpop.f32.mrf.mxu0
    %v2138 = vadd.f32 0.0, %v2137
    %v2139 = vpop.f32.mrf.mxu0
    %v2140 = vadd.f32 0.0, %v2139
    %2141 = vmatprep.mubr.f32.mxu0 0.0
    %2142 = vmatmul.mubr.f32.gmra.mxu0 %v368
    %v2143 = vpop.f32.mrf.mxu0
    %v2144 = vadd.f32 0.0, %v2143
    %v2145 = vpop.f32.mrf.mxu0
    %v2146 = vadd.f32 0.0, %v2145
    %2147 = vmatprep.mubr.f32.mxu0 0.0
    %2148 = vmatmul.mubr.f32.gmra.mxu0 %v371
    %v2149 = vpop.f32.mrf.mxu0
    %v2150 = vadd.f32 0.0, %v2149
    %v2151 = vpop.f32.mrf.mxu0
    %v2152 = vadd.f32 0.0, %v2151
    %2153 = vmatprep.mubr.f32.mxu0 0.0
    %2154 = vmatmul.mubr.f32.gmra.mxu0 %v374
    %v2155 = vpop.f32.mrf.mxu0
    %v2156 = vadd.f32 0.0, %v2155
    %v2157 = vpop.f32.mrf.mxu0
    %v2158 = vadd.f32 0.0, %v2157
    %2159 = vmatprep.mubr.f32.mxu0 0.0
    %2160 = vmatmul.mubr.f32.gmra.mxu0 %v377
    %v2161 = vpop.f32.mrf.mxu0
    %v2162 = vadd.f32 0.0, %v2161
    %v2163 = vpop.f32.mrf.mxu0
    %v2164 = vadd.f32 0.0, %v2163
    %2165 = vmatprep.mubr.f32.mxu0 0.0
    %2166 = vmatmul.mubr.f32.gmra.mxu0 %v380
    %v2167 = vpop.f32.mrf.mxu0
    %v2168 = vadd.f32 0.0, %v2167
    %v2169 = vpop.f32.mrf.mxu0
    %v2170 = vadd.f32 0.0, %v2169
    %2171 = vmatprep.mubr.f32.mxu0 0.0
    %2172 = vmatmul.mubr.f32.gmra.mxu0 %v383
    %v2173 = vpop.f32.mrf.mxu0
    %v2174 = vadd.f32 0.0, %v2173
    %v2175 = vpop.f32.mrf.mxu0
    %v2176 = vadd.f32 0.0, %v2175
    %2177 = vmatprep.mubr.f32.mxu0 0.0
    %2178 = vmatmul.mubr.f32.gmra.mxu0 %v386
    %v2179 = vpop.f32.mrf.mxu0
    %v2180 = vadd.f32 0.0, %v2179
    %v2181 = vpop.f32.mrf.mxu0
    %v2182 = vadd.f32 0.0, %v2181
    %2183 = vdwg.mxu0
    %v2184 = vmax.f32 %v455, 1e-12
    %v2185 = vmax.f32 %v457, 1e-12
    %v2186 = vmax.f32 %v904, 1e-12
    %v2187 = vmax.f32 %v906, 1e-12
    %v2188 = vmax.f32 %v1353, 1e-12
    %v2189 = vmax.f32 %v1355, 1e-12
    %v2190 = vmax.f32 %v1802, 1e-12
    %v2191 = vmax.f32 %v1804, 1e-12
    %v2192 = vmax.f32 %v461, 1e-12
    %v2193 = vmax.f32 %v463, 1e-12
    %v2194 = vmax.f32 %v910, 1e-12
    %v2195 = vmax.f32 %v912, 1e-12
    %v2196 = vmax.f32 %v1359, 1e-12
    %v2197 = vmax.f32 %v1361, 1e-12
    %v2198 = vmax.f32 %v1808, 1e-12
    %v2199 = vmax.f32 %v1810, 1e-12
    %v2200 = vmax.f32 %v467, 1e-12
    %v2201 = vmax.f32 %v469, 1e-12
    %v2202 = vmax.f32 %v916, 1e-12
    %v2203 = vmax.f32 %v918, 1e-12
    %v2204 = vmax.f32 %v1365, 1e-12
    %v2205 = vmax.f32 %v1367, 1e-12
    %v2206 = vmax.f32 %v1814, 1e-12
    %v2207 = vmax.f32 %v1816, 1e-12
    %v2208 = vmax.f32 %v473, 1e-12
    %v2209 = vmax.f32 %v475, 1e-12
    %v2210 = vmax.f32 %v922, 1e-12
    %v2211 = vmax.f32 %v924, 1e-12
    %v2212 = vmax.f32 %v1371, 1e-12
    %v2213 = vmax.f32 %v1373, 1e-12
    %v2214 = vmax.f32 %v1820, 1e-12
    %v2215 = vmax.f32 %v1822, 1e-12
    %v2216 = vmax.f32 %v479, 1e-12
    %v2217 = vmax.f32 %v481, 1e-12
    %v2218 = vmax.f32 %v928, 1e-12
    %v2219 = vmax.f32 %v930, 1e-12
    %v2220 = vmax.f32 %v1377, 1e-12
    %v2221 = vmax.f32 %v1379, 1e-12
    %v2222 = vmax.f32 %v1826, 1e-12
    %v2223 = vmax.f32 %v1828, 1e-12
    %v2224 = vmax.f32 %v485, 1e-12
    %v2225 = vmax.f32 %v487, 1e-12
    %v2226 = vmax.f32 %v934, 1e-12
    %v2227 = vmax.f32 %v936, 1e-12
    %v2228 = vmax.f32 %v1383, 1e-12
    %v2229 = vmax.f32 %v1385, 1e-12
    %v2230 = vmax.f32 %v1832, 1e-12
    %v2231 = vmax.f32 %v1834, 1e-12
    %v2232 = vmax.f32 %v491, 1e-12
    %v2233 = vmax.f32 %v493, 1e-12
    %v2234 = vmax.f32 %v940, 1e-12
    %v2235 = vmax.f32 %v942, 1e-12
    %v2236 = vmax.f32 %v1389, 1e-12
    %v2237 = vmax.f32 %v1391, 1e-12
    %v2238 = vmax.f32 %v1838, 1e-12
    %v2239 = vmax.f32 %v1840, 1e-12
    %v2240 = vmax.f32 %v497, 1e-12
    %v2241 = vmax.f32 %v499, 1e-12
    %v2242 = vmax.f32 %v946, 1e-12
    %v2243 = vmax.f32 %v948, 1e-12
    %v2244 = vmax.f32 %v1395, 1e-12
    %v2245 = vmax.f32 %v1397, 1e-12
    %v2246 = vmax.f32 %v1844, 1e-12
    %v2247 = vmax.f32 %v1846, 1e-12
    %v2248 = vmax.f32 %v503, 1e-12
    %v2249 = vmax.f32 %v505, 1e-12
    %v2250 = vmax.f32 %v952, 1e-12
    %v2251 = vmax.f32 %v954, 1e-12
    %v2252 = vmax.f32 %v1401, 1e-12
    %v2253 = vmax.f32 %v1403, 1e-12
    %v2254 = vmax.f32 %v1850, 1e-12
    %v2255 = vmax.f32 %v1852, 1e-12
    %v2256 = vmax.f32 %v509, 1e-12
    %v2257 = vmax.f32 %v511, 1e-12
    %v2258 = vmax.f32 %v958, 1e-12
    %v2259 = vmax.f32 %v960, 1e-12
    %v2260 = vmax.f32 %v1407, 1e-12
    %v2261 = vmax.f32 %v1409, 1e-12
    %v2262 = vmax.f32 %v1856, 1e-12
    %v2263 = vmax.f32 %v1858, 1e-12
    %v2264 = vmax.f32 %v515, 1e-12
    %v2265 = vmax.f32 %v517, 1e-12
    %v2266 = vmax.f32 %v964, 1e-12
    %v2267 = vmax.f32 %v966, 1e-12
    %v2268 = vmax.f32 %v1413, 1e-12
    %v2269 = vmax.f32 %v1415, 1e-12
    %v2270 = vmax.f32 %v1862, 1e-12
    %v2271 = vmax.f32 %v1864, 1e-12
    %v2272 = vmax.f32 %v521, 1e-12
    %v2273 = vmax.f32 %v523, 1e-12
    %v2274 = vmax.f32 %v970, 1e-12
    %v2275 = vmax.f32 %v972, 1e-12
    %v2276 = vmax.f32 %v1419, 1e-12
    %v2277 = vmax.f32 %v1421, 1e-12
    %v2278 = vmax.f32 %v1868, 1e-12
    %v2279 = vmax.f32 %v1870, 1e-12
    %v2280 = vmax.f32 %v527, 1e-12
    %v2281 = vmax.f32 %v529, 1e-12
    %v2282 = vmax.f32 %v976, 1e-12
    %v2283 = vmax.f32 %v978, 1e-12
    %v2284 = vmax.f32 %v1425, 1e-12
    %v2285 = vmax.f32 %v1427, 1e-12
    %v2286 = vmax.f32 %v1874, 1e-12
    %v2287 = vmax.f32 %v1876, 1e-12
    %v2288 = vmax.f32 %v533, 1e-12
    %v2289 = vmax.f32 %v535, 1e-12
    %v2290 = vmax.f32 %v982, 1e-12
    %v2291 = vmax.f32 %v984, 1e-12
    %v2292 = vmax.f32 %v1431, 1e-12
    %v2293 = vmax.f32 %v1433, 1e-12
    %v2294 = vmax.f32 %v1880, 1e-12
    %v2295 = vmax.f32 %v1882, 1e-12
    %v2296 = vmax.f32 %v539, 1e-12
    %v2297 = vmax.f32 %v541, 1e-12
    %v2298 = vmax.f32 %v988, 1e-12
    %v2299 = vmax.f32 %v990, 1e-12
    %v2300 = vmax.f32 %v1437, 1e-12
    %v2301 = vmax.f32 %v1439, 1e-12
    %v2302 = vmax.f32 %v1886, 1e-12
    %v2303 = vmax.f32 %v1888, 1e-12
    %v2304 = vmax.f32 %v545, 1e-12
    %v2305 = vmax.f32 %v547, 1e-12
    %v2306 = vmax.f32 %v994, 1e-12
    %v2307 = vmax.f32 %v996, 1e-12
    %v2308 = vmax.f32 %v1443, 1e-12
    %v2309 = vmax.f32 %v1445, 1e-12
    %v2310 = vmax.f32 %v1892, 1e-12
    %v2311 = vmax.f32 %v1894, 1e-12
    %v2312 = vmax.f32 %v551, 1e-12
    %v2313 = vmax.f32 %v553, 1e-12
    %v2314 = vmax.f32 %v1000, 1e-12
    %v2315 = vmax.f32 %v1002, 1e-12
    %v2316 = vmax.f32 %v1449, 1e-12
    %v2317 = vmax.f32 %v1451, 1e-12
    %v2318 = vmax.f32 %v1898, 1e-12
    %v2319 = vmax.f32 %v1900, 1e-12
    %v2320 = vmax.f32 %v557, 1e-12
    %v2321 = vmax.f32 %v559, 1e-12
    %v2322 = vmax.f32 %v1006, 1e-12
    %v2323 = vmax.f32 %v1008, 1e-12
    %v2324 = vmax.f32 %v1455, 1e-12
    %v2325 = vmax.f32 %v1457, 1e-12
    %v2326 = vmax.f32 %v1904, 1e-12
    %v2327 = vmax.f32 %v1906, 1e-12
    %v2328 = vmax.f32 %v563, 1e-12
    %v2329 = vmax.f32 %v565, 1e-12
    %v2330 = vmax.f32 %v1012, 1e-12
    %v2331 = vmax.f32 %v1014, 1e-12
    %v2332 = vmax.f32 %v1461, 1e-12
    %v2333 = vmax.f32 %v1463, 1e-12
    %v2334 = vmax.f32 %v1910, 1e-12
    %v2335 = vmax.f32 %v1912, 1e-12
    %v2336 = vmax.f32 %v569, 1e-12
    %v2337 = vmax.f32 %v571, 1e-12
    %v2338 = vmax.f32 %v1018, 1e-12
    %v2339 = vmax.f32 %v1020, 1e-12
    %v2340 = vmax.f32 %v1467, 1e-12
    %v2341 = vmax.f32 %v1469, 1e-12
    %v2342 = vmax.f32 %v1916, 1e-12
    %v2343 = vmax.f32 %v1918, 1e-12
    %v2344 = vmax.f32 %v575, 1e-12
    %v2345 = vmax.f32 %v577, 1e-12
    %v2346 = vmax.f32 %v1024, 1e-12
    %v2347 = vmax.f32 %v1026, 1e-12
    %v2348 = vmax.f32 %v1473, 1e-12
    %v2349 = vmax.f32 %v1475, 1e-12
    %v2350 = vmax.f32 %v1922, 1e-12
    %v2351 = vmax.f32 %v1924, 1e-12
    %v2352 = vmax.f32 %v581, 1e-12
    %v2353 = vmax.f32 %v583, 1e-12
    %v2354 = vmax.f32 %v1030, 1e-12
    %v2355 = vmax.f32 %v1032, 1e-12
    %v2356 = vmax.f32 %v1479, 1e-12
    %v2357 = vmax.f32 %v1481, 1e-12
    %v2358 = vmax.f32 %v1928, 1e-12
    %v2359 = vmax.f32 %v1930, 1e-12
    %v2360 = vmax.f32 %v587, 1e-12
    %v2361 = vmax.f32 %v589, 1e-12
    %v2362 = vmax.f32 %v1036, 1e-12
    %v2363 = vmax.f32 %v1038, 1e-12
    %v2364 = vmax.f32 %v1485, 1e-12
    %v2365 = vmax.f32 %v1487, 1e-12
    %v2366 = vmax.f32 %v1934, 1e-12
    %v2367 = vmax.f32 %v1936, 1e-12
    %v2368 = vmax.f32 %v593, 1e-12
    %v2369 = vmax.f32 %v595, 1e-12
    %v2370 = vmax.f32 %v1042, 1e-12
    %v2371 = vmax.f32 %v1044, 1e-12
    %v2372 = vmax.f32 %v1491, 1e-12
    %v2373 = vmax.f32 %v1493, 1e-12
    %v2374 = vmax.f32 %v1940, 1e-12
    %v2375 = vmax.f32 %v1942, 1e-12
    %v2376 = vmax.f32 %v599, 1e-12
    %v2377 = vmax.f32 %v601, 1e-12
    %v2378 = vmax.f32 %v1048, 1e-12
    %v2379 = vmax.f32 %v1050, 1e-12
    %v2380 = vmax.f32 %v1497, 1e-12
    %v2381 = vmax.f32 %v1499, 1e-12
    %v2382 = vmax.f32 %v1946, 1e-12
    %v2383 = vmax.f32 %v1948, 1e-12
    %v2384 = vmax.f32 %v605, 1e-12
    %v2385 = vmax.f32 %v607, 1e-12
    %v2386 = vmax.f32 %v1054, 1e-12
    %v2387 = vmax.f32 %v1056, 1e-12
    %v2388 = vmax.f32 %v1503, 1e-12
    %v2389 = vmax.f32 %v1505, 1e-12
    %v2390 = vmax.f32 %v1952, 1e-12
    %v2391 = vmax.f32 %v1954, 1e-12
    %v2392 = vmax.f32 %v611, 1e-12
    %v2393 = vmax.f32 %v613, 1e-12
    %v2394 = vmax.f32 %v1060, 1e-12
    %v2395 = vmax.f32 %v1062, 1e-12
    %v2396 = vmax.f32 %v1509, 1e-12
    %v2397 = vmax.f32 %v1511, 1e-12
    %v2398 = vmax.f32 %v1958, 1e-12
    %v2399 = vmax.f32 %v1960, 1e-12
    %v2400 = vmax.f32 %v617, 1e-12
    %v2401 = vmax.f32 %v619, 1e-12
    %v2402 = vmax.f32 %v1066, 1e-12
    %v2403 = vmax.f32 %v1068, 1e-12
    %v2404 = vmax.f32 %v1515, 1e-12
    %v2405 = vmax.f32 %v1517, 1e-12
    %v2406 = vmax.f32 %v1964, 1e-12
    %v2407 = vmax.f32 %v1966, 1e-12
    %v2408 = vmax.f32 %v623, 1e-12
    %v2409 = vmax.f32 %v625, 1e-12
    %v2410 = vmax.f32 %v1072, 1e-12
    %v2411 = vmax.f32 %v1074, 1e-12
    %v2412 = vmax.f32 %v1521, 1e-12
    %v2413 = vmax.f32 %v1523, 1e-12
    %v2414 = vmax.f32 %v1970, 1e-12
    %v2415 = vmax.f32 %v1972, 1e-12
    %v2416 = vmax.f32 %v629, 1e-12
    %v2417 = vmax.f32 %v631, 1e-12
    %v2418 = vmax.f32 %v1078, 1e-12
    %v2419 = vmax.f32 %v1080, 1e-12
    %v2420 = vmax.f32 %v1527, 1e-12
    %v2421 = vmax.f32 %v1529, 1e-12
    %v2422 = vmax.f32 %v1976, 1e-12
    %v2423 = vmax.f32 %v1978, 1e-12
    %v2424 = vmax.f32 %v635, 1e-12
    %v2425 = vmax.f32 %v637, 1e-12
    %v2426 = vmax.f32 %v1084, 1e-12
    %v2427 = vmax.f32 %v1086, 1e-12
    %v2428 = vmax.f32 %v1533, 1e-12
    %v2429 = vmax.f32 %v1535, 1e-12
    %v2430 = vmax.f32 %v1982, 1e-12
    %v2431 = vmax.f32 %v1984, 1e-12
    %v2432 = vmax.f32 %v641, 1e-12
    %v2433 = vmax.f32 %v643, 1e-12
    %v2434 = vmax.f32 %v1090, 1e-12
    %v2435 = vmax.f32 %v1092, 1e-12
    %v2436 = vmax.f32 %v1539, 1e-12
    %v2437 = vmax.f32 %v1541, 1e-12
    %v2438 = vmax.f32 %v1988, 1e-12
    %v2439 = vmax.f32 %v1990, 1e-12
    %v2440 = vmax.f32 %v647, 1e-12
    %v2441 = vmax.f32 %v649, 1e-12
    %v2442 = vmax.f32 %v1096, 1e-12
    %v2443 = vmax.f32 %v1098, 1e-12
    %v2444 = vmax.f32 %v1545, 1e-12
    %v2445 = vmax.f32 %v1547, 1e-12
    %v2446 = vmax.f32 %v1994, 1e-12
    %v2447 = vmax.f32 %v1996, 1e-12
    %v2448 = vmax.f32 %v653, 1e-12
    %v2449 = vmax.f32 %v655, 1e-12
    %v2450 = vmax.f32 %v1102, 1e-12
    %v2451 = vmax.f32 %v1104, 1e-12
    %v2452 = vmax.f32 %v1551, 1e-12
    %v2453 = vmax.f32 %v1553, 1e-12
    %v2454 = vmax.f32 %v2000, 1e-12
    %v2455 = vmax.f32 %v2002, 1e-12
    %v2456 = vmax.f32 %v659, 1e-12
    %v2457 = vmax.f32 %v661, 1e-12
    %v2458 = vmax.f32 %v1108, 1e-12
    %v2459 = vmax.f32 %v1110, 1e-12
    %v2460 = vmax.f32 %v1557, 1e-12
    %v2461 = vmax.f32 %v1559, 1e-12
    %v2462 = vmax.f32 %v2006, 1e-12
    %v2463 = vmax.f32 %v2008, 1e-12
    %v2464 = vmax.f32 %v665, 1e-12
    %v2465 = vmax.f32 %v667, 1e-12
    %v2466 = vmax.f32 %v1114, 1e-12
    %v2467 = vmax.f32 %v1116, 1e-12
    %v2468 = vmax.f32 %v1563, 1e-12
    %v2469 = vmax.f32 %v1565, 1e-12
    %v2470 = vmax.f32 %v2012, 1e-12
    %v2471 = vmax.f32 %v2014, 1e-12
    %v2472 = vmax.f32 %v671, 1e-12
    %v2473 = vmax.f32 %v673, 1e-12
    %v2474 = vmax.f32 %v1120, 1e-12
    %v2475 = vmax.f32 %v1122, 1e-12
    %v2476 = vmax.f32 %v1569, 1e-12
    %v2477 = vmax.f32 %v1571, 1e-12
    %v2478 = vmax.f32 %v2018, 1e-12
    %v2479 = vmax.f32 %v2020, 1e-12
    %v2480 = vmax.f32 %v677, 1e-12
    %v2481 = vmax.f32 %v679, 1e-12
    %v2482 = vmax.f32 %v1126, 1e-12
    %v2483 = vmax.f32 %v1128, 1e-12
    %v2484 = vmax.f32 %v1575, 1e-12
    %v2485 = vmax.f32 %v1577, 1e-12
    %v2486 = vmax.f32 %v2024, 1e-12
    %v2487 = vmax.f32 %v2026, 1e-12
    %v2488 = vmax.f32 %v683, 1e-12
    %v2489 = vmax.f32 %v685, 1e-12
    %v2490 = vmax.f32 %v1132, 1e-12
    %v2491 = vmax.f32 %v1134, 1e-12
    %v2492 = vmax.f32 %v1581, 1e-12
    %v2493 = vmax.f32 %v1583, 1e-12
    %v2494 = vmax.f32 %v2030, 1e-12
    %v2495 = vmax.f32 %v2032, 1e-12
    %v2496 = vmax.f32 %v689, 1e-12
    %v2497 = vmax.f32 %v691, 1e-12
    %v2498 = vmax.f32 %v1138, 1e-12
    %v2499 = vmax.f32 %v1140, 1e-12
    %v2500 = vmax.f32 %v1587, 1e-12
    %v2501 = vmax.f32 %v1589, 1e-12
    %v2502 = vmax.f32 %v2036, 1e-12
    %v2503 = vmax.f32 %v2038, 1e-12
    %v2504 = vmax.f32 %v695, 1e-12
    %v2505 = vmax.f32 %v697, 1e-12
    %v2506 = vmax.f32 %v1144, 1e-12
    %v2507 = vmax.f32 %v1146, 1e-12
    %v2508 = vmax.f32 %v1593, 1e-12
    %v2509 = vmax.f32 %v1595, 1e-12
    %v2510 = vmax.f32 %v2042, 1e-12
    %v2511 = vmax.f32 %v2044, 1e-12
    %v2512 = vmax.f32 %v701, 1e-12
    %v2513 = vmax.f32 %v703, 1e-12
    %v2514 = vmax.f32 %v1150, 1e-12
    %v2515 = vmax.f32 %v1152, 1e-12
    %v2516 = vmax.f32 %v1599, 1e-12
    %v2517 = vmax.f32 %v1601, 1e-12
    %v2518 = vmax.f32 %v2048, 1e-12
    %v2519 = vmax.f32 %v2050, 1e-12
    %v2520 = vmax.f32 %v707, 1e-12
    %v2521 = vmax.f32 %v709, 1e-12
    %v2522 = vmax.f32 %v1156, 1e-12
    %v2523 = vmax.f32 %v1158, 1e-12
    %v2524 = vmax.f32 %v1605, 1e-12
    %v2525 = vmax.f32 %v1607, 1e-12
    %v2526 = vmax.f32 %v2054, 1e-12
    %v2527 = vmax.f32 %v2056, 1e-12
    %v2528 = vmax.f32 %v713, 1e-12
    %v2529 = vmax.f32 %v715, 1e-12
    %v2530 = vmax.f32 %v1162, 1e-12
    %v2531 = vmax.f32 %v1164, 1e-12
    %v2532 = vmax.f32 %v1611, 1e-12
    %v2533 = vmax.f32 %v1613, 1e-12
    %v2534 = vmax.f32 %v2060, 1e-12
    %v2535 = vmax.f32 %v2062, 1e-12
    %v2536 = vmax.f32 %v719, 1e-12
    %v2537 = vmax.f32 %v721, 1e-12
    %v2538 = vmax.f32 %v1168, 1e-12
    %v2539 = vmax.f32 %v1170, 1e-12
    %v2540 = vmax.f32 %v1617, 1e-12
    %v2541 = vmax.f32 %v1619, 1e-12
    %v2542 = vmax.f32 %v2066, 1e-12
    %v2543 = vmax.f32 %v2068, 1e-12
    %v2544 = vmax.f32 %v725, 1e-12
    %v2545 = vmax.f32 %v727, 1e-12
    %v2546 = vmax.f32 %v1174, 1e-12
    %v2547 = vmax.f32 %v1176, 1e-12
    %v2548 = vmax.f32 %v1623, 1e-12
    %v2549 = vmax.f32 %v1625, 1e-12
    %v2550 = vmax.f32 %v2072, 1e-12
    %v2551 = vmax.f32 %v2074, 1e-12
    %v2552 = vmax.f32 %v731, 1e-12
    %v2553 = vmax.f32 %v733, 1e-12
    %v2554 = vmax.f32 %v1180, 1e-12
    %v2555 = vmax.f32 %v1182, 1e-12
    %v2556 = vmax.f32 %v1629, 1e-12
    %v2557 = vmax.f32 %v1631, 1e-12
    %v2558 = vmax.f32 %v2078, 1e-12
    %v2559 = vmax.f32 %v2080, 1e-12
    %v2560 = vmax.f32 %v737, 1e-12
    %v2561 = vmax.f32 %v739, 1e-12
    %v2562 = vmax.f32 %v1186, 1e-12
    %v2563 = vmax.f32 %v1188, 1e-12
    %v2564 = vmax.f32 %v1635, 1e-12
    %v2565 = vmax.f32 %v1637, 1e-12
    %v2566 = vmax.f32 %v2084, 1e-12
    %v2567 = vmax.f32 %v2086, 1e-12
    %v2568 = vmax.f32 %v743, 1e-12
    %v2569 = vmax.f32 %v745, 1e-12
    %v2570 = vmax.f32 %v1192, 1e-12
    %v2571 = vmax.f32 %v1194, 1e-12
    %v2572 = vmax.f32 %v1641, 1e-12
    %v2573 = vmax.f32 %v1643, 1e-12
    %v2574 = vmax.f32 %v2090, 1e-12
    %v2575 = vmax.f32 %v2092, 1e-12
    %v2576 = vmax.f32 %v749, 1e-12
    %v2577 = vmax.f32 %v751, 1e-12
    %v2578 = vmax.f32 %v1198, 1e-12
    %v2579 = vmax.f32 %v1200, 1e-12
    %v2580 = vmax.f32 %v1647, 1e-12
    %v2581 = vmax.f32 %v1649, 1e-12
    %v2582 = vmax.f32 %v2096, 1e-12
    %v2583 = vmax.f32 %v2098, 1e-12
    %v2584 = vmax.f32 %v755, 1e-12
    %v2585 = vmax.f32 %v757, 1e-12
    %v2586 = vmax.f32 %v1204, 1e-12
    %v2587 = vmax.f32 %v1206, 1e-12
    %v2588 = vmax.f32 %v1653, 1e-12
    %v2589 = vmax.f32 %v1655, 1e-12
    %v2590 = vmax.f32 %v2102, 1e-12
    %v2591 = vmax.f32 %v2104, 1e-12
    %v2592 = vmax.f32 %v761, 1e-12
    %v2593 = vmax.f32 %v763, 1e-12
    %v2594 = vmax.f32 %v1210, 1e-12
    %v2595 = vmax.f32 %v1212, 1e-12
    %v2596 = vmax.f32 %v1659, 1e-12
    %v2597 = vmax.f32 %v1661, 1e-12
    %v2598 = vmax.f32 %v2108, 1e-12
    %v2599 = vmax.f32 %v2110, 1e-12
    %v2600 = vmax.f32 %v767, 1e-12
    %v2601 = vmax.f32 %v769, 1e-12
    %v2602 = vmax.f32 %v1216, 1e-12
    %v2603 = vmax.f32 %v1218, 1e-12
    %v2604 = vmax.f32 %v1665, 1e-12
    %v2605 = vmax.f32 %v1667, 1e-12
    %v2606 = vmax.f32 %v2114, 1e-12
    %v2607 = vmax.f32 %v2116, 1e-12
    %v2608 = vmax.f32 %v773, 1e-12
    %v2609 = vmax.f32 %v775, 1e-12
    %v2610 = vmax.f32 %v1222, 1e-12
    %v2611 = vmax.f32 %v1224, 1e-12
    %v2612 = vmax.f32 %v1671, 1e-12
    %v2613 = vmax.f32 %v1673, 1e-12
    %v2614 = vmax.f32 %v2120, 1e-12
    %v2615 = vmax.f32 %v2122, 1e-12
    %v2616 = vmax.f32 %v779, 1e-12
    %v2617 = vmax.f32 %v781, 1e-12
    %v2618 = vmax.f32 %v1228, 1e-12
    %v2619 = vmax.f32 %v1230, 1e-12
    %v2620 = vmax.f32 %v1677, 1e-12
    %v2621 = vmax.f32 %v1679, 1e-12
    %v2622 = vmax.f32 %v2126, 1e-12
    %v2623 = vmax.f32 %v2128, 1e-12
    %v2624 = vmax.f32 %v785, 1e-12
    %v2625 = vmax.f32 %v787, 1e-12
    %v2626 = vmax.f32 %v1234, 1e-12
    %v2627 = vmax.f32 %v1236, 1e-12
    %v2628 = vmax.f32 %v1683, 1e-12
    %v2629 = vmax.f32 %v1685, 1e-12
    %v2630 = vmax.f32 %v2132, 1e-12
    %v2631 = vmax.f32 %v2134, 1e-12
    %v2632 = vmax.f32 %v791, 1e-12
    %v2633 = vmax.f32 %v793, 1e-12
    %v2634 = vmax.f32 %v1240, 1e-12
    %v2635 = vmax.f32 %v1242, 1e-12
    %v2636 = vmax.f32 %v1689, 1e-12
    %v2637 = vmax.f32 %v1691, 1e-12
    %v2638 = vmax.f32 %v2138, 1e-12
    %v2639 = vmax.f32 %v2140, 1e-12
    %v2640 = vmax.f32 %v797, 1e-12
    %v2641 = vmax.f32 %v799, 1e-12
    %v2642 = vmax.f32 %v1246, 1e-12
    %v2643 = vmax.f32 %v1248, 1e-12
    %v2644 = vmax.f32 %v1695, 1e-12
    %v2645 = vmax.f32 %v1697, 1e-12
    %v2646 = vmax.f32 %v2144, 1e-12
    %v2647 = vmax.f32 %v2146, 1e-12
    %v2648 = vmax.f32 %v803, 1e-12
    %v2649 = vmax.f32 %v805, 1e-12
    %v2650 = vmax.f32 %v1252, 1e-12
    %v2651 = vmax.f32 %v1254, 1e-12
    %v2652 = vmax.f32 %v1701, 1e-12
    %v2653 = vmax.f32 %v1703, 1e-12
    %v2654 = vmax.f32 %v2150, 1e-12
    %v2655 = vmax.f32 %v2152, 1e-12
    %v2656 = vmax.f32 %v809, 1e-12
    %v2657 = vmax.f32 %v811, 1e-12
    %v2658 = vmax.f32 %v1258, 1e-12
    %v2659 = vmax.f32 %v1260, 1e-12
    %v2660 = vmax.f32 %v1707, 1e-12
    %v2661 = vmax.f32 %v1709, 1e-12
    %v2662 = vmax.f32 %v2156, 1e-12
    %v2663 = vmax.f32 %v2158, 1e-12
    %v2664 = vmax.f32 %v815, 1e-12
    %v2665 = vmax.f32 %v817, 1e-12
    %v2666 = vmax.f32 %v1264, 1e-12
    %v2667 = vmax.f32 %v1266, 1e-12
    %v2668 = vmax.f32 %v1713, 1e-12
    %v2669 = vmax.f32 %v1715, 1e-12
    %v2670 = vmax.f32 %v2162, 1e-12
    %v2671 = vmax.f32 %v2164, 1e-12
    %v2672 = vmax.f32 %v821, 1e-12
    %v2673 = vmax.f32 %v823, 1e-12
    %v2674 = vmax.f32 %v1270, 1e-12
    %v2675 = vmax.f32 %v1272, 1e-12
    %v2676 = vmax.f32 %v1719, 1e-12
    %v2677 = vmax.f32 %v1721, 1e-12
    %v2678 = vmax.f32 %v2168, 1e-12
    %v2679 = vmax.f32 %v2170, 1e-12
    %v2680 = vmax.f32 %v827, 1e-12
    %v2681 = vmax.f32 %v829, 1e-12
    %v2682 = vmax.f32 %v1276, 1e-12
    %v2683 = vmax.f32 %v1278, 1e-12
    %v2684 = vmax.f32 %v1725, 1e-12
    %v2685 = vmax.f32 %v1727, 1e-12
    %v2686 = vmax.f32 %v2174, 1e-12
    %v2687 = vmax.f32 %v2176, 1e-12
    %v2688 = vmax.f32 %v833, 1e-12
    %v2689 = vmax.f32 %v835, 1e-12
    %v2690 = vmax.f32 %v1282, 1e-12
    %v2691 = vmax.f32 %v1284, 1e-12
    %v2692 = vmax.f32 %v1731, 1e-12
    %v2693 = vmax.f32 %v1733, 1e-12
    %v2694 = vmax.f32 %v2180, 1e-12
    %v2695 = vmax.f32 %v2182, 1e-12
    %v2696 = vrsqrt.pop %v2184
    %v2697 = vrsqrt.pop %v2185
    %v2698 = vrsqrt.pop %v2186
    %v2699 = vrsqrt.pop %v2187
    %v2700 = vrsqrt.pop %v2188
    %v2701 = vrsqrt.pop %v2189
    %v2702 = vrsqrt.pop %v2190
    %v2703 = vrsqrt.pop %v2191
    %v2704 = vrsqrt.pop %v2192
    %v2705 = vrsqrt.pop %v2193
    %v2706 = vrsqrt.pop %v2194
    %v2707 = vrsqrt.pop %v2195
    %v2708 = vrsqrt.pop %v2196
    %v2709 = vrsqrt.pop %v2197
    %v2710 = vrsqrt.pop %v2198
    %v2711 = vrsqrt.pop %v2199
    %v2712 = vrsqrt.pop %v2200
    %v2713 = vrsqrt.pop %v2201
    %v2714 = vrsqrt.pop %v2202
    %v2715 = vrsqrt.pop %v2203
    %v2716 = vrsqrt.pop %v2204
    %v2717 = vrsqrt.pop %v2205
    %v2718 = vrsqrt.pop %v2206
    %v2719 = vrsqrt.pop %v2207
    %v2720 = vrsqrt.pop %v2208
    %v2721 = vrsqrt.pop %v2209
    %v2722 = vrsqrt.pop %v2210
    %v2723 = vrsqrt.pop %v2211
    %v2724 = vrsqrt.pop %v2212
    %v2725 = vrsqrt.pop %v2213
    %v2726 = vrsqrt.pop %v2214
    %v2727 = vrsqrt.pop %v2215
    %v2728 = vrsqrt.pop %v2216
    %v2729 = vrsqrt.pop %v2217
    %v2730 = vrsqrt.pop %v2218
    %v2731 = vrsqrt.pop %v2219
    %v2732 = vrsqrt.pop %v2220
    %v2733 = vrsqrt.pop %v2221
    %v2734 = vrsqrt.pop %v2222
    %v2735 = vrsqrt.pop %v2223
    %v2736 = vrsqrt.pop %v2224
    %v2737 = vrsqrt.pop %v2225
    %v2738 = vrsqrt.pop %v2226
    %v2739 = vrsqrt.pop %v2227
    %v2740 = vrsqrt.pop %v2228
    %v2741 = vrsqrt.pop %v2229
    %v2742 = vrsqrt.pop %v2230
    %v2743 = vrsqrt.pop %v2231
    %v2744 = vrsqrt.pop %v2232
    %v2745 = vrsqrt.pop %v2233
    %v2746 = vrsqrt.pop %v2234
    %v2747 = vrsqrt.pop %v2235
    %v2748 = vrsqrt.pop %v2236
    %v2749 = vrsqrt.pop %v2237
    %v2750 = vrsqrt.pop %v2238
    %v2751 = vrsqrt.pop %v2239
    %v2752 = vrsqrt.pop %v2240
    %v2753 = vrsqrt.pop %v2241
    %v2754 = vrsqrt.pop %v2242
    %v2755 = vrsqrt.pop %v2243
    %v2756 = vrsqrt.pop %v2244
    %v2757 = vrsqrt.pop %v2245
    %v2758 = vrsqrt.pop %v2246
    %v2759 = vrsqrt.pop %v2247
    %v2760 = vrsqrt.pop %v2248
    %v2761 = vrsqrt.pop %v2249
    %v2762 = vrsqrt.pop %v2250
    %v2763 = vrsqrt.pop %v2251
    %v2764 = vrsqrt.pop %v2252
    %v2765 = vrsqrt.pop %v2253
    %v2766 = vrsqrt.pop %v2254
    %v2767 = vrsqrt.pop %v2255
    %v2768 = vrsqrt.pop %v2256
    %v2769 = vrsqrt.pop %v2257
    %v2770 = vrsqrt.pop %v2258
    %v2771 = vrsqrt.pop %v2259
    %v2772 = vrsqrt.pop %v2260
    %v2773 = vrsqrt.pop %v2261
    %v2774 = vrsqrt.pop %v2262
    %v2775 = vrsqrt.pop %v2263
    %v2776 = vrsqrt.pop %v2264
    %v2777 = vrsqrt.pop %v2265
    %v2778 = vrsqrt.pop %v2266
    %v2779 = vrsqrt.pop %v2267
    %v2780 = vrsqrt.pop %v2268
    %v2781 = vrsqrt.pop %v2269
    %v2782 = vrsqrt.pop %v2270
    %v2783 = vrsqrt.pop %v2271
    %v2784 = vrsqrt.pop %v2272
    %v2785 = vrsqrt.pop %v2273
    %v2786 = vrsqrt.pop %v2274
    %v2787 = vrsqrt.pop %v2275
    %v2788 = vrsqrt.pop %v2276
    %v2789 = vrsqrt.pop %v2277
    %v2790 = vrsqrt.pop %v2278
    %v2791 = vrsqrt.pop %v2279
    %v2792 = vrsqrt.pop %v2280
    %v2793 = vrsqrt.pop %v2281
    %v2794 = vrsqrt.pop %v2282
    %v2795 = vrsqrt.pop %v2283
    %v2796 = vrsqrt.pop %v2284
    %v2797 = vrsqrt.pop %v2285
    %v2798 = vrsqrt.pop %v2286
    %v2799 = vrsqrt.pop %v2287
    %v2800 = vrsqrt.pop %v2288
    %v2801 = vrsqrt.pop %v2289
    %v2802 = vrsqrt.pop %v2290
    %v2803 = vrsqrt.pop %v2291
    %v2804 = vrsqrt.pop %v2292
    %v2805 = vrsqrt.pop %v2293
    %v2806 = vrsqrt.pop %v2294
    %v2807 = vrsqrt.pop %v2295
    %v2808 = vrsqrt.pop %v2296
    %v2809 = vrsqrt.pop %v2297
    %v2810 = vrsqrt.pop %v2298
    %v2811 = vrsqrt.pop %v2299
    %v2812 = vrsqrt.pop %v2300
    %v2813 = vrsqrt.pop %v2301
    %v2814 = vrsqrt.pop %v2302
    %v2815 = vrsqrt.pop %v2303
    %v2816 = vrsqrt.pop %v2304
    %v2817 = vrsqrt.pop %v2305
    %v2818 = vrsqrt.pop %v2306
    %v2819 = vrsqrt.pop %v2307
    %v2820 = vrsqrt.pop %v2308
    %v2821 = vrsqrt.pop %v2309
    %v2822 = vrsqrt.pop %v2310
    %v2823 = vrsqrt.pop %v2311
    %v2824 = vrsqrt.pop %v2312
    %v2825 = vrsqrt.pop %v2313
    %v2826 = vrsqrt.pop %v2314
    %v2827 = vrsqrt.pop %v2315
    %v2828 = vrsqrt.pop %v2316
    %v2829 = vrsqrt.pop %v2317
    %v2830 = vrsqrt.pop %v2318
    %v2831 = vrsqrt.pop %v2319
    %v2832 = vrsqrt.pop %v2320
    %v2833 = vrsqrt.pop %v2321
    %v2834 = vrsqrt.pop %v2322
    %v2835 = vrsqrt.pop %v2323
    %v2836 = vrsqrt.pop %v2324
    %v2837 = vrsqrt.pop %v2325
    %v2838 = vrsqrt.pop %v2326
    %v2839 = vrsqrt.pop %v2327
    %v2840 = vrsqrt.pop %v2328
    %v2841 = vrsqrt.pop %v2329
    %v2842 = vrsqrt.pop %v2330
    %v2843 = vrsqrt.pop %v2331
    %v2844 = vrsqrt.pop %v2332
    %v2845 = vrsqrt.pop %v2333
    %v2846 = vrsqrt.pop %v2334
    %v2847 = vrsqrt.pop %v2335
    %v2848 = vrsqrt.pop %v2336
    %v2849 = vrsqrt.pop %v2337
    %v2850 = vrsqrt.pop %v2338
    %v2851 = vrsqrt.pop %v2339
    %v2852 = vrsqrt.pop %v2340
    %v2853 = vrsqrt.pop %v2341
    %v2854 = vrsqrt.pop %v2342
    %v2855 = vrsqrt.pop %v2343
    %v2856 = vrsqrt.pop %v2344
    %v2857 = vrsqrt.pop %v2345
    %v2858 = vrsqrt.pop %v2346
    %v2859 = vrsqrt.pop %v2347
    %v2860 = vrsqrt.pop %v2348
    %v2861 = vrsqrt.pop %v2349
    %v2862 = vrsqrt.pop %v2350
    %v2863 = vrsqrt.pop %v2351
    %v2864 = vrsqrt.pop %v2352
    %v2865 = vrsqrt.pop %v2353
    %v2866 = vrsqrt.pop %v2354
    %v2867 = vrsqrt.pop %v2355
    %v2868 = vrsqrt.pop %v2356
    %v2869 = vrsqrt.pop %v2357
    %v2870 = vrsqrt.pop %v2358
    %v2871 = vrsqrt.pop %v2359
    %v2872 = vrsqrt.pop %v2360
    %v2873 = vrsqrt.pop %v2361
    %v2874 = vrsqrt.pop %v2362
    %v2875 = vrsqrt.pop %v2363
    %v2876 = vrsqrt.pop %v2364
    %v2877 = vrsqrt.pop %v2365
    %v2878 = vrsqrt.pop %v2366
    %v2879 = vrsqrt.pop %v2367
    %v2880 = vrsqrt.pop %v2368
    %v2881 = vrsqrt.pop %v2369
    %v2882 = vrsqrt.pop %v2370
    %v2883 = vrsqrt.pop %v2371
    %v2884 = vrsqrt.pop %v2372
    %v2885 = vrsqrt.pop %v2373
    %v2886 = vrsqrt.pop %v2374
    %v2887 = vrsqrt.pop %v2375
    %v2888 = vrsqrt.pop %v2376
    %v2889 = vrsqrt.pop %v2377
    %v2890 = vrsqrt.pop %v2378
    %v2891 = vrsqrt.pop %v2379
    %v2892 = vrsqrt.pop %v2380
    %v2893 = vrsqrt.pop %v2381
    %v2894 = vrsqrt.pop %v2382
    %v2895 = vrsqrt.pop %v2383
    %v2896 = vrsqrt.pop %v2384
    %v2897 = vrsqrt.pop %v2385
    %v2898 = vrsqrt.pop %v2386
    %v2899 = vrsqrt.pop %v2387
    %v2900 = vrsqrt.pop %v2388
    %v2901 = vrsqrt.pop %v2389
    %v2902 = vrsqrt.pop %v2390
    %v2903 = vrsqrt.pop %v2391
    %v2904 = vrsqrt.pop %v2392
    %v2905 = vrsqrt.pop %v2393
    %v2906 = vrsqrt.pop %v2394
    %v2907 = vrsqrt.pop %v2395
    %v2908 = vrsqrt.pop %v2396
    %v2909 = vrsqrt.pop %v2397
    %v2910 = vrsqrt.pop %v2398
    %v2911 = vrsqrt.pop %v2399
    %v2912 = vrsqrt.pop %v2400
    %v2913 = vrsqrt.pop %v2401
    %v2914 = vrsqrt.pop %v2402
    %v2915 = vrsqrt.pop %v2403
    %v2916 = vrsqrt.pop %v2404
    %v2917 = vrsqrt.pop %v2405
    %v2918 = vrsqrt.pop %v2406
    %v2919 = vrsqrt.pop %v2407
    %v2920 = vrsqrt.pop %v2408
    %v2921 = vrsqrt.pop %v2409
    %v2922 = vrsqrt.pop %v2410
    %v2923 = vrsqrt.pop %v2411
    %v2924 = vrsqrt.pop %v2412
    %v2925 = vrsqrt.pop %v2413
    %v2926 = vrsqrt.pop %v2414
    %v2927 = vrsqrt.pop %v2415
    %v2928 = vrsqrt.pop %v2416
    %v2929 = vrsqrt.pop %v2417
    %v2930 = vrsqrt.pop %v2418
    %v2931 = vrsqrt.pop %v2419
    %v2932 = vrsqrt.pop %v2420
    %v2933 = vrsqrt.pop %v2421
    %v2934 = vrsqrt.pop %v2422
    %v2935 = vrsqrt.pop %v2423
    %v2936 = vrsqrt.pop %v2424
    %v2937 = vrsqrt.pop %v2425
    %v2938 = vrsqrt.pop %v2426
    %v2939 = vrsqrt.pop %v2427
    %v2940 = vrsqrt.pop %v2428
    %v2941 = vrsqrt.pop %v2429
    %v2942 = vrsqrt.pop %v2430
    %v2943 = vrsqrt.pop %v2431
    %v2944 = vrsqrt.pop %v2432
    %v2945 = vrsqrt.pop %v2433
    %v2946 = vrsqrt.pop %v2434
    %v2947 = vrsqrt.pop %v2435
    %v2948 = vrsqrt.pop %v2436
    %v2949 = vrsqrt.pop %v2437
    %v2950 = vrsqrt.pop %v2438
    %v2951 = vrsqrt.pop %v2439
    %v2952 = vrsqrt.pop %v2440
    %v2953 = vrsqrt.pop %v2441
    %v2954 = vrsqrt.pop %v2442
    %v2955 = vrsqrt.pop %v2443
    %v2956 = vrsqrt.pop %v2444
    %v2957 = vrsqrt.pop %v2445
    %v2958 = vrsqrt.pop %v2446
    %v2959 = vrsqrt.pop %v2447
    %v2960 = vrsqrt.pop %v2448
    %v2961 = vrsqrt.pop %v2449
    %v2962 = vrsqrt.pop %v2450
    %v2963 = vrsqrt.pop %v2451
    %v2964 = vrsqrt.pop %v2452
    %v2965 = vrsqrt.pop %v2453
    %v2966 = vrsqrt.pop %v2454
    %v2967 = vrsqrt.pop %v2455
    %v2968 = vrsqrt.pop %v2456
    %v2969 = vrsqrt.pop %v2457
    %v2970 = vrsqrt.pop %v2458
    %v2971 = vrsqrt.pop %v2459
    %v2972 = vrsqrt.pop %v2460
    %v2973 = vrsqrt.pop %v2461
    %v2974 = vrsqrt.pop %v2462
    %v2975 = vrsqrt.pop %v2463
    %v2976 = vrsqrt.pop %v2464
    %v2977 = vrsqrt.pop %v2465
    %v2978 = vrsqrt.pop %v2466
    %v2979 = vrsqrt.pop %v2467
    %v2980 = vrsqrt.pop %v2468
    %v2981 = vrsqrt.pop %v2469
    %v2982 = vrsqrt.pop %v2470
    %v2983 = vrsqrt.pop %v2471
    %v2984 = vrsqrt.pop %v2472
    %v2985 = vrsqrt.pop %v2473
    %v2986 = vrsqrt.pop %v2474
    %v2987 = vrsqrt.pop %v2475
    %v2988 = vrsqrt.pop %v2476
    %v2989 = vrsqrt.pop %v2477
    %v2990 = vrsqrt.pop %v2478
    %v2991 = vrsqrt.pop %v2479
    %v2992 = vrsqrt.pop %v2480
    %v2993 = vrsqrt.pop %v2481
    %v2994 = vrsqrt.pop %v2482
    %v2995 = vrsqrt.pop %v2483
    %v2996 = vrsqrt.pop %v2484
    %v2997 = vrsqrt.pop %v2485
    %v2998 = vrsqrt.pop %v2486
    %v2999 = vrsqrt.pop %v2487
    %v3000 = vrsqrt.pop %v2488
    %v3001 = vrsqrt.pop %v2489
    %v3002 = vrsqrt.pop %v2490
    %v3003 = vrsqrt.pop %v2491
    %v3004 = vrsqrt.pop %v2492
    %v3005 = vrsqrt.pop %v2493
    %v3006 = vrsqrt.pop %v2494
    %v3007 = vrsqrt.pop %v2495
    %v3008 = vrsqrt.pop %v2496
    %v3009 = vrsqrt.pop %v2497
    %v3010 = vrsqrt.pop %v2498
    %v3011 = vrsqrt.pop %v2499
    %v3012 = vrsqrt.pop %v2500
    %v3013 = vrsqrt.pop %v2501
    %v3014 = vrsqrt.pop %v2502
    %v3015 = vrsqrt.pop %v2503
    %v3016 = vrsqrt.pop %v2504
    %v3017 = vrsqrt.pop %v2505
    %v3018 = vrsqrt.pop %v2506
    %v3019 = vrsqrt.pop %v2507
    %v3020 = vrsqrt.pop %v2508
    %v3021 = vrsqrt.pop %v2509
    %v3022 = vrsqrt.pop %v2510
    %v3023 = vrsqrt.pop %v2511
    %v3024 = vrsqrt.pop %v2512
    %v3025 = vrsqrt.pop %v2513
    %v3026 = vrsqrt.pop %v2514
    %v3027 = vrsqrt.pop %v2515
    %v3028 = vrsqrt.pop %v2516
    %v3029 = vrsqrt.pop %v2517
    %v3030 = vrsqrt.pop %v2518
    %v3031 = vrsqrt.pop %v2519
    %v3032 = vrsqrt.pop %v2520
    %v3033 = vrsqrt.pop %v2521
    %v3034 = vrsqrt.pop %v2522
    %v3035 = vrsqrt.pop %v2523
    %v3036 = vrsqrt.pop %v2524
    %v3037 = vrsqrt.pop %v2525
    %v3038 = vrsqrt.pop %v2526
    %v3039 = vrsqrt.pop %v2527
    %v3040 = vrsqrt.pop %v2528
    %v3041 = vrsqrt.pop %v2529
    %v3042 = vrsqrt.pop %v2530
    %v3043 = vrsqrt.pop %v2531
    %v3044 = vrsqrt.pop %v2532
    %v3045 = vrsqrt.pop %v2533
    %v3046 = vrsqrt.pop %v2534
    %v3047 = vrsqrt.pop %v2535
    %v3048 = vrsqrt.pop %v2536
    %v3049 = vrsqrt.pop %v2537
    %v3050 = vrsqrt.pop %v2538
    %v3051 = vrsqrt.pop %v2539
    %v3052 = vrsqrt.pop %v2540
    %v3053 = vrsqrt.pop %v2541
    %v3054 = vrsqrt.pop %v2542
    %v3055 = vrsqrt.pop %v2543
    %v3056 = vrsqrt.pop %v2544
    %v3057 = vrsqrt.pop %v2545
    %v3058 = vrsqrt.pop %v2546
    %v3059 = vrsqrt.pop %v2547
    %v3060 = vrsqrt.pop %v2548
    %v3061 = vrsqrt.pop %v2549
    %v3062 = vrsqrt.pop %v2550
    %v3063 = vrsqrt.pop %v2551
    %v3064 = vrsqrt.pop %v2552
    %v3065 = vrsqrt.pop %v2553
    %v3066 = vrsqrt.pop %v2554
    %v3067 = vrsqrt.pop %v2555
    %v3068 = vrsqrt.pop %v2556
    %v3069 = vrsqrt.pop %v2557
    %v3070 = vrsqrt.pop %v2558
    %v3071 = vrsqrt.pop %v2559
    %v3072 = vrsqrt.pop %v2560
    %v3073 = vrsqrt.pop %v2561
    %v3074 = vrsqrt.pop %v2562
    %v3075 = vrsqrt.pop %v2563
    %v3076 = vrsqrt.pop %v2564
    %v3077 = vrsqrt.pop %v2565
    %v3078 = vrsqrt.pop %v2566
    %v3079 = vrsqrt.pop %v2567
    %v3080 = vrsqrt.pop %v2568
    %v3081 = vrsqrt.pop %v2569
    %v3082 = vrsqrt.pop %v2570
    %v3083 = vrsqrt.pop %v2571
    %v3084 = vrsqrt.pop %v2572
    %v3085 = vrsqrt.pop %v2573
    %v3086 = vrsqrt.pop %v2574
    %v3087 = vrsqrt.pop %v2575
    %v3088 = vrsqrt.pop %v2576
    %v3089 = vrsqrt.pop %v2577
    %v3090 = vrsqrt.pop %v2578
    %v3091 = vrsqrt.pop %v2579
    %v3092 = vrsqrt.pop %v2580
    %v3093 = vrsqrt.pop %v2581
    %v3094 = vrsqrt.pop %v2582
    %v3095 = vrsqrt.pop %v2583
    %v3096 = vrsqrt.pop %v2584
    %v3097 = vrsqrt.pop %v2585
    %v3098 = vrsqrt.pop %v2586
    %v3099 = vrsqrt.pop %v2587
    %v3100 = vrsqrt.pop %v2588
    %v3101 = vrsqrt.pop %v2589
    %v3102 = vrsqrt.pop %v2590
    %v3103 = vrsqrt.pop %v2591
    %v3104 = vrsqrt.pop %v2592
    %v3105 = vrsqrt.pop %v2593
    %v3106 = vrsqrt.pop %v2594
    %v3107 = vrsqrt.pop %v2595
    %v3108 = vrsqrt.pop %v2596
    %v3109 = vrsqrt.pop %v2597
    %v3110 = vrsqrt.pop %v2598
    %v3111 = vrsqrt.pop %v2599
    %v3112 = vrsqrt.pop %v2600
    %v3113 = vrsqrt.pop %v2601
    %v3114 = vrsqrt.pop %v2602
    %v3115 = vrsqrt.pop %v2603
    %v3116 = vrsqrt.pop %v2604
    %v3117 = vrsqrt.pop %v2605
    %v3118 = vrsqrt.pop %v2606
    %v3119 = vrsqrt.pop %v2607
    %v3120 = vrsqrt.pop %v2608
    %v3121 = vrsqrt.pop %v2609
    %v3122 = vrsqrt.pop %v2610
    %v3123 = vrsqrt.pop %v2611
    %v3124 = vrsqrt.pop %v2612
    %v3125 = vrsqrt.pop %v2613
    %v3126 = vrsqrt.pop %v2614
    %v3127 = vrsqrt.pop %v2615
    %v3128 = vrsqrt.pop %v2616
    %v3129 = vrsqrt.pop %v2617
    %v3130 = vrsqrt.pop %v2618
    %v3131 = vrsqrt.pop %v2619
    %v3132 = vrsqrt.pop %v2620
    %v3133 = vrsqrt.pop %v2621
    %v3134 = vrsqrt.pop %v2622
    %v3135 = vrsqrt.pop %v2623
    %v3136 = vrsqrt.pop %v2624
    %v3137 = vrsqrt.pop %v2625
    %v3138 = vrsqrt.pop %v2626
    %v3139 = vrsqrt.pop %v2627
    %v3140 = vrsqrt.pop %v2628
    %v3141 = vrsqrt.pop %v2629
    %v3142 = vrsqrt.pop %v2630
    %v3143 = vrsqrt.pop %v2631
    %v3144 = vrsqrt.pop %v2632
    %v3145 = vrsqrt.pop %v2633
    %v3146 = vrsqrt.pop %v2634
    %v3147 = vrsqrt.pop %v2635
    %v3148 = vrsqrt.pop %v2636
    %v3149 = vrsqrt.pop %v2637
    %v3150 = vrsqrt.pop %v2638
    %v3151 = vrsqrt.pop %v2639
    %v3152 = vrsqrt.pop %v2640
    %v3153 = vrsqrt.pop %v2641
    %v3154 = vrsqrt.pop %v2642
    %v3155 = vrsqrt.pop %v2643
    %v3156 = vrsqrt.pop %v2644
    %v3157 = vrsqrt.pop %v2645
    %v3158 = vrsqrt.pop %v2646
    %v3159 = vrsqrt.pop %v2647
    %v3160 = vrsqrt.pop %v2648
    %v3161 = vrsqrt.pop %v2649
    %v3162 = vrsqrt.pop %v2650
    %v3163 = vrsqrt.pop %v2651
    %v3164 = vrsqrt.pop %v2652
    %v3165 = vrsqrt.pop %v2653
    %v3166 = vrsqrt.pop %v2654
    %v3167 = vrsqrt.pop %v2655
    %v3168 = vrsqrt.pop %v2656
    %v3169 = vrsqrt.pop %v2657
    %v3170 = vrsqrt.pop %v2658
    %v3171 = vrsqrt.pop %v2659
    %v3172 = vrsqrt.pop %v2660
    %v3173 = vrsqrt.pop %v2661
    %v3174 = vrsqrt.pop %v2662
    %v3175 = vrsqrt.pop %v2663
    %v3176 = vrsqrt.pop %v2664
    %v3177 = vrsqrt.pop %v2665
    %v3178 = vrsqrt.pop %v2666
    %v3179 = vrsqrt.pop %v2667
    %v3180 = vrsqrt.pop %v2668
    %v3181 = vrsqrt.pop %v2669
    %v3182 = vrsqrt.pop %v2670
    %v3183 = vrsqrt.pop %v2671
    %v3184 = vrsqrt.pop %v2672
    %v3185 = vrsqrt.pop %v2673
    %v3186 = vrsqrt.pop %v2674
    %v3187 = vrsqrt.pop %v2675
    %v3188 = vrsqrt.pop %v2676
    %v3189 = vrsqrt.pop %v2677
    %v3190 = vrsqrt.pop %v2678
    %v3191 = vrsqrt.pop %v2679
    %v3192 = vrsqrt.pop %v2680
    %v3193 = vrsqrt.pop %v2681
    %v3194 = vrsqrt.pop %v2682
    %v3195 = vrsqrt.pop %v2683
    %v3196 = vrsqrt.pop %v2684
    %v3197 = vrsqrt.pop %v2685
    %v3198 = vrsqrt.pop %v2686
    %v3199 = vrsqrt.pop %v2687
    %v3200 = vrsqrt.pop %v2688
    %v3201 = vrsqrt.pop %v2689
    %v3202 = vrsqrt.pop %v2690
    %v3203 = vrsqrt.pop %v2691
    %v3204 = vrsqrt.pop %v2692
    %v3205 = vrsqrt.pop %v2693
    %v3206 = vrsqrt.pop %v2694
    %v3207 = vrsqrt.pop %v2695
    %v3208 = vld [vmem:[#allocation8] sm:$0xff]
    %v3209 = vld [vmem:[#allocation7] sm:$0xf]
    %v3211 = vlaneseq
    %v3212 = vshrl.u32 %v3211, 7
    %v3213 = vsub.s32 0, %v3212
    %v3214 = vrot.slane %v3209, %v3213
    %v3215 = vlaneseq
    %v3216 = vshrl.u32 %v3215, 7
    %v3217 = vsub.s32 1, %v3216
    %v3218 = vrot.slane %v3209, %v3217
    %v3219 = vlaneseq
    %v3220 = vshrl.u32 %v3219, 7
    %v3221 = vsub.s32 2, %v3220
    %v3222 = vrot.slane %v3209, %v3221
    %v3223 = vlaneseq
    %v3224 = vshrl.u32 %v3223, 7
    %v3225 = vsub.s32 3, %v3224
    %v3226 = vrot.slane %v3209, %v3225
    %3231 = vmatprep.subr.mxu0 %v2817
    %3232 = vmatpush1.msra.mxu0 %v2816
    %3233 = vmatprep.subr.mxu0 %v2809
    %3234 = vmatpush1.msra.mxu0 %v2808
    %3235 = vmatprep.subr.mxu0 %v2801
    %3236 = vmatpush1.msra.mxu0 %v2800
    %3237 = vmatprep.subr.mxu0 %v2793
    %3238 = vmatpush1.msra.mxu0 %v2792
    %3239 = vmatprep.subr.mxu0 %v2785
    %3240 = vmatpush1.msra.mxu0 %v2784
    %3241 = vmatprep.subr.mxu0 %v2777
    %3242 = vmatpush1.msra.mxu0 %v2776
    %3243 = vmatprep.subr.mxu0 %v2769
    %3244 = vmatpush1.msra.mxu0 %v2768
    %3245 = vmatprep.subr.mxu0 %v2761
    %3246 = vmatpush1.msra.mxu0 %v2760
    %3247 = vmatprep.subr.mxu0 %v2753
    %3248 = vmatpush1.msra.mxu0 %v2752
    %3249 = vmatprep.subr.mxu0 %v2745
    %3250 = vmatpush1.msra.mxu0 %v2744
    %3251 = vmatprep.subr.mxu0 %v2737
    %3252 = vmatpush1.msra.mxu0 %v2736
    %3253 = vmatprep.subr.mxu0 %v2729
    %3254 = vmatpush1.msra.mxu0 %v2728
    %3255 = vmatprep.subr.mxu0 %v2721
    %3256 = vmatpush1.msra.mxu0 %v2720
    %3257 = vmatprep.subr.mxu0 %v2713
    %3258 = vmatpush1.msra.mxu0 %v2712
    %3259 = vmatprep.subr.mxu0 %v2705
    %3260 = vmatpush1.msra.mxu0 %v2704
    %3261 = vmatprep.subr.mxu0 %v2697
    %3262 = vmatpush1.msra.mxu0 %v2696
    %3263 = vmatprep.subr.mxu0 %v2945
    %3264 = vmatpush2.msra.mxu0 %v2944
    %3265 = vmatprep.subr.mxu0 %v2937
    %3266 = vmatpush2.msra.mxu0 %v2936
    %3267 = vmatprep.subr.mxu0 %v2929
    %3268 = vmatpush2.msra.mxu0 %v2928
    %3269 = vmatprep.subr.mxu0 %v2921
    %3270 = vmatpush2.msra.mxu0 %v2920
    %3271 = vmatprep.subr.mxu0 %v2913
    %3272 = vmatpush2.msra.mxu0 %v2912
    %3273 = vmatprep.subr.mxu0 %v2905
    %3274 = vmatpush2.msra.mxu0 %v2904
    %3275 = vmatprep.subr.mxu0 %v2897
    %3276 = vmatpush2.msra.mxu0 %v2896
    %3277 = vmatprep.subr.mxu0 %v2889
    %3278 = vmatpush2.msra.mxu0 %v2888
    %3279 = vmatprep.subr.mxu0 %v2881
    %3280 = vmatpush2.msra.mxu0 %v2880
    %3281 = vmatprep.subr.mxu0 %v2873
    %3282 = vmatpush2.msra.mxu0 %v2872
    %3283 = vmatprep.subr.mxu0 %v2865
    %3284 = vmatpush2.msra.mxu0 %v2864
    %3285 = vmatprep.subr.mxu0 %v2857
    %3286 = vmatpush2.msra.mxu0 %v2856
    %3287 = vmatprep.subr.mxu0 %v2849
    %3288 = vmatpush2.msra.mxu0 %v2848
    %3289 = vmatprep.subr.mxu0 %v2841
    %3290 = vmatpush2.msra.mxu0 %v2840
    %3291 = vmatprep.subr.mxu0 %v2833
    %3292 = vmatpush2.msra.mxu0 %v2832
    %3293 = vmatprep.subr.mxu0 %v2825
    %3294 = vmatpush2.msra.mxu0 %v2824
    %3295 = vmatprep.mubr.f32.mxu0 %v3218
    %3296 = vmatmul.mubr.f32.gmra.mxu0 %v3214
    %v3297 = vpop.f32.mrf.mxu0
    %v3298 = vadd.f32 0.0, %v3297
    %v3299 = vpop.f32.mrf.mxu0
    %v3300 = vadd.f32 0.0, %v3299
    %3301 = vdwg.mxu0
    %3302 = vmatprep.subr.mxu0 %v3073
    %3303 = vmatpush1.msra.mxu0 %v3072
    %3304 = vmatprep.subr.mxu0 %v3065
    %3305 = vmatpush1.msra.mxu0 %v3064
    %3306 = vmatprep.subr.mxu0 %v3057
    %3307 = vmatpush1.msra.mxu0 %v3056
    %3308 = vmatprep.subr.mxu0 %v3049
    %3309 = vmatpush1.msra.mxu0 %v3048
    %3310 = vmatprep.subr.mxu0 %v3041
    %3311 = vmatpush1.msra.mxu0 %v3040
    %3312 = vmatprep.subr.mxu0 %v3033
    %3313 = vmatpush1.msra.mxu0 %v3032
    %3314 = vmatprep.subr.mxu0 %v3025
    %3315 = vmatpush1.msra.mxu0 %v3024
    %3316 = vmatprep.subr.mxu0 %v3017
    %3317 = vmatpush1.msra.mxu0 %v3016
    %3318 = vmatprep.subr.mxu0 %v3009
    %3319 = vmatpush1.msra.mxu0 %v3008
    %3320 = vmatprep.subr.mxu0 %v3001
    %3321 = vmatpush1.msra.mxu0 %v3000
    %3322 = vmatprep.subr.mxu0 %v2993
    %3323 = vmatpush1.msra.mxu0 %v2992
    %3324 = vmatprep.subr.mxu0 %v2985
    %3325 = vmatpush1.msra.mxu0 %v2984
    %3326 = vmatprep.subr.mxu0 %v2977
    %3327 = vmatpush1.msra.mxu0 %v2976
    %3328 = vmatprep.subr.mxu0 %v2969
    %3329 = vmatpush1.msra.mxu0 %v2968
    %3330 = vmatprep.subr.mxu0 %v2961
    %3331 = vmatpush1.msra.mxu0 %v2960
    %3332 = vmatprep.subr.mxu0 %v2953
    %3333 = vmatpush1.msra.mxu0 %v2952
    %3334 = vmatprep.subr.mxu0 %v3201
    %3335 = vmatpush2.msra.mxu0 %v3200
    %3336 = vmatprep.subr.mxu0 %v3193
    %3337 = vmatpush2.msra.mxu0 %v3192
    %3338 = vmatprep.subr.mxu0 %v3185
    %3339 = vmatpush2.msra.mxu0 %v3184
    %3340 = vmatprep.subr.mxu0 %v3177
    %3341 = vmatpush2.msra.mxu0 %v3176
    %3342 = vmatprep.subr.mxu0 %v3169
    %3343 = vmatpush2.msra.mxu0 %v3168
    %3344 = vmatprep.subr.mxu0 %v3161
    %3345 = vmatpush2.msra.mxu0 %v3160
    %3346 = vmatprep.subr.mxu0 %v3153
    %3347 = vmatpush2.msra.mxu0 %v3152
    %3348 = vmatprep.subr.mxu0 %v3145
    %3349 = vmatpush2.msra.mxu0 %v3144
    %3350 = vmatprep.subr.mxu0 %v3137
    %3351 = vmatpush2.msra.mxu0 %v3136
    %3352 = vmatprep.subr.mxu0 %v3129
    %3353 = vmatpush2.msra.mxu0 %v3128
    %3354 = vmatprep.subr.mxu0 %v3121
    %3355 = vmatpush2.msra.mxu0 %v3120
    %3356 = vmatprep.subr.mxu0 %v3113
    %3357 = vmatpush2.msra.mxu0 %v3112
    %3358 = vmatprep.subr.mxu0 %v3105
    %3359 = vmatpush2.msra.mxu0 %v3104
    %3360 = vmatprep.subr.mxu0 %v3097
    %3361 = vmatpush2.msra.mxu0 %v3096
    %3362 = vmatprep.subr.mxu0 %v3089
    %3363 = vmatpush2.msra.mxu0 %v3088
    %3364 = vmatprep.subr.mxu0 %v3081
    %3365 = vmatpush2.msra.mxu0 %v3080
    %3366 = vmatprep.mubr.f32.mxu0 %v3226
    %3367 = vmatmul.mubr.f32.gmra.mxu0 %v3222
    %v3368 = vpop.f32.mrf.mxu0
    %v3369 = vadd.f32 %v3298, %v3368
    %v3370 = vpop.f32.mrf.mxu0
    %v3371 = vadd.f32 %v3300, %v3370
    %3372 = vdwg.mxu0
    %3373 = vmatprep.subr.mxu0 %v2819
    %3374 = vmatpush1.msra.mxu0 %v2818
    %3375 = vmatprep.subr.mxu0 %v2811
    %3376 = vmatpush1.msra.mxu0 %v2810
    %3377 = vmatprep.subr.mxu0 %v2803
    %3378 = vmatpush1.msra.mxu0 %v2802
    %3379 = vmatprep.subr.mxu0 %v2795
    %3380 = vmatpush1.msra.mxu0 %v2794
    %3381 = vmatprep.subr.mxu0 %v2787
    %3382 = vmatpush1.msra.mxu0 %v2786
    %3383 = vmatprep.subr.mxu0 %v2779
    %3384 = vmatpush1.msra.mxu0 %v2778
    %3385 = vmatprep.subr.mxu0 %v2771
    %3386 = vmatpush1.msra.mxu0 %v2770
    %3387 = vmatprep.subr.mxu0 %v2763
    %3388 = vmatpush1.msra.mxu0 %v2762
    %3389 = vmatprep.subr.mxu0 %v2755
    %3390 = vmatpush1.msra.mxu0 %v2754
    %3391 = vmatprep.subr.mxu0 %v2747
    %3392 = vmatpush1.msra.mxu0 %v2746
    %3393 = vmatprep.subr.mxu0 %v2739
    %3394 = vmatpush1.msra.mxu0 %v2738
    %3395 = vmatprep.subr.mxu0 %v2731
    %3396 = vmatpush1.msra.mxu0 %v2730
    %3397 = vmatprep.subr.mxu0 %v2723
    %3398 = vmatpush1.msra.mxu0 %v2722
    %3399 = vmatprep.subr.mxu0 %v2715
    %3400 = vmatpush1.msra.mxu0 %v2714
    %3401 = vmatprep.subr.mxu0 %v2707
    %3402 = vmatpush1.msra.mxu0 %v2706
    %3403 = vmatprep.subr.mxu0 %v2699
    %3404 = vmatpush1.msra.mxu0 %v2698
    %3405 = vmatprep.subr.mxu0 %v2947
    %3406 = vmatpush2.msra.mxu0 %v2946
    %3407 = vmatprep.subr.mxu0 %v2939
    %3408 = vmatpush2.msra.mxu0 %v2938
    %3409 = vmatprep.subr.mxu0 %v2931
    %3410 = vmatpush2.msra.mxu0 %v2930
    %3411 = vmatprep.subr.mxu0 %v2923
    %3412 = vmatpush2.msra.mxu0 %v2922
    %3413 = vmatprep.subr.mxu0 %v2915
    %3414 = vmatpush2.msra.mxu0 %v2914
    %3415 = vmatprep.subr.mxu0 %v2907
    %3416 = vmatpush2.msra.mxu0 %v2906
    %3417 = vmatprep.subr.mxu0 %v2899
    %3418 = vmatpush2.msra.mxu0 %v2898
    %3419 = vmatprep.subr.mxu0 %v2891
    %3420 = vmatpush2.msra.mxu0 %v2890
    %3421 = vmatprep.subr.mxu0 %v2883
    %3422 = vmatpush2.msra.mxu0 %v2882
    %3423 = vmatprep.subr.mxu0 %v2875
    %3424 = vmatpush2.msra.mxu0 %v2874
    %3425 = vmatprep.subr.mxu0 %v2867
    %3426 = vmatpush2.msra.mxu0 %v2866
    %3427 = vmatprep.subr.mxu0 %v2859
    %3428 = vmatpush2.msra.mxu0 %v2858
    %3429 = vmatprep.subr.mxu0 %v2851
    %3430 = vmatpush2.msra.mxu0 %v2850
    %3431 = vmatprep.subr.mxu0 %v2843
    %3432 = vmatpush2.msra.mxu0 %v2842
    %3433 = vmatprep.subr.mxu0 %v2835
    %3434 = vmatpush2.msra.mxu0 %v2834
    %3435 = vmatprep.subr.mxu0 %v2827
    %3436 = vmatpush2.msra.mxu0 %v2826
    %3437 = vmatprep.mubr.f32.mxu0 %v3218
    %3438 = vmatmul.mubr.f32.gmra.mxu0 %v3214
    %v3439 = vpop.f32.mrf.mxu0
    %v3440 = vadd.f32 0.0, %v3439
    %v3441 = vpop.f32.mrf.mxu0
    %v3442 = vadd.f32 0.0, %v3441
    %3443 = vdwg.mxu0
    %3444 = vmatprep.subr.mxu0 %v3075
    %3445 = vmatpush1.msra.mxu0 %v3074
    %3446 = vmatprep.subr.mxu0 %v3067
    %3447 = vmatpush1.msra.mxu0 %v3066
    %3448 = vmatprep.subr.mxu0 %v3059
    %3449 = vmatpush1.msra.mxu0 %v3058
    %3450 = vmatprep.subr.mxu0 %v3051
    %3451 = vmatpush1.msra.mxu0 %v3050
    %3452 = vmatprep.subr.mxu0 %v3043
    %3453 = vmatpush1.msra.mxu0 %v3042
    %3454 = vmatprep.subr.mxu0 %v3035
    %3455 = vmatpush1.msra.mxu0 %v3034
    %3456 = vmatprep.subr.mxu0 %v3027
    %3457 = vmatpush1.msra.mxu0 %v3026
    %3458 = vmatprep.subr.mxu0 %v3019
    %3459 = vmatpush1.msra.mxu0 %v3018
    %3460 = vmatprep.subr.mxu0 %v3011
    %3461 = vmatpush1.msra.mxu0 %v3010
    %3462 = vmatprep.subr.mxu0 %v3003
    %3463 = vmatpush1.msra.mxu0 %v3002
    %3464 = vmatprep.subr.mxu0 %v2995
    %3465 = vmatpush1.msra.mxu0 %v2994
    %3466 = vmatprep.subr.mxu0 %v2987
    %3467 = vmatpush1.msra.mxu0 %v2986
    %3468 = vmatprep.subr.mxu0 %v2979
    %3469 = vmatpush1.msra.mxu0 %v2978
    %3470 = vmatprep.subr.mxu0 %v2971
    %3471 = vmatpush1.msra.mxu0 %v2970
    %3472 = vmatprep.subr.mxu0 %v2963
    %3473 = vmatpush1.msra.mxu0 %v2962
    %3474 = vmatprep.subr.mxu0 %v2955
    %3475 = vmatpush1.msra.mxu0 %v2954
    %3476 = vmatprep.subr.mxu0 %v3203
    %3477 = vmatpush2.msra.mxu0 %v3202
    %3478 = vmatprep.subr.mxu0 %v3195
    %3479 = vmatpush2.msra.mxu0 %v3194
    %3480 = vmatprep.subr.mxu0 %v3187
    %3481 = vmatpush2.msra.mxu0 %v3186
    %3482 = vmatprep.subr.mxu0 %v3179
    %3483 = vmatpush2.msra.mxu0 %v3178
    %3484 = vmatprep.subr.mxu0 %v3171
    %3485 = vmatpush2.msra.mxu0 %v3170
    %3486 = vmatprep.subr.mxu0 %v3163
    %3487 = vmatpush2.msra.mxu0 %v3162
    %3488 = vmatprep.subr.mxu0 %v3155
    %3489 = vmatpush2.msra.mxu0 %v3154
    %3490 = vmatprep.subr.mxu0 %v3147
    %3491 = vmatpush2.msra.mxu0 %v3146
    %3492 = vmatprep.subr.mxu0 %v3139
    %3493 = vmatpush2.msra.mxu0 %v3138
    %3494 = vmatprep.subr.mxu0 %v3131
    %3495 = vmatpush2.msra.mxu0 %v3130
    %3496 = vmatprep.subr.mxu0 %v3123
    %3497 = vmatpush2.msra.mxu0 %v3122
    %3498 = vmatprep.subr.mxu0 %v3115
    %3499 = vmatpush2.msra.mxu0 %v3114
    %3500 = vmatprep.subr.mxu0 %v3107
    %3501 = vmatpush2.msra.mxu0 %v3106
    %3502 = vmatprep.subr.mxu0 %v3099
    %3503 = vmatpush2.msra.mxu0 %v3098
    %3504 = vmatprep.subr.mxu0 %v3091
    %3505 = vmatpush2.msra.mxu0 %v3090
    %3506 = vmatprep.subr.mxu0 %v3083
    %3507 = vmatpush2.msra.mxu0 %v3082
    %3508 = vmatprep.mubr.f32.mxu0 %v3226
    %3509 = vmatmul.mubr.f32.gmra.mxu0 %v3222
    %v3510 = vpop.f32.mrf.mxu0
    %v3511 = vadd.f32 %v3440, %v3510
    %v3512 = vpop.f32.mrf.mxu0
    %v3513 = vadd.f32 %v3442, %v3512
    %3514 = vdwg.mxu0
    %3515 = vmatprep.subr.mxu0 %v2821
    %3516 = vmatpush1.msra.mxu0 %v2820
    %3517 = vmatprep.subr.mxu0 %v2813
    %3518 = vmatpush1.msra.mxu0 %v2812
    %3519 = vmatprep.subr.mxu0 %v2805
    %3520 = vmatpush1.msra.mxu0 %v2804
    %3521 = vmatprep.subr.mxu0 %v2797
    %3522 = vmatpush1.msra.mxu0 %v2796
    %3523 = vmatprep.subr.mxu0 %v2789
    %3524 = vmatpush1.msra.mxu0 %v2788
    %3525 = vmatprep.subr.mxu0 %v2781
    %3526 = vmatpush1.msra.mxu0 %v2780
    %3527 = vmatprep.subr.mxu0 %v2773
    %3528 = vmatpush1.msra.mxu0 %v2772
    %3529 = vmatprep.subr.mxu0 %v2765
    %3530 = vmatpush1.msra.mxu0 %v2764
    %3531 = vmatprep.subr.mxu0 %v2757
    %3532 = vmatpush1.msra.mxu0 %v2756
    %3533 = vmatprep.subr.mxu0 %v2749
    %3534 = vmatpush1.msra.mxu0 %v2748
    %3535 = vmatprep.subr.mxu0 %v2741
    %3536 = vmatpush1.msra.mxu0 %v2740
    %3537 = vmatprep.subr.mxu0 %v2733
    %3538 = vmatpush1.msra.mxu0 %v2732
    %3539 = vmatprep.subr.mxu0 %v2725
    %3540 = vmatpush1.msra.mxu0 %v2724
    %3541 = vmatprep.subr.mxu0 %v2717
    %3542 = vmatpush1.msra.mxu0 %v2716
    %3543 = vmatprep.subr.mxu0 %v2709
    %3544 = vmatpush1.msra.mxu0 %v2708
    %3545 = vmatprep.subr.mxu0 %v2701
    %3546 = vmatpush1.msra.mxu0 %v2700
    %3547 = vmatprep.subr.mxu0 %v2949
    %3548 = vmatpush2.msra.mxu0 %v2948
    %3549 = vmatprep.subr.mxu0 %v2941
    %3550 = vmatpush2.msra.mxu0 %v2940
    %3551 = vmatprep.subr.mxu0 %v2933
    %3552 = vmatpush2.msra.mxu0 %v2932
    %3553 = vmatprep.subr.mxu0 %v2925
    %3554 = vmatpush2.msra.mxu0 %v2924
    %3555 = vmatprep.subr.mxu0 %v2917
    %3556 = vmatpush2.msra.mxu0 %v2916
    %3557 = vmatprep.subr.mxu0 %v2909
    %3558 = vmatpush2.msra.mxu0 %v2908
    %3559 = vmatprep.subr.mxu0 %v2901
    %3560 = vmatpush2.msra.mxu0 %v2900
    %3561 = vmatprep.subr.mxu0 %v2893
    %3562 = vmatpush2.msra.mxu0 %v2892
    %3563 = vmatprep.subr.mxu0 %v2885
    %3564 = vmatpush2.msra.mxu0 %v2884
    %3565 = vmatprep.subr.mxu0 %v2877
    %3566 = vmatpush2.msra.mxu0 %v2876
    %3567 = vmatprep.subr.mxu0 %v2869
    %3568 = vmatpush2.msra.mxu0 %v2868
    %3569 = vmatprep.subr.mxu0 %v2861
    %3570 = vmatpush2.msra.mxu0 %v2860
    %3571 = vmatprep.subr.mxu0 %v2853
    %3572 = vmatpush2.msra.mxu0 %v2852
    %3573 = vmatprep.subr.mxu0 %v2845
    %3574 = vmatpush2.msra.mxu0 %v2844
    %3575 = vmatprep.subr.mxu0 %v2837
    %3576 = vmatpush2.msra.mxu0 %v2836
    %3577 = vmatprep.subr.mxu0 %v2829
    %3578 = vmatpush2.msra.mxu0 %v2828
    %3579 = vmatprep.mubr.f32.mxu0 %v3218
    %3580 = vmatmul.mubr.f32.gmra.mxu0 %v3214
    %v3581 = vpop.f32.mrf.mxu0
    %v3582 = vadd.f32 0.0, %v3581
    %v3583 = vpop.f32.mrf.mxu0
    %v3584 = vadd.f32 0.0, %v3583
    %3585 = vdwg.mxu0
    %3586 = vmatprep.subr.mxu0 %v3077
    %3587 = vmatpush1.msra.mxu0 %v3076
    %3588 = vmatprep.subr.mxu0 %v3069
    %3589 = vmatpush1.msra.mxu0 %v3068
    %3590 = vmatprep.subr.mxu0 %v3061
    %3591 = vmatpush1.msra.mxu0 %v3060
    %3592 = vmatprep.subr.mxu0 %v3053
    %3593 = vmatpush1.msra.mxu0 %v3052
    %3594 = vmatprep.subr.mxu0 %v3045
    %3595 = vmatpush1.msra.mxu0 %v3044
    %3596 = vmatprep.subr.mxu0 %v3037
    %3597 = vmatpush1.msra.mxu0 %v3036
    %3598 = vmatprep.subr.mxu0 %v3029
    %3599 = vmatpush1.msra.mxu0 %v3028
    %3600 = vmatprep.subr.mxu0 %v3021
    %3601 = vmatpush1.msra.mxu0 %v3020
    %3602 = vmatprep.subr.mxu0 %v3013
    %3603 = vmatpush1.msra.mxu0 %v3012
    %3604 = vmatprep.subr.mxu0 %v3005
    %3605 = vmatpush1.msra.mxu0 %v3004
    %3606 = vmatprep.subr.mxu0 %v2997
    %3607 = vmatpush1.msra.mxu0 %v2996
    %3608 = vmatprep.subr.mxu0 %v2989
    %3609 = vmatpush1.msra.mxu0 %v2988
    %3610 = vmatprep.subr.mxu0 %v2981
    %3611 = vmatpush1.msra.mxu0 %v2980
    %3612 = vmatprep.subr.mxu0 %v2973
    %3613 = vmatpush1.msra.mxu0 %v2972
    %3614 = vmatprep.subr.mxu0 %v2965
    %3615 = vmatpush1.msra.mxu0 %v2964
    %3616 = vmatprep.subr.mxu0 %v2957
    %3617 = vmatpush1.msra.mxu0 %v2956
    %3618 = vmatprep.subr.mxu0 %v3205
    %3619 = vmatpush2.msra.mxu0 %v3204
    %3620 = vmatprep.subr.mxu0 %v3197
    %3621 = vmatpush2.msra.mxu0 %v3196
    %3622 = vmatprep.subr.mxu0 %v3189
    %3623 = vmatpush2.msra.mxu0 %v3188
    %3624 = vmatprep.subr.mxu0 %v3181
    %3625 = vmatpush2.msra.mxu0 %v3180
    %3626 = vmatprep.subr.mxu0 %v3173
    %3627 = vmatpush2.msra.mxu0 %v3172
    %3628 = vmatprep.subr.mxu0 %v3165
    %3629 = vmatpush2.msra.mxu0 %v3164
    %3630 = vmatprep.subr.mxu0 %v3157
    %3631 = vmatpush2.msra.mxu0 %v3156
    %3632 = vmatprep.subr.mxu0 %v3149
    %3633 = vmatpush2.msra.mxu0 %v3148
    %3634 = vmatprep.subr.mxu0 %v3141
    %3635 = vmatpush2.msra.mxu0 %v3140
    %3636 = vmatprep.subr.mxu0 %v3133
    %3637 = vmatpush2.msra.mxu0 %v3132
    %3638 = vmatprep.subr.mxu0 %v3125
    %3639 = vmatpush2.msra.mxu0 %v3124
    %3640 = vmatprep.subr.mxu0 %v3117
    %3641 = vmatpush2.msra.mxu0 %v3116
    %3642 = vmatprep.subr.mxu0 %v3109
    %3643 = vmatpush2.msra.mxu0 %v3108
    %3644 = vmatprep.subr.mxu0 %v3101
    %3645 = vmatpush2.msra.mxu0 %v3100
    %3646 = vmatprep.subr.mxu0 %v3093
    %3647 = vmatpush2.msra.mxu0 %v3092
    %3648 = vmatprep.subr.mxu0 %v3085
    %3649 = vmatpush2.msra.mxu0 %v3084
    %3650 = vmatprep.mubr.f32.mxu0 %v3226
    %3651 = vmatmul.mubr.f32.gmra.mxu0 %v3222
    %v3652 = vpop.f32.mrf.mxu0
    %v3653 = vadd.f32 %v3582, %v3652
    %v3654 = vpop.f32.mrf.mxu0
    %v3655 = vadd.f32 %v3584, %v3654
    %3656 = vdwg.mxu0
    %3657 = vmatprep.subr.mxu0 %v2823
    %3658 = vmatpush1.msra.mxu0 %v2822
    %3659 = vmatprep.subr.mxu0 %v2815
    %3660 = vmatpush1.msra.mxu0 %v2814
    %3661 = vmatprep.subr.mxu0 %v2807
    %3662 = vmatpush1.msra.mxu0 %v2806
    %3663 = vmatprep.subr.mxu0 %v2799
    %3664 = vmatpush1.msra.mxu0 %v2798
    %3665 = vmatprep.subr.mxu0 %v2791
    %3666 = vmatpush1.msra.mxu0 %v2790
    %3667 = vmatprep.subr.mxu0 %v2783
    %3668 = vmatpush1.msra.mxu0 %v2782
    %3669 = vmatprep.subr.mxu0 %v2775
    %3670 = vmatpush1.msra.mxu0 %v2774
    %3671 = vmatprep.subr.mxu0 %v2767
    %3672 = vmatpush1.msra.mxu0 %v2766
    %3673 = vmatprep.subr.mxu0 %v2759
    %3674 = vmatpush1.msra.mxu0 %v2758
    %3675 = vmatprep.subr.mxu0 %v2751
    %3676 = vmatpush1.msra.mxu0 %v2750
    %3677 = vmatprep.subr.mxu0 %v2743
    %3678 = vmatpush1.msra.mxu0 %v2742
    %3679 = vmatprep.subr.mxu0 %v2735
    %3680 = vmatpush1.msra.mxu0 %v2734
    %3681 = vmatprep.subr.mxu0 %v2727
    %3682 = vmatpush1.msra.mxu0 %v2726
    %3683 = vmatprep.subr.mxu0 %v2719
    %3684 = vmatpush1.msra.mxu0 %v2718
    %3685 = vmatprep.subr.mxu0 %v2711
    %3686 = vmatpush1.msra.mxu0 %v2710
    %3687 = vmatprep.subr.mxu0 %v2703
    %3688 = vmatpush1.msra.mxu0 %v2702
    %3689 = vmatprep.subr.mxu0 %v2951
    %3690 = vmatpush2.msra.mxu0 %v2950
    %3691 = vmatprep.subr.mxu0 %v2943
    %3692 = vmatpush2.msra.mxu0 %v2942
    %3693 = vmatprep.subr.mxu0 %v2935
    %3694 = vmatpush2.msra.mxu0 %v2934
    %3695 = vmatprep.subr.mxu0 %v2927
    %3696 = vmatpush2.msra.mxu0 %v2926
    %3697 = vmatprep.subr.mxu0 %v2919
    %3698 = vmatpush2.msra.mxu0 %v2918
    %3699 = vmatprep.subr.mxu0 %v2911
    %3700 = vmatpush2.msra.mxu0 %v2910
    %3701 = vmatprep.subr.mxu0 %v2903
    %3702 = vmatpush2.msra.mxu0 %v2902
    %3703 = vmatprep.subr.mxu0 %v2895
    %3704 = vmatpush2.msra.mxu0 %v2894
    %3705 = vmatprep.subr.mxu0 %v2887
    %3706 = vmatpush2.msra.mxu0 %v2886
    %3707 = vmatprep.subr.mxu0 %v2879
    %3708 = vmatpush2.msra.mxu0 %v2878
    %3709 = vmatprep.subr.mxu0 %v2871
    %3710 = vmatpush2.msra.mxu0 %v2870
    %3711 = vmatprep.subr.mxu0 %v2863
    %3712 = vmatpush2.msra.mxu0 %v2862
    %3713 = vmatprep.subr.mxu0 %v2855
    %3714 = vmatpush2.msra.mxu0 %v2854
    %3715 = vmatprep.subr.mxu0 %v2847
    %3716 = vmatpush2.msra.mxu0 %v2846
    %3717 = vmatprep.subr.mxu0 %v2839
    %3718 = vmatpush2.msra.mxu0 %v2838
    %3719 = vmatprep.subr.mxu0 %v2831
    %3720 = vmatpush2.msra.mxu0 %v2830
    %3721 = vmatprep.mubr.f32.mxu0 %v3218
    %3722 = vmatmul.mubr.f32.gmra.mxu0 %v3214
    %v3723 = vpop.f32.mrf.mxu0
    %v3724 = vadd.f32 0.0, %v3723
    %v3725 = vpop.f32.mrf.mxu0
    %v3726 = vadd.f32 0.0, %v3725
    %3727 = vdwg.mxu0
    %3728 = vmatprep.subr.mxu0 %v3079
    %3729 = vmatpush1.msra.mxu0 %v3078
    %3730 = vmatprep.subr.mxu0 %v3071
    %3731 = vmatpush1.msra.mxu0 %v3070
    %3732 = vmatprep.subr.mxu0 %v3063
    %3733 = vmatpush1.msra.mxu0 %v3062
    %3734 = vmatprep.subr.mxu0 %v3055
    %3735 = vmatpush1.msra.mxu0 %v3054
    %3736 = vmatprep.subr.mxu0 %v3047
    %3737 = vmatpush1.msra.mxu0 %v3046
    %3738 = vmatprep.subr.mxu0 %v3039
    %3739 = vmatpush1.msra.mxu0 %v3038
    %3740 = vmatprep.subr.mxu0 %v3031
    %3741 = vmatpush1.msra.mxu0 %v3030
    %3742 = vmatprep.subr.mxu0 %v3023
    %3743 = vmatpush1.msra.mxu0 %v3022
    %3744 = vmatprep.subr.mxu0 %v3015
    %3745 = vmatpush1.msra.mxu0 %v3014
    %3746 = vmatprep.subr.mxu0 %v3007
    %3747 = vmatpush1.msra.mxu0 %v3006
    %3748 = vmatprep.subr.mxu0 %v2999
    %3749 = vmatpush1.msra.mxu0 %v2998
    %3750 = vmatprep.subr.mxu0 %v2991
    %3751 = vmatpush1.msra.mxu0 %v2990
    %3752 = vmatprep.subr.mxu0 %v2983
    %3753 = vmatpush1.msra.mxu0 %v2982
    %3754 = vmatprep.subr.mxu0 %v2975
    %3755 = vmatpush1.msra.mxu0 %v2974
    %3756 = vmatprep.subr.mxu0 %v2967
    %3757 = vmatpush1.msra.mxu0 %v2966
    %3758 = vmatprep.subr.mxu0 %v2959
    %3759 = vmatpush1.msra.mxu0 %v2958
    %3760 = vmatprep.subr.mxu0 %v3207
    %3761 = vmatpush2.msra.mxu0 %v3206
    %3762 = vmatprep.subr.mxu0 %v3199
    %3763 = vmatpush2.msra.mxu0 %v3198
    %3764 = vmatprep.subr.mxu0 %v3191
    %3765 = vmatpush2.msra.mxu0 %v3190
    %3766 = vmatprep.subr.mxu0 %v3183
    %3767 = vmatpush2.msra.mxu0 %v3182
    %3768 = vmatprep.subr.mxu0 %v3175
    %3769 = vmatpush2.msra.mxu0 %v3174
    %3770 = vmatprep.subr.mxu0 %v3167
    %3771 = vmatpush2.msra.mxu0 %v3166
    %3772 = vmatprep.subr.mxu0 %v3159
    %3773 = vmatpush2.msra.mxu0 %v3158
    %3774 = vmatprep.subr.mxu0 %v3151
    %3775 = vmatpush2.msra.mxu0 %v3150
    %3776 = vmatprep.subr.mxu0 %v3143
    %3777 = vmatpush2.msra.mxu0 %v3142
    %3778 = vmatprep.subr.mxu0 %v3135
    %3779 = vmatpush2.msra.mxu0 %v3134
    %3780 = vmatprep.subr.mxu0 %v3127
    %3781 = vmatpush2.msra.mxu0 %v3126
    %3782 = vmatprep.subr.mxu0 %v3119
    %3783 = vmatpush2.msra.mxu0 %v3118
    %3784 = vmatprep.subr.mxu0 %v3111
    %3785 = vmatpush2.msra.mxu0 %v3110
    %3786 = vmatprep.subr.mxu0 %v3103
    %3787 = vmatpush2.msra.mxu0 %v3102
    %3788 = vmatprep.subr.mxu0 %v3095
    %3789 = vmatpush2.msra.mxu0 %v3094
    %3790 = vmatprep.subr.mxu0 %v3087
    %3791 = vmatpush2.msra.mxu0 %v3086
    %3792 = vmatprep.mubr.f32.mxu0 %v3226
    %3793 = vmatmul.mubr.f32.gmra.mxu0 %v3222
    %v3794 = vpop.f32.mrf.mxu0
    %v3795 = vadd.f32 %v3724, %v3794
    %v3796 = vpop.f32.mrf.mxu0
    %v3797 = vadd.f32 %v3726, %v3796
    %3798 = vdwg.mxu0
    %v3807 = vcombine.low %v3369, %v3371
    %v3808 = vcombine.low %v3511, %v3513
    %v3809 = vcombine.low %v3653, %v3655
    %v3810 = vcombine.low %v3795, %v3797
    %v3812 = vunpack.c.l.s4 1966171168
    %v3813 = vunpack.c.0.s8 %v3812
    %v3814 = vlaneseq
    %v3815 = vshrl.u32 %v3814, 7
    %v3816 = vsub.s32 %v3813, %v3815
    %v3817 = vrot.slane %v3807, %v3816
    %v3819 = vunpack.c.l.s4 1966171168
    %v3820 = vunpack.c.0.s8 %v3819
    %v3821 = vlaneseq
    %v3822 = vshrl.u32 %v3821, 7
    %v3823 = vsub.s32 %v3820, %v3822
    %v3824 = vrot.slane %v3808, %v3823
    %v3826 = vunpack.c.l.s4 1966171168
    %v3827 = vunpack.c.0.s8 %v3826
    %v3828 = vlaneseq
    %v3829 = vshrl.u32 %v3828, 7
    %v3830 = vsub.s32 %v3827, %v3829
    %v3831 = vrot.slane %v3809, %v3830
    %v3833 = vunpack.c.l.s4 1966171168
    %v3834 = vunpack.c.0.s8 %v3833
    %v3835 = vlaneseq
    %v3836 = vshrl.u32 %v3835, 7
    %v3837 = vsub.s32 %v3834, %v3836
    %v3838 = vrot.slane %v3810, %v3837
    %v3839 = vcombine.low %v3817, %v3824
    %v3840 = vcombine.low %v3831, %v3838
    %v3842 = vunpack.c.l.s4 1966171168
    %v3843 = vunpack.c.0.s8 %v3842
    %v3844 = vlaneseq
    %v3845 = vshrl.u32 %v3844, 7
    %v3846 = vsub.s32 %v3843, %v3845
    %v3847 = vrot.slane %v3839, %v3846
    %v3849 = vunpack.c.l.s4 1966171168
    %v3850 = vunpack.c.0.s8 %v3849
    %v3851 = vlaneseq
    %v3852 = vshrl.u32 %v3851, 7
    %v3853 = vsub.s32 %v3850, %v3852
    %v3854 = vrot.slane %v3840, %v3853
    %v3855 = vcombine.low %v3847, %v3854
    %v3857 = vadd.f32 %v3208, %v3855
    %3858 = vst [vmem:[#allocation8] sm:$0xff] %v3857
    // Predicated region
    $region30: #{tpu_custom_call.1} parent=1 // pred_check
      _
    $region31: #{tpu_custom_call.1} parent=1 // pred_check_branch
      %3860 = sbr.rel (0) target = $region33
    $region32: #{tpu_custom_call.1} parent=1 // pred_region
      %s3862 = ssub.s32 128, 128
      %3863 = vsyncadd [#allocation4], %s3862
      %s3865 = sshll.u32 [#allocation8], 4
      %s3866 = int_to_ptr.vmem [resolvable:$true] %s3865
      %3868 = dma.vmem_to_hbm [thread:$0]  %s3866, 128, %s3, [#allocation4]
    $region33: #{tpu_custom_call.1} parent=1 // pred_fallthru
      _
    // Predicated region
    $region34: #{tpu_custom_call.1} parent=1 // pred_check
      _
    $region35: #{tpu_custom_call.1} parent=1 // pred_check_branch
      %3870 = sbr.rel (0) target = $region37
    $region36: #{tpu_custom_call.1} parent=1 // pred_region
      %3871 = dma.done [#allocation4], 128
    $region37: #{tpu_custom_call.1} parent=1 // pred_fallthru
      _
    %3872 = vsyncpa [#allocation3], 1
    %3873 = vsyncpa [#allocation6], 1
    %3874 = vsyncpa [#allocation4], 1

</llo_original>
